<compile_context>
chip_gen: v5e
topology: v5e:2x2
jax: 0.10.0
libtpu: 0.0.40
codegen_flags: <defaults>
</compile_context>

<pallas_src>
import jax
import jax.numpy as jnp
import numpy as np
from jax.experimental import pallas as pl
from jax.experimental.pallas import tpu as pltpu

# ---------------------------------------------------------------------------
# Model hyper-parameters (small, consistent with a tiny TorchMD_GN instance)
# ---------------------------------------------------------------------------
N_MOL           = 32      # number of molecules ("batch" segments)
N_ATOMS_PER_MOL = 16      # atoms per molecule (fixed-size / padded molecules)
HIDDEN          = 32      # hidden channels
HIDDEN2         = 16      # output-head intermediate width
NUM_RBF         = 16      # radial basis functions
NUM_Z           = 10      # embedding table size (atomic numbers 0..9)
CUTOFF          = 5.0     # upper distance cutoff
MEAN            = 0.5     # registered buffer `mean`
STD             = 2.0     # registered buffer `std`

GROUPS    = 4                     # molecules packed into the 128-lane dimension
LANES     = GROUPS * HIDDEN       # 128
MOL_BLOCK = 16                    # molecules per grid step  -> grid = (2,)
GB        = MOL_BLOCK // GROUPS   # lane-group blocks per grid step (4)

# Row layout of the packed weight buffer (lane width = LANES = 128).
_R_W1, _R_W2, _R_WIN, _R_WUPD, _R_WO1, _R_WO2S = 0, 128, 256, 384, 512, 640
_R_VECS = 768                     # 8 rows of (1,128) vectors (biases / rbf consts)
_W_ROWS = 776                     # multiple of 8 (sublane aligned)


def _silu_fast(v):
    # exp rides the EUP; approximate reciprocal also rides the EUP slot.
    return v * pl.reciprocal(1.0 + jnp.exp(-v), approx=True)


def _silu_exact(v):
    return v * (1.0 / (1.0 + jnp.exp(-v)))


# ---------------------------------------------------------------------------
# Fused kernel: RBF -> filter net -> message passing -> node update ->
# per-atom scalar head -> *std -> per-molecule sum -> +mean
# One grid step processes MOL_BLOCK molecules; GROUPS molecules share the
# 128-lane dimension via block-diagonal weights.
# ---------------------------------------------------------------------------
def torchmd_net_kernel(u_ref, cut_ref, x0_ref, w_ref, scal_ref, out_ref):
    f32 = jnp.float32
    NA, G, L = N_ATOMS_PER_MOL, GROUPS, LANES

    # ---- unpack the fused weight buffer (single resident DMA) ----
    w1   = w_ref[_R_W1:_R_W1 + L, :]        # block-diag, padded rbf rows are 0
    w2   = w_ref[_R_W2:_R_W2 + L, :]
    win  = w_ref[_R_WIN:_R_WIN + L, :]
    wupd = w_ref[_R_WUPD:_R_WUPD + L, :]
    wo1  = w_ref[_R_WO1:_R_WO1 + L, :]      # padded cols are 0
    wo2s = w_ref[_R_WO2S:_R_WO2S + L, :]    # selector: lane group -> output lane g
    vecs = w_ref[_R_VECS:_R_VECS + 8, :]    # one aligned (8,128) read
    b1, b2, bupd, bo1 = vecs[0:1], vecs[1:2], vecs[2:3], vecs[3:4]
    means, betas = vecs[4:5], vecs[5:6]
    bo2  = scal_ref[0]
    std  = scal_ref[1]
    mean = scal_ref[2]

    u   = u_ref[...]     # (GB*NA*NA, 128) exp(-d), broadcast over each 32-lane group
    cut = cut_ref[...]   # (GB*NA*NA, 128) cosine cutoff * neighbor mask, broadcast
    x0  = x0_ref[...]    # (GB*NA,   128) embedded atomic numbers (packed groups)

    # ---- exp-norm RBF, lane-dense (padded lanes give exp(0)=1, killed by w1 rows) ----
    rbf = jnp.exp(-betas * (u - means) ** 2)                            # (P, 128)

    # ---- continuous-filter network, scaled by cutoff * neighbor mask ----
    h = _silu_fast(jnp.dot(rbf, w1, preferred_element_type=f32) + b1)   # (P, 128)
    wfilt = (jnp.dot(h, w2, preferred_element_type=f32) + b2) * cut     # (P, 128)

    # ---- message passing: running accumulation over the neighbor index ----
    # msg[gb, i, :] = sum_a wfilt[gb, a, i, :] * xj[gb, a, :]   (d symmetric)
    xj = jnp.dot(x0, win, preferred_element_type=f32)                   # (GB*NA, 128)
    wf4 = wfilt.reshape(GB, NA, NA, L)
    xg = xj.reshape(GB, NA, L)
    msg = jnp.zeros((GB, NA, L), f32)
    for a in range(NA):                                                 # static unroll
        msg = msg + wf4[:, a, :, :] * xg[:, a:a + 1, :]
    msg = msg.reshape(GB * NA, L)

    # ---- node update (residual) ----
    x = x0 + _silu_fast(jnp.dot(msg, wupd, preferred_element_type=f32) + bupd)

    # ---- output head: per-atom scalar via selector matmul, per-molecule sum ----
    hh = _silu_exact(jnp.dot(x, wo1, preferred_element_type=f32) + bo1)  # (GB*NA, 128)
    e_atom = jnp.dot(hh, wo2s, preferred_element_type=f32)   # lane g<G = atom energy
    e_mol = jnp.sum(e_atom.reshape(GB, NA, L), axis=1)                   # (GB, 128)
    out_ref[...] = (std * (e_mol + NA * bo2) + mean)[None, :, :]         # (1, GB, 128)


# ---------------------------------------------------------------------------
# Parameter initialization (deterministic, shapes from the module definition)
# ---------------------------------------------------------------------------
def init_params(key):
    keys = jax.random.split(key, 10)

    def lin(k, fan_in, fan_out):
        return jax.random.normal(k, (fan_in, fan_out), jnp.float32) / np.sqrt(fan_in)

    params = {
        "emb":  jax.random.normal(keys[0], (NUM_Z, HIDDEN), jnp.float32) * 0.1,
        "w1":   lin(keys[1], NUM_RBF, HIDDEN),
        "b1":   jnp.zeros((1, HIDDEN), jnp.float32),
        "w2":   lin(keys[2], HIDDEN, HIDDEN),
        "b2":   jnp.zeros((1, HIDDEN), jnp.float32),
        "win":  lin(keys[3], HIDDEN, HIDDEN),
        "wupd": lin(keys[4], HIDDEN, HIDDEN),
        "bupd": jnp.zeros((1, HIDDEN), jnp.float32),
        "wo1":  lin(keys[5], HIDDEN, HIDDEN2),
        "bo1":  jnp.zeros((1, HIDDEN2), jnp.float32),
        "wo2":  lin(keys[6], HIDDEN2, 1),
        "bo2":  jnp.zeros((1, 1), jnp.float32),
    }
    # exp-norm RBF constants (torchmd-net defaults, non-trainable).
    # alpha = 5/(cutoff_upper - cutoff_lower) == 1 for CUTOFF == 5.
    start = float(np.exp(-CUTOFF))
    means = np.linspace(start, 1.0, NUM_RBF, dtype=np.float32)
    betas = np.full((NUM_RBF,), (2.0 / NUM_RBF * (1.0 - start)) ** -2, np.float32)
    params["means"] = jnp.asarray(means).reshape(1, NUM_RBF)
    params["betas"] = jnp.asarray(betas).reshape(1, NUM_RBF)
    params["std"] = jnp.full((1, 1), STD, jnp.float32)
    params["mean"] = jnp.full((1, 1), MEAN, jnp.float32)
    return params


def pack_weights(params):
    """All weights/biases in one lane-aligned (776, 128) buffer.

    Matrices are stored as GROUPS-way block-diagonal (128,128) tiles so that
    one MXU matmul processes GROUPS independent molecules.  Called ONCE at
    init (hoisted out of the jitted forward path).
    """
    G, H, H2, L = GROUPS, HIDDEN, HIDDEN2, LANES
    eye = jnp.eye(G, dtype=jnp.float32)

    def bd(w):                                    # (H,H) -> block-diag (L,L)
        return jnp.kron(eye, w.astype(jnp.float32))

    w1p = jnp.zeros((H, H), jnp.float32).at[:NUM_RBF, :].set(params["w1"])
    wo1p = jnp.zeros((H, H), jnp.float32).at[:, :H2].set(params["wo1"])
    wo2v = jnp.zeros((H, 1), jnp.float32).at[:H2, 0].set(params["wo2"][:, 0])
    wo2sel = jnp.zeros((L, L), jnp.float32).at[:, :G].set(jnp.kron(eye, wo2v))

    def tile_vec(v, width):                       # (1,width) -> (L,) per-group tiled
        vp = jnp.zeros((1, H), jnp.float32).at[:, :width].set(v)
        return jnp.tile(vp, (1, G))[0]

    W = jnp.zeros((_W_ROWS, L), jnp.float32)
    W = W.at[_R_W1:_R_W1 + L, :].set(bd(w1p))
    W = W.at[_R_W2:_R_W2 + L, :].set(bd(params["w2"]))
    W = W.at[_R_WIN:_R_WIN + L, :].set(bd(params["win"]))
    W = W.at[_R_WUPD:_R_WUPD + L, :].set(bd(params["wupd"]))
    W = W.at[_R_WO1:_R_WO1 + L, :].set(bd(wo1p))
    W = W.at[_R_WO2S:_R_WO2S + L, :].set(wo2sel)
    W = W.at[_R_VECS + 0, :].set(tile_vec(params["b1"], H))
    W = W.at[_R_VECS + 1, :].set(tile_vec(params["b2"], H))
    W = W.at[_R_VECS + 2, :].set(tile_vec(params["bupd"], H))
    W = W.at[_R_VECS + 3, :].set(tile_vec(params["bo1"], H2))
    W = W.at[_R_VECS + 4, :].set(tile_vec(params["means"], NUM_RBF))
    W = W.at[_R_VECS + 5, :].set(tile_vec(params["betas"], NUM_RBF))
    return W


# ---------------------------------------------------------------------------
# Wrapper: embedding lookup + geometry preprocessing (incl. exp(-d)) in plain
# JAX, lane-group packing, then one gridded pallas_call over molecule blocks.
# ---------------------------------------------------------------------------
@jax.jit
def torchmd_net_forward(emb, wpack, scal, z, pos):
    S, NA, H, G, L = N_MOL, N_ATOMS_PER_MOL, HIDDEN, GROUPS, LANES
    NB = S // MOL_BLOCK
    f32 = jnp.float32

    # embedding lookup (glue)
    x0 = jnp.take(emb, z, axis=0).astype(f32)                      # (S*NA, H)

    # pairwise geometry per molecule (wrapper-side, lane-dense)
    pos_m = pos.astype(f32).reshape(S, NA, 3)
    diff = pos_m[:, :, None, :] - pos_m[:, None, :, :]
    d = jnp.sqrt(jnp.maximum(jnp.sum(diff * diff, -1), 1e-12))     # (S, NA, NA)
    u = jnp.exp(-d)                                                # hoisted exp(-d)
    self_mask = jnp.eye(NA, dtype=bool)[None]
    cut = 0.5 * (jnp.cos(jnp.pi * d * (1.0 / CUTOFF)) + 1.0)
    cut = jnp.where((d < CUTOFF) & (~self_mask), cut, 0.0)         # cutoff * mask

    # pack GROUPS molecules into the 128-lane dim (scalar broadcast over 32 lanes)
    def pack_pairs(a):                     # (S,NA,NA) symmetric -> (NB*GB*NA*NA, 128)
        a = a.reshape(NB, GB, G, NA, NA)
        a = jnp.transpose(a, (0, 1, 3, 4, 2))[..., None]           # (NB,GB,NA,NA,G,1)
        a = jnp.broadcast_to(a, (NB, GB, NA, NA, G, H))
        return a.reshape(NB * GB * NA * NA, L)

    u_pk = pack_pairs(u)
    cut_pk = pack_pairs(cut)
    x0_pk = (x0.reshape(NB, GB, G, NA, H)
               .transpose(0, 1, 3, 2, 4)
               .reshape(NB * GB * NA, L))                          # (NB*GB*NA, 128)

    PB = GB * NA * NA   # pair rows per grid step (1024)
    AB = GB * NA        # atom rows per grid step (64)

    out = pl.pallas_call(
        torchmd_net_kernel,
        out_shape=jax.ShapeDtypeStruct((NB, GB, L), f32),
        grid=(NB,),
        in_specs=[
            pl.BlockSpec((PB, L), lambda i: (i, 0)),               # exp(-d), packed
            pl.BlockSpec((PB, L), lambda i: (i, 0)),               # cutoff*mask, packed
            pl.BlockSpec((AB, L), lambda i: (i, 0)),               # embeddings, packed
            pl.BlockSpec((_W_ROWS, L), lambda i: (0, 0)),          # packed weights
            pl.BlockSpec(memory_space=pltpu.MemorySpace.SMEM),     # [bo2, std, mean]
        ],
        out_specs=pl.BlockSpec((1, GB, L), lambda i: (i, 0, 0)),   # lane-dense output
        compiler_params=pltpu.CompilerParams(
            dimension_semantics=("parallel",),
            vmem_limit_bytes=32 * 1024 * 1024),
    )(u_pk, cut_pk, x0_pk, wpack, scal)

    # molecule (nb, gb, g) energy lives at out[nb, gb, g]
    y = out[:, :, :G].reshape(S, 1)
    # derivative=False in this instantiation -> (energy, None)
    return y, None


# ---------------------------------------------------------------------------
# Pure-JAX reference (general flat formulation with batch masks)
# ---------------------------------------------------------------------------
def torchmd_net_reference(params, z, pos, batch, n_mol):
    def silu(v):
        return v * (1.0 / (1.0 + jnp.exp(-v)))

    N = z.shape[0]
    x0 = params["emb"][z]
    diff = pos[:, None, :] - pos[None, :, :]
    d = jnp.sqrt(jnp.maximum(jnp.sum(diff * diff, -1), 1e-12))              # (N, N)
    same = (batch[:, None] == batch[None, :]) & (~jnp.eye(N, dtype=bool))
    rbf = jnp.exp(-params["betas"][0]
                  * (jnp.exp(-d)[..., None] - params["means"][0]) ** 2)
    cut = 0.5 * (jnp.cos(jnp.pi * d / CUTOFF) + 1.0)
    cut = jnp.where(d < CUTOFF, cut, 0.0) * same.astype(jnp.float32)
    h = silu(rbf @ params["w1"] + params["b1"])
    wfilt = (h @ params["w2"] + params["b2"]) * cut[..., None]              # (N, N, H)
    xj = x0 @ params["win"]
    msg = jnp.sum(wfilt * xj[None, :, :], axis=1)
    x = x0 + silu(msg @ params["wupd"] + params["bupd"])
    hh = silu(x @ params["wo1"] + params["bo1"])
    e = (hh @ params["wo2"] + params["bo2"]) * params["std"][0, 0]          # (N, 1)
    seg = (jnp.arange(n_mol)[:, None] == batch[None, :]).astype(jnp.float32)
    return seg @ e + params["mean"][0, 0]


if __name__ == "__main__":
    key = jax.random.PRNGKey(0)
    kz, kpos, kparam = jax.random.split(key, 3)

    N = N_MOL * N_ATOMS_PER_MOL
    z = jax.random.randint(kz, (N,), 1, NUM_Z, dtype=jnp.int32)
    pos = jax.random.normal(kpos, (N, 3), jnp.float32) * 1.5
    batch = jnp.repeat(jnp.arange(N_MOL, dtype=jnp.int32), N_ATOMS_PER_MOL)

    # fixed-size contiguous molecules assumption (see TODO above)
    assert np.array_equal(np.asarray(batch),
                          np.repeat(np.arange(N_MOL), N_ATOMS_PER_MOL))

    params = init_params(kparam)
    # pack once, outside the jitted forward path (per performance review)
    wpack = pack_weights(params)
    scal = jnp.array([params["bo2"][0, 0], params["std"][0, 0],
                      params["mean"][0, 0]], jnp.float32)

    y, forces = torchmd_net_forward(params["emb"], wpack, scal, z, pos)
    y = jax.block_until_ready(y)

    y_ref = torchmd_net_reference(params, z, pos, batch, N_MOL)
    np.testing.assert_allclose(np.asarray(y), np.asarray(y_ref), rtol=5e-2, atol=5e-2)

    print("KERNEL_OK")
</pallas_src>

<mosaic_0001>
module attributes {stable_mosaic.version = 11 : i64} {
  func.func @torchmd_net_kernel(%arg0: i32, %arg1: memref<1024x128xf32, #tpu.memory_space<vmem>>, %arg2: memref<1024x128xf32, #tpu.memory_space<vmem>>, %arg3: memref<64x128xf32, #tpu.memory_space<vmem>>, %arg4: memref<776x128xf32, #tpu.memory_space<vmem>>, %arg5: memref<3xf32, #tpu.memory_space<smem>>, %arg6: memref<1x4x128xf32, #tpu.memory_space<vmem>>) attributes {dimension_semantics = [#tpu.dimension_semantics<parallel>], iteration_bounds = array<i64: 2>, scalar_prefetch = 0 : i64, scratch_operands = 0 : i64, tpu.core_type = #tpu.core_type<tc>, window_params = [{transform_indices = @transform_0, window_bounds = array<i64: 1024, 128>}, {transform_indices = @transform_1, window_bounds = array<i64: 1024, 128>}, {transform_indices = @transform_2, window_bounds = array<i64: 64, 128>}, {pipeline_mode = #tpu.pipeline_mode<synchronous>, transform_indices = @transform_3, window_bounds = array<i64: 776, 128>}, {transform_indices = @transform_4, window_bounds = array<i64: 3>}, {transform_indices = @transform_5, window_bounds = array<i64: 1, 4, 128>}]} {
    %c0 = arith.constant 0 : index
    %c0_0 = arith.constant 0 : index
    %0 = vector.load %arg4[%c0, %c0_0] : memref<776x128xf32, #tpu.memory_space<vmem>>, vector<128x128xf32>
    %c128 = arith.constant 128 : index
    %c0_1 = arith.constant 0 : index
    %1 = vector.load %arg4[%c128, %c0_1] : memref<776x128xf32, #tpu.memory_space<vmem>>, vector<128x128xf32>
    %c256 = arith.constant 256 : index
    %c0_2 = arith.constant 0 : index
    %2 = vector.load %arg4[%c256, %c0_2] : memref<776x128xf32, #tpu.memory_space<vmem>>, vector<128x128xf32>
    %c384 = arith.constant 384 : index
    %c0_3 = arith.constant 0 : index
    %3 = vector.load %arg4[%c384, %c0_3] : memref<776x128xf32, #tpu.memory_space<vmem>>, vector<128x128xf32>
    %c512 = arith.constant 512 : index
    %c0_4 = arith.constant 0 : index
    %4 = vector.load %arg4[%c512, %c0_4] : memref<776x128xf32, #tpu.memory_space<vmem>>, vector<128x128xf32>
    %c640 = arith.constant 640 : index
    %c0_5 = arith.constant 0 : index
    %5 = vector.load %arg4[%c640, %c0_5] : memref<776x128xf32, #tpu.memory_space<vmem>>, vector<128x128xf32>
    %c768 = arith.constant 768 : index
    %c0_6 = arith.constant 0 : index
    %6 = vector.load %arg4[%c768, %c0_6] : memref<776x128xf32, #tpu.memory_space<vmem>>, vector<8x128xf32>
    %7 = vector.extract_strided_slice %6 {offsets = [0, 0], sizes = [1, 128], strides = [1, 1]} : vector<8x128xf32> to vector<1x128xf32>
    %8 = vector.extract_strided_slice %6 {offsets = [1, 0], sizes = [1, 128], strides = [1, 1]} : vector<8x128xf32> to vector<1x128xf32>
    %9 = vector.extract_strided_slice %6 {offsets = [2, 0], sizes = [1, 128], strides = [1, 1]} : vector<8x128xf32> to vector<1x128xf32>
    %10 = vector.extract_strided_slice %6 {offsets = [3, 0], sizes = [1, 128], strides = [1, 1]} : vector<8x128xf32> to vector<1x128xf32>
    %11 = vector.extract_strided_slice %6 {offsets = [4, 0], sizes = [1, 128], strides = [1, 1]} : vector<8x128xf32> to vector<1x128xf32>
    %12 = vector.extract_strided_slice %6 {offsets = [5, 0], sizes = [1, 128], strides = [1, 1]} : vector<8x128xf32> to vector<1x128xf32>
    %c0_7 = arith.constant 0 : index
    %13 = memref.load %arg5[%c0_7] : memref<3xf32, #tpu.memory_space<smem>>
    %c1 = arith.constant 1 : index
    %14 = memref.load %arg5[%c1] : memref<3xf32, #tpu.memory_space<smem>>
    %c2 = arith.constant 2 : index
    %15 = memref.load %arg5[%c2] : memref<3xf32, #tpu.memory_space<smem>>
    %c0_8 = arith.constant 0 : index
    %c0_9 = arith.constant 0 : index
    %16 = vector.load %arg1[%c0_8, %c0_9] : memref<1024x128xf32, #tpu.memory_space<vmem>>, vector<1024x128xf32>
    %c0_10 = arith.constant 0 : index
    %c0_11 = arith.constant 0 : index
    %17 = vector.load %arg2[%c0_10, %c0_11] : memref<1024x128xf32, #tpu.memory_space<vmem>>, vector<1024x128xf32>
    %c0_12 = arith.constant 0 : index
    %c0_13 = arith.constant 0 : index
    %18 = vector.load %arg3[%c0_12, %c0_13] : memref<64x128xf32, #tpu.memory_space<vmem>>, vector<64x128xf32>
    %cst = arith.constant 0.000000e+00 : f32
    %19 = vector.broadcast %cst : f32 to vector<1x128xf32>
    %20 = arith.subf %19, %12 : vector<1x128xf32>
    %21 = vector.broadcast %11 : vector<1x128xf32> to vector<1024x128xf32>
    %22 = arith.subf %16, %21 : vector<1024x128xf32>
    %23 = arith.mulf %22, %22 : vector<1024x128xf32>
    %24 = vector.broadcast %20 : vector<1x128xf32> to vector<1024x128xf32>
    %25 = arith.mulf %24, %23 : vector<1024x128xf32>
    %26 = math.exp %25 : vector<1024x128xf32>
    %cst_14 = arith.constant dense<0.000000e+00> : vector<1024x128xf32>
    %27 = tpu.matmul %26, %0, %cst_14 {dimension_numbers = #tpu.dot_dimension_numbers<[1], [0], [0], [1], [0, 0, 1, 1], [], []>} : vector<1024x128xf32>, vector<128x128xf32>, vector<1024x128xf32> -> vector<1024x128xf32>
    %28 = vector.broadcast %7 : vector<1x128xf32> to vector<1024x128xf32>
    %29 = arith.addf %27, %28 : vector<1024x128xf32>
    %cst_15 = arith.constant 0.000000e+00 : f32
    %30 = vector.broadcast %cst_15 : f32 to vector<1024x128xf32>
    %31 = arith.subf %30, %29 : vector<1024x128xf32>
    %32 = math.exp %31 : vector<1024x128xf32>
    %cst_16 = arith.constant 1.000000e+00 : f32
    %33 = vector.broadcast %cst_16 : f32 to vector<1024x128xf32>
    %34 = arith.addf %33, %32 : vector<1024x128xf32>
    %35 = tpu.reciprocal %34 {approx = true} : vector<1024x128xf32> -> vector<1024x128xf32>
    %36 = arith.mulf %29, %35 : vector<1024x128xf32>
    %cst_17 = arith.constant dense<0.000000e+00> : vector<1024x128xf32>
    %37 = tpu.matmul %36, %1, %cst_17 {dimension_numbers = #tpu.dot_dimension_numbers<[1], [0], [0], [1], [0, 0, 1, 1], [], []>} : vector<1024x128xf32>, vector<128x128xf32>, vector<1024x128xf32> -> vector<1024x128xf32>
    %38 = vector.broadcast %8 : vector<1x128xf32> to vector<1024x128xf32>
    %39 = arith.addf %37, %38 : vector<1024x128xf32>
    %40 = arith.mulf %39, %17 : vector<1024x128xf32>
    %cst_18 = arith.constant dense<0.000000e+00> : vector<64x128xf32>
    %41 = tpu.matmul %18, %2, %cst_18 {dimension_numbers = #tpu.dot_dimension_numbers<[1], [0], [0], [1], [0, 0, 1, 1], [], []>} : vector<64x128xf32>, vector<128x128xf32>, vector<64x128xf32> -> vector<64x128xf32>
    %42 = vector.shape_cast %40 : vector<1024x128xf32> to vector<4x16x16x128xf32>
    %43 = vector.shape_cast %41 : vector<64x128xf32> to vector<4x16x128xf32>
    %cst_19 = arith.constant 0.000000e+00 : f32
    %44 = vector.broadcast %cst_19 : f32 to vector<4x16x128xf32>
    %45 = vector.extract_strided_slice %42 {offsets = [0, 0, 0, 0], sizes = [4, 1, 16, 128], strides = [1, 1, 1, 1]} : vector<4x16x16x128xf32> to vector<4x1x16x128xf32>
    %46 = vector.shape_cast %45 : vector<4x1x16x128xf32> to vector<4x16x128xf32>
    %47 = vector.extract_strided_slice %43 {offsets = [0, 0, 0], sizes = [4, 1, 128], strides = [1, 1, 1]} : vector<4x16x128xf32> to vector<4x1x128xf32>
    %48 = vector.broadcast %47 : vector<4x1x128xf32> to vector<4x16x128xf32>
    %49 = arith.mulf %46, %48 : vector<4x16x128xf32>
    %50 = arith.addf %44, %49 : vector<4x16x128xf32>
    %51 = vector.extract_strided_slice %42 {offsets = [0, 1, 0, 0], sizes = [4, 1, 16, 128], strides = [1, 1, 1, 1]} : vector<4x16x16x128xf32> to vector<4x1x16x128xf32>
    %52 = vector.shape_cast %51 : vector<4x1x16x128xf32> to vector<4x16x128xf32>
    %53 = vector.extract_strided_slice %43 {offsets = [0, 1, 0], sizes = [4, 1, 128], strides = [1, 1, 1]} : vector<4x16x128xf32> to vector<4x1x128xf32>
    %54 = vector.broadcast %53 : vector<4x1x128xf32> to vector<4x16x128xf32>
    %55 = arith.mulf %52, %54 : vector<4x16x128xf32>
    %56 = arith.addf %50, %55 : vector<4x16x128xf32>
    %57 = vector.extract_strided_slice %42 {offsets = [0, 2, 0, 0], sizes = [4, 1, 16, 128], strides = [1, 1, 1, 1]} : vector<4x16x16x128xf32> to vector<4x1x16x128xf32>
    %58 = vector.shape_cast %57 : vector<4x1x16x128xf32> to vector<4x16x128xf32>
    %59 = vector.extract_strided_slice %43 {offsets = [0, 2, 0], sizes = [4, 1, 128], strides = [1, 1, 1]} : vector<4x16x128xf32> to vector<4x1x128xf32>
    %60 = vector.broadcast %59 : vector<4x1x128xf32> to vector<4x16x128xf32>
    %61 = arith.mulf %58, %60 : vector<4x16x128xf32>
    %62 = arith.addf %56, %61 : vector<4x16x128xf32>
    %63 = vector.extract_strided_slice %42 {offsets = [0, 3, 0, 0], sizes = [4, 1, 16, 128], strides = [1, 1, 1, 1]} : vector<4x16x16x128xf32> to vector<4x1x16x128xf32>
    %64 = vector.shape_cast %63 : vector<4x1x16x128xf32> to vector<4x16x128xf32>
    %65 = vector.extract_strided_slice %43 {offsets = [0, 3, 0], sizes = [4, 1, 128], strides = [1, 1, 1]} : vector<4x16x128xf32> to vector<4x1x128xf32>
    %66 = vector.broadcast %65 : vector<4x1x128xf32> to vector<4x16x128xf32>
    %67 = arith.mulf %64, %66 : vector<4x16x128xf32>
    %68 = arith.addf %62, %67 : vector<4x16x128xf32>
    %69 = vector.extract_strided_slice %42 {offsets = [0, 4, 0, 0], sizes = [4, 1, 16, 128], strides = [1, 1, 1, 1]} : vector<4x16x16x128xf32> to vector<4x1x16x128xf32>
    %70 = vector.shape_cast %69 : vector<4x1x16x128xf32> to vector<4x16x128xf32>
    %71 = vector.extract_strided_slice %43 {offsets = [0, 4, 0], sizes = [4, 1, 128], strides = [1, 1, 1]} : vector<4x16x128xf32> to vector<4x1x128xf32>
    %72 = vector.broadcast %71 : vector<4x1x128xf32> to vector<4x16x128xf32>
    %73 = arith.mulf %70, %72 : vector<4x16x128xf32>
    %74 = arith.addf %68, %73 : vector<4x16x128xf32>
    %75 = vector.extract_strided_slice %42 {offsets = [0, 5, 0, 0], sizes = [4, 1, 16, 128], strides = [1, 1, 1, 1]} : vector<4x16x16x128xf32> to vector<4x1x16x128xf32>
    %76 = vector.shape_cast %75 : vector<4x1x16x128xf32> to vector<4x16x128xf32>
    %77 = vector.extract_strided_slice %43 {offsets = [0, 5, 0], sizes = [4, 1, 128], strides = [1, 1, 1]} : vector<4x16x128xf32> to vector<4x1x128xf32>
    %78 = vector.broadcast %77 : vector<4x1x128xf32> to vector<4x16x128xf32>
    %79 = arith.mulf %76, %78 : vector<4x16x128xf32>
    %80 = arith.addf %74, %79 : vector<4x16x128xf32>
    %81 = vector.extract_strided_slice %42 {offsets = [0, 6, 0, 0], sizes = [4, 1, 16, 128], strides = [1, 1, 1, 1]} : vector<4x16x16x128xf32> to vector<4x1x16x128xf32>
    %82 = vector.shape_cast %81 : vector<4x1x16x128xf32> to vector<4x16x128xf32>
    %83 = vector.extract_strided_slice %43 {offsets = [0, 6, 0], sizes = [4, 1, 128], strides = [1, 1, 1]} : vector<4x16x128xf32> to vector<4x1x128xf32>
    %84 = vector.broadcast %83 : vector<4x1x128xf32> to vector<4x16x128xf32>
    %85 = arith.mulf %82, %84 : vector<4x16x128xf32>
    %86 = arith.addf %80, %85 : vector<4x16x128xf32>
    %87 = vector.extract_strided_slice %42 {offsets = [0, 7, 0, 0], sizes = [4, 1, 16, 128], strides = [1, 1, 1, 1]} : vector<4x16x16x128xf32> to vector<4x1x16x128xf32>
    %88 = vector.shape_cast %87 : vector<4x1x16x128xf32> to vector<4x16x128xf32>
    %89 = vector.extract_strided_slice %43 {offsets = [0, 7, 0], sizes = [4, 1, 128], strides = [1, 1, 1]} : vector<4x16x128xf32> to vector<4x1x128xf32>
    %90 = vector.broadcast %89 : vector<4x1x128xf32> to vector<4x16x128xf32>
    %91 = arith.mulf %88, %90 : vector<4x16x128xf32>
    %92 = arith.addf %86, %91 : vector<4x16x128xf32>
    %93 = vector.extract_strided_slice %42 {offsets = [0, 8, 0, 0], sizes = [4, 1, 16, 128], strides = [1, 1, 1, 1]} : vector<4x16x16x128xf32> to vector<4x1x16x128xf32>
    %94 = vector.shape_cast %93 : vector<4x1x16x128xf32> to vector<4x16x128xf32>
    %95 = vector.extract_strided_slice %43 {offsets = [0, 8, 0], sizes = [4, 1, 128], strides = [1, 1, 1]} : vector<4x16x128xf32> to vector<4x1x128xf32>
    %96 = vector.broadcast %95 : vector<4x1x128xf32> to vector<4x16x128xf32>
    %97 = arith.mulf %94, %96 : vector<4x16x128xf32>
    %98 = arith.addf %92, %97 : vector<4x16x128xf32>
    %99 = vector.extract_strided_slice %42 {offsets = [0, 9, 0, 0], sizes = [4, 1, 16, 128], strides = [1, 1, 1, 1]} : vector<4x16x16x128xf32> to vector<4x1x16x128xf32>
    %100 = vector.shape_cast %99 : vector<4x1x16x128xf32> to vector<4x16x128xf32>
    %101 = vector.extract_strided_slice %43 {offsets = [0, 9, 0], sizes = [4, 1, 128], strides = [1, 1, 1]} : vector<4x16x128xf32> to vector<4x1x128xf32>
    %102 = vector.broadcast %101 : vector<4x1x128xf32> to vector<4x16x128xf32>
    %103 = arith.mulf %100, %102 : vector<4x16x128xf32>
    %104 = arith.addf %98, %103 : vector<4x16x128xf32>
    %105 = vector.extract_strided_slice %42 {offsets = [0, 10, 0, 0], sizes = [4, 1, 16, 128], strides = [1, 1, 1, 1]} : vector<4x16x16x128xf32> to vector<4x1x16x128xf32>
    %106 = vector.shape_cast %105 : vector<4x1x16x128xf32> to vector<4x16x128xf32>
    %107 = vector.extract_strided_slice %43 {offsets = [0, 10, 0], sizes = [4, 1, 128], strides = [1, 1, 1]} : vector<4x16x128xf32> to vector<4x1x128xf32>
    %108 = vector.broadcast %107 : vector<4x1x128xf32> to vector<4x16x128xf32>
    %109 = arith.mulf %106, %108 : vector<4x16x128xf32>
    %110 = arith.addf %104, %109 : vector<4x16x128xf32>
    %111 = vector.extract_strided_slice %42 {offsets = [0, 11, 0, 0], sizes = [4, 1, 16, 128], strides = [1, 1, 1, 1]} : vector<4x16x16x128xf32> to vector<4x1x16x128xf32>
    %112 = vector.shape_cast %111 : vector<4x1x16x128xf32> to vector<4x16x128xf32>
    %113 = vector.extract_strided_slice %43 {offsets = [0, 11, 0], sizes = [4, 1, 128], strides = [1, 1, 1]} : vector<4x16x128xf32> to vector<4x1x128xf32>
    %114 = vector.broadcast %113 : vector<4x1x128xf32> to vector<4x16x128xf32>
    %115 = arith.mulf %112, %114 : vector<4x16x128xf32>
    %116 = arith.addf %110, %115 : vector<4x16x128xf32>
    %117 = vector.extract_strided_slice %42 {offsets = [0, 12, 0, 0], sizes = [4, 1, 16, 128], strides = [1, 1, 1, 1]} : vector<4x16x16x128xf32> to vector<4x1x16x128xf32>
    %118 = vector.shape_cast %117 : vector<4x1x16x128xf32> to vector<4x16x128xf32>
    %119 = vector.extract_strided_slice %43 {offsets = [0, 12, 0], sizes = [4, 1, 128], strides = [1, 1, 1]} : vector<4x16x128xf32> to vector<4x1x128xf32>
    %120 = vector.broadcast %119 : vector<4x1x128xf32> to vector<4x16x128xf32>
    %121 = arith.mulf %118, %120 : vector<4x16x128xf32>
    %122 = arith.addf %116, %121 : vector<4x16x128xf32>
    %123 = vector.extract_strided_slice %42 {offsets = [0, 13, 0, 0], sizes = [4, 1, 16, 128], strides = [1, 1, 1, 1]} : vector<4x16x16x128xf32> to vector<4x1x16x128xf32>
    %124 = vector.shape_cast %123 : vector<4x1x16x128xf32> to vector<4x16x128xf32>
    %125 = vector.extract_strided_slice %43 {offsets = [0, 13, 0], sizes = [4, 1, 128], strides = [1, 1, 1]} : vector<4x16x128xf32> to vector<4x1x128xf32>
    %126 = vector.broadcast %125 : vector<4x1x128xf32> to vector<4x16x128xf32>
    %127 = arith.mulf %124, %126 : vector<4x16x128xf32>
    %128 = arith.addf %122, %127 : vector<4x16x128xf32>
    %129 = vector.extract_strided_slice %42 {offsets = [0, 14, 0, 0], sizes = [4, 1, 16, 128], strides = [1, 1, 1, 1]} : vector<4x16x16x128xf32> to vector<4x1x16x128xf32>
    %130 = vector.shape_cast %129 : vector<4x1x16x128xf32> to vector<4x16x128xf32>
    %131 = vector.extract_strided_slice %43 {offsets = [0, 14, 0], sizes = [4, 1, 128], strides = [1, 1, 1]} : vector<4x16x128xf32> to vector<4x1x128xf32>
    %132 = vector.broadcast %131 : vector<4x1x128xf32> to vector<4x16x128xf32>
    %133 = arith.mulf %130, %132 : vector<4x16x128xf32>
    %134 = arith.addf %128, %133 : vector<4x16x128xf32>
    %135 = vector.extract_strided_slice %42 {offsets = [0, 15, 0, 0], sizes = [4, 1, 16, 128], strides = [1, 1, 1, 1]} : vector<4x16x16x128xf32> to vector<4x1x16x128xf32>
    %136 = vector.shape_cast %135 : vector<4x1x16x128xf32> to vector<4x16x128xf32>
    %137 = vector.extract_strided_slice %43 {offsets = [0, 15, 0], sizes = [4, 1, 128], strides = [1, 1, 1]} : vector<4x16x128xf32> to vector<4x1x128xf32>
    %138 = vector.broadcast %137 : vector<4x1x128xf32> to vector<4x16x128xf32>
    %139 = arith.mulf %136, %138 : vector<4x16x128xf32>
    %140 = arith.addf %134, %139 : vector<4x16x128xf32>
    %141 = vector.shape_cast %140 : vector<4x16x128xf32> to vector<64x128xf32>
    %cst_20 = arith.constant dense<0.000000e+00> : vector<64x128xf32>
    %142 = tpu.matmul %141, %3, %cst_20 {dimension_numbers = #tpu.dot_dimension_numbers<[1], [0], [0], [1], [0, 0, 1, 1], [], []>} : vector<64x128xf32>, vector<128x128xf32>, vector<64x128xf32> -> vector<64x128xf32>
    %143 = vector.broadcast %9 : vector<1x128xf32> to vector<64x128xf32>
    %144 = arith.addf %142, %143 : vector<64x128xf32>
    %cst_21 = arith.constant 0.000000e+00 : f32
    %145 = vector.broadcast %cst_21 : f32 to vector<64x128xf32>
    %146 = arith.subf %145, %144 : vector<64x128xf32>
    %147 = math.exp %146 : vector<64x128xf32>
    %cst_22 = arith.constant 1.000000e+00 : f32
    %148 = vector.broadcast %cst_22 : f32 to vector<64x128xf32>
    %149 = arith.addf %148, %147 : vector<64x128xf32>
    %150 = tpu.reciprocal %149 {approx = true} : vector<64x128xf32> -> vector<64x128xf32>
    %151 = arith.mulf %144, %150 : vector<64x128xf32>
    %152 = arith.addf %18, %151 : vector<64x128xf32>
    %cst_23 = arith.constant dense<0.000000e+00> : vector<64x128xf32>
    %153 = tpu.matmul %152, %4, %cst_23 {dimension_numbers = #tpu.dot_dimension_numbers<[1], [0], [0], [1], [0, 0, 1, 1], [], []>} : vector<64x128xf32>, vector<128x128xf32>, vector<64x128xf32> -> vector<64x128xf32>
    %154 = vector.broadcast %10 : vector<1x128xf32> to vector<64x128xf32>
    %155 = arith.addf %153, %154 : vector<64x128xf32>
    %cst_24 = arith.constant 0.000000e+00 : f32
    %156 = vector.broadcast %cst_24 : f32 to vector<64x128xf32>
    %157 = arith.subf %156, %155 : vector<64x128xf32>
    %158 = math.exp %157 : vector<64x128xf32>
    %cst_25 = arith.constant 1.000000e+00 : f32
    %159 = vector.broadcast %cst_25 : f32 to vector<64x128xf32>
    %160 = arith.addf %159, %158 : vector<64x128xf32>
    %cst_26 = arith.constant 1.000000e+00 : f32
    %161 = vector.broadcast %cst_26 : f32 to vector<64x128xf32>
    %162 = arith.divf %161, %160 : vector<64x128xf32>
    %163 = arith.mulf %155, %162 : vector<64x128xf32>
    %cst_27 = arith.constant dense<0.000000e+00> : vector<64x128xf32>
    %164 = tpu.matmul %163, %5, %cst_27 {dimension_numbers = #tpu.dot_dimension_numbers<[1], [0], [0], [1], [0, 0, 1, 1], [], []>} : vector<64x128xf32>, vector<128x128xf32>, vector<64x128xf32> -> vector<64x128xf32>
    %165 = vector.shape_cast %164 : vector<64x128xf32> to vector<4x16x128xf32>
    %cst_28 = arith.constant dense<0.000000e+00> : vector<4x128xf32>
    %166 = vector.multi_reduction <add>, %165, %cst_28 [1] : vector<4x16x128xf32> to vector<4x128xf32>
    %cst_29 = arith.constant 1.600000e+01 : f32
    %167 = arith.mulf %cst_29, %13 : f32
    %168 = vector.broadcast %167 : f32 to vector<4x128xf32>
    %169 = arith.addf %166, %168 : vector<4x128xf32>
    %170 = vector.broadcast %14 : f32 to vector<4x128xf32>
    %171 = arith.mulf %170, %169 : vector<4x128xf32>
    %172 = vector.broadcast %15 : f32 to vector<4x128xf32>
    %173 = arith.addf %171, %172 : vector<4x128xf32>
    %174 = vector.shape_cast %173 : vector<4x128xf32> to vector<1x4x128xf32>
    %c0_30 = arith.constant 0 : index
    %c0_31 = arith.constant 0 : index
    %c0_32 = arith.constant 0 : index
    %175 = vector.load %arg6[%c0_30, %c0_31, %c0_32] : memref<1x4x128xf32, #tpu.memory_space<vmem>>, vector<1x4x128xf32>
    tpu.vector_store %arg6[%c0_30, %c0_31, %c0_32], %174 {strides = array<i32>} : memref<1x4x128xf32, #tpu.memory_space<vmem>>, vector<1x4x128xf32>,
    return
  }
  func.func @transform_0(%arg0: i32) -> (i32, i32) {
    %c0_i32 = arith.constant 0 : i32
    %c0_i32_0 = arith.constant 0 : i32
    return %arg0, %c0_i32 : i32, i32
  }
  func.func @transform_1(%arg0: i32) -> (i32, i32) {
    %c0_i32 = arith.constant 0 : i32
    %c0_i32_0 = arith.constant 0 : i32
    return %arg0, %c0_i32 : i32, i32
  }
  func.func @transform_2(%arg0: i32) -> (i32, i32) {
    %c0_i32 = arith.constant 0 : i32
    %c0_i32_0 = arith.constant 0 : i32
    return %arg0, %c0_i32 : i32, i32
  }
  func.func @transform_3(%arg0: i32) -> (i32, i32) {
    %c0_i32 = arith.constant 0 : i32
    %c0_i32_0 = arith.constant 0 : i32
    %c0_i32_1 = arith.constant 0 : i32
    return %c0_i32, %c0_i32_0 : i32, i32
  }
  func.func @transform_4(%arg0: i32) -> i32 {
    %c0_i32 = arith.constant 0 : i32
    %c0_i32_0 = arith.constant 0 : i32
    return %c0_i32 : i32
  }
  func.func @transform_5(%arg0: i32) -> (i32, i32, i32) {
    %c0_i32 = arith.constant 0 : i32
    %c0_i32_0 = arith.constant 0 : i32
    %c0_i32_1 = arith.constant 0 : i32
    return %arg0, %c0_i32, %c0_i32_0 : i32, i32, i32
  }
}

</mosaic_0001>

<llo_original>
// kernel: sub.8
$region0: #{sub.8}
  %s0 = inlined_call_operand.hbm [shape: f32[512,3], index: 0, kind: input, shape index: {}]
  %s1 = inlined_call_operand.vmem [shape: f32[32,16,3], index: 1, kind: output, shape index: {}]
  $region1: #{sub.8} parent=0
    #allocation0 [shape = 'u8[8192]{0}', space=vmem, size = 0x2000, scoped, tag = 'operand span for operand 0']
    #allocation1 [shape = 's32[1]{0}', space=sflag, size = 0x4, scoped, tag = 'scoped memory for sub.8']
    #allocation2 [shape = 'u8[16384]{0}', space=vmem, size = 0x4000, scoped, tag = 'scoped mem for input reshape']
    %2 = vsyncpa [#allocation1], 0
    %4 = vsyncadd [#allocation1], 0
    %s6 = sshll.u32 %s0, 4
    %s7 = int_to_ptr.hbm [resolvable:$true] %s6
    %s8 = sshll.u32 [#allocation0], 4
    %s9 = int_to_ptr.vmem [resolvable:$true] %s8
    %11 = dma.hbm_to_vmem [thread:$0]  %s7, 256, %s9, [#allocation1]
    %13 = dma.done [#allocation1], 256
    %s15 = ssub.s32 16, 1
    %s16 = scalar_lea.vmem [#allocation0], 12
    %v17 = vld [vmem:[%s16] sm:%s15]
    %s18 = scalar_lea.vmem [#allocation2], 24
    %19 = vst [vmem:[%s18] sm:%s15] %v17
    %s20 = scalar_lea.vmem [#allocation0], 8
    %v21 = vld [vmem:[%s20] sm:%s15]
    %s22 = scalar_lea.vmem [#allocation2], 16
    %23 = vst [vmem:[%s22] sm:%s15] %v21
    %s24 = scalar_lea.vmem [#allocation0], 4
    %v25 = vld [vmem:[%s24] sm:%s15]
    %s26 = scalar_lea.vmem [#allocation2], 8
    %27 = vst [vmem:[%s26] sm:%s15] %v25
    %v28 = vld [vmem:[#allocation0] sm:%s15]
    %29 = vst [vmem:[#allocation2] sm:%s15] %v28
    %v30 = vld [vmem:[#allocation2] sm:$0x7]
    %vm31 = vcmask 130048
    %32 = vst.msk [vmem:[%s1] sm:$0x1] %vm31, %v30
    %s33 = scalar_lea.vmem %s1, 31
    %34 = vst.msk [vmem:[%s33] sm:$0x2] %vm31, %v30
    %s35 = scalar_lea.vmem %s1, 62
    %36 = vst.msk [vmem:[%s35] sm:$0x4] %vm31, %v30
    %s37 = scalar_lea.vmem [#allocation2], 8
    %v38 = vld [vmem:[%s37] sm:$0x7]
    %vm39 = vcmask 130048
    %s40 = scalar_lea.vmem %s1, 8
    %41 = vst.msk [vmem:[%s40] sm:$0x1] %vm39, %v38
    %s42 = scalar_lea.vmem %s1, 39
    %43 = vst.msk [vmem:[%s42] sm:$0x2] %vm39, %v38
    %s44 = scalar_lea.vmem %s1, 70
    %45 = vst.msk [vmem:[%s44] sm:$0x4] %vm39, %v38
    %s46 = scalar_lea.vmem [#allocation2], 16
    %v47 = vld [vmem:[%s46] sm:$0x7]
    %vm48 = vcmask 130048
    %s49 = scalar_lea.vmem %s1, 16
    %50 = vst.msk [vmem:[%s49] sm:$0x1] %vm48, %v47
    %s51 = scalar_lea.vmem %s1, 47
    %52 = vst.msk [vmem:[%s51] sm:$0x2] %vm48, %v47
    %s53 = scalar_lea.vmem %s1, 78
    %54 = vst.msk [vmem:[%s53] sm:$0x4] %vm48, %v47
    %s55 = scalar_lea.vmem [#allocation2], 24
    %v56 = vld [vmem:[%s55] sm:$0x7]
    %vm57 = vcmask 130048
    %s58 = scalar_lea.vmem %s1, 24
    %59 = vst.msk [vmem:[%s58] sm:$0x1] %vm57, %v56
    %s60 = scalar_lea.vmem %s1, 55
    %61 = vst.msk [vmem:[%s60] sm:$0x2] %vm57, %v56
    %s62 = scalar_lea.vmem %s1, 86
    %63 = vst.msk [vmem:[%s62] sm:$0x4] %vm57, %v56
    %v64 = vld [vmem:[#allocation2] ss:$8 sm:$0xf]
    %s65 = scalar_lea.vmem [#allocation2], 4294967265
    %v66 = vld [vmem:[%s65] ss:$8 sm:$0xf0]
    %vm67 = vcmask 1047556
    %v68 = vsel %vm67, %v66, %v64
    %69 = vrot.lane.b32.xlu0 %v68, 112
    %v70 = vpop.permute.xlu0 %69
    %vm71 = vcmask 130048
    %s72 = scalar_lea.vmem %s1, 1
    %73 = vst.msk [vmem:[%s72] ss:$8 sm:$0xf] %vm71, %v70
    %s74 = scalar_lea.vmem %s1, 1
    %75 = vst.msk [vmem:[%s74] ss:$8 sm:$0xf0] %vm71, %v70
    %s76 = scalar_lea.vmem [#allocation2], 2
    %v77 = vld [vmem:[%s76] ss:$8 sm:$0xf]
    %78 = vrot.lane.b32.xlu0 %v77, 112
    %v79 = vpop.permute.xlu0 %78
    %vm80 = vcmask 130048
    %s81 = scalar_lea.vmem %s1, 65
    %82 = vst.msk [vmem:[%s81] ss:$8 sm:$0xf] %vm80, %v79
    %v83 = vld [vmem:[#allocation2] ss:$8 sm:$0xf]
    %s84 = scalar_lea.vmem [#allocation2], 4294967265
    %v85 = vld [vmem:[%s84] ss:$8 sm:$0xf0]
    %vm86 = vcmask 1047556
    %v87 = vsel %vm86, %v85, %v83
    %88 = vrot.lane.b32.xlu0 %v87, 96
    %v89 = vpop.permute.xlu0 %88
    %vm90 = vcmask 130048
    %s91 = scalar_lea.vmem %s1, 2
    %92 = vst.msk [vmem:[%s91] ss:$8 sm:$0xf] %vm90, %v89
    %s93 = scalar_lea.vmem %s1, 2
    %94 = vst.msk [vmem:[%s93] ss:$8 sm:$0xf0] %vm90, %v89
    %s95 = scalar_lea.vmem [#allocation2], 2
    %v96 = vld [vmem:[%s95] ss:$8 sm:$0xf]
    %97 = vrot.lane.b32.xlu0 %v96, 96
    %v98 = vpop.permute.xlu0 %97
    %vm99 = vcmask 130048
    %s100 = scalar_lea.vmem %s1, 66
    %101 = vst.msk [vmem:[%s100] ss:$8 sm:$0xf] %vm99, %v98
    %v102 = vld [vmem:[#allocation2] ss:$8 sm:$0xf]
    %s103 = scalar_lea.vmem [#allocation2], 4294967265
    %v104 = vld [vmem:[%s103] ss:$8 sm:$0xf0]
    %vm105 = vcmask 1047556
    %v106 = vsel %vm105, %v104, %v102
    %107 = vrot.lane.b32.xlu0 %v106, 80
    %v108 = vpop.permute.xlu0 %107
    %vm109 = vcmask 130048
    %s110 = scalar_lea.vmem %s1, 3
    %111 = vst.msk [vmem:[%s110] ss:$8 sm:$0xf] %vm109, %v108
    %s112 = scalar_lea.vmem %s1, 3
    %113 = vst.msk [vmem:[%s112] ss:$8 sm:$0xf0] %vm109, %v108
    %s114 = scalar_lea.vmem [#allocation2], 2
    %v115 = vld [vmem:[%s114] ss:$8 sm:$0xf]
    %116 = vrot.lane.b32.xlu0 %v115, 80
    %v117 = vpop.permute.xlu0 %116
    %vm118 = vcmask 130048
    %s119 = scalar_lea.vmem %s1, 67
    %120 = vst.msk [vmem:[%s119] ss:$8 sm:$0xf] %vm118, %v117
    %v121 = vld [vmem:[#allocation2] ss:$8 sm:$0xf]
    %s122 = scalar_lea.vmem [#allocation2], 4294967265
    %v123 = vld [vmem:[%s122] ss:$8 sm:$0xf0]
    %vm124 = vcmask 1047556
    %v125 = vsel %vm124, %v123, %v121
    %126 = vrot.lane.b32.xlu0 %v125, 64
    %v127 = vpop.permute.xlu0 %126
    %vm128 = vcmask 130048
    %s129 = scalar_lea.vmem %s1, 4
    %130 = vst.msk [vmem:[%s129] ss:$8 sm:$0xf] %vm128, %v127
    %s131 = scalar_lea.vmem %s1, 4
    %132 = vst.msk [vmem:[%s131] ss:$8 sm:$0xf0] %vm128, %v127
    %s133 = scalar_lea.vmem [#allocation2], 2
    %v134 = vld [vmem:[%s133] ss:$8 sm:$0xf]
    %135 = vrot.lane.b32.xlu0 %v134, 64
    %v136 = vpop.permute.xlu0 %135
    %vm137 = vcmask 130048
    %s138 = scalar_lea.vmem %s1, 68
    %139 = vst.msk [vmem:[%s138] ss:$8 sm:$0xf] %vm137, %v136
    %v140 = vld [vmem:[#allocation2] ss:$8 sm:$0xf]
    %s141 = scalar_lea.vmem [#allocation2], 4294967265
    %v142 = vld [vmem:[%s141] ss:$8 sm:$0xf0]
    %vm143 = vcmask 1047556
    %v144 = vsel %vm143, %v142, %v140
    %145 = vrot.lane.b32.xlu0 %v144, 48
    %v146 = vpop.permute.xlu0 %145
    %vm147 = vcmask 130048
    %s148 = scalar_lea.vmem %s1, 5
    %149 = vst.msk [vmem:[%s148] ss:$8 sm:$0xf] %vm147, %v146
    %s150 = scalar_lea.vmem %s1, 5
    %151 = vst.msk [vmem:[%s150] ss:$8 sm:$0xf0] %vm147, %v146
    %s152 = scalar_lea.vmem [#allocation2], 2
    %v153 = vld [vmem:[%s152] ss:$8 sm:$0xf]
    %154 = vrot.lane.b32.xlu0 %v153, 48
    %v155 = vpop.permute.xlu0 %154
    %vm156 = vcmask 130048
    %s157 = scalar_lea.vmem %s1, 69
    %158 = vst.msk [vmem:[%s157] ss:$8 sm:$0xf] %vm156, %v155
    %v159 = vld [vmem:[#allocation2] ss:$8 sm:$0xf]
    %s160 = scalar_lea.vmem [#allocation2], 4294967265
    %v161 = vld [vmem:[%s160] ss:$8 sm:$0xf0]
    %vm162 = vcmask 1047556
    %v163 = vsel %vm162, %v161, %v159
    %164 = vrot.lane.b32.xlu0 %v163, 32
    %v165 = vpop.permute.xlu0 %164
    %vm166 = vcmask 130048
    %s167 = scalar_lea.vmem %s1, 6
    %168 = vst.msk [vmem:[%s167] ss:$8 sm:$0xf] %vm166, %v165
    %s169 = scalar_lea.vmem %s1, 6
    %170 = vst.msk [vmem:[%s169] ss:$8 sm:$0xf0] %vm166, %v165
    %s171 = scalar_lea.vmem [#allocation2], 2
    %v172 = vld [vmem:[%s171] ss:$8 sm:$0xf]
    %173 = vrot.lane.b32.xlu0 %v172, 32
    %v174 = vpop.permute.xlu0 %173
    %vm175 = vcmask 130048
    %s176 = scalar_lea.vmem %s1, 70
    %177 = vst.msk [vmem:[%s176] ss:$8 sm:$0xf] %vm175, %v174
    %v178 = vld [vmem:[#allocation2] ss:$8 sm:$0xf]
    %s179 = scalar_lea.vmem [#allocation2], 4294967265
    %v180 = vld [vmem:[%s179] ss:$8 sm:$0xf0]
    %vm181 = vcmask 1047556
    %v182 = vsel %vm181, %v180, %v178
    %183 = vrot.lane.b32.xlu0 %v182, 16
    %v184 = vpop.permute.xlu0 %183
    %vm185 = vcmask 130048
    %s186 = scalar_lea.vmem %s1, 7
    %187 = vst.msk [vmem:[%s186] ss:$8 sm:$0xf] %vm185, %v184
    %s188 = scalar_lea.vmem %s1, 7
    %189 = vst.msk [vmem:[%s188] ss:$8 sm:$0xf0] %vm185, %v184
    %s190 = scalar_lea.vmem [#allocation2], 2
    %v191 = vld [vmem:[%s190] ss:$8 sm:$0xf]
    %192 = vrot.lane.b32.xlu0 %v191, 16
    %v193 = vpop.permute.xlu0 %192
    %vm194 = vcmask 130048
    %s195 = scalar_lea.vmem %s1, 71
    %196 = vst.msk [vmem:[%s195] ss:$8 sm:$0xf] %vm194, %v193
    %197 = vsyncpa [#allocation1], 1

// kernel: torchmd_net_forward.1
$region0: #{torchmd_net_forward.1}
  #allocation0 [shape = 'u32[]', space=smem, size = 0x4, offset = 0x4, fixed_abs, tag = 'smem constant byte address 0x4 - core index']
  #allocation1 [shape = 'u32[72,128]{1,0:T(1,128)}', space=vmem, size = 0x9000, scoped, tag = 'internal scratch']
  %s0 = inlined_call_operand.vmem [shape: f32[2048,128], index: 0, kind: input, shape index: {}]
  %s1 = inlined_call_operand.vmem [shape: f32[2048,128], index: 1, kind: input, shape index: {}]
  %s2 = inlined_call_operand.vmem [shape: f32[128,128], index: 2, kind: input, shape index: {}]
  %s3 = inlined_call_operand.vmem [shape: f32[776,128], index: 3, kind: input, shape index: {}]
  %s4 = inlined_call_operand.vmem [shape: f32[3], index: 4, kind: input, shape index: {}]
  %s5 = inlined_call_operand.vmem [shape: f32[2,4,128], index: 5, kind: output, shape index: {}]
  %s6 = sld [smem:[#allocation0]]
  $region57: #{torchmd_net_forward.1} parent=0
    _
  %s8 = ssub.s32 1, %s6
  %s9 = scalar_select 0, %s8, %s6
  $region1: #{torchmd_net_forward.1} parent=0
    #allocation2 [shape = 'u8[512]{0}', space=smem, size = 0x200, scoped, tag = 'input window, operand 4, single buffered']
    #allocation3 [shape = 's32[2]{0}', space=sflag, size = 0x8, scoped, tag = 'scoped memory for torchmd_net_forward.1']
    %10 = vsyncpa [#allocation3], 0
    loop: start=0, step=1, limit=4
    $region2: #{torchmd_net_forward.1} parent=1 // loop_pre_header
      _
    $region3: #{torchmd_net_forward.1} parent=1 // loop_header
      %s12 = sphi 0, %s16
      %p13 = scmp.ge.s32.totalorder %s12, 4
      %s22 = sphi 0, %s24
      %s25 = sphi 0, %s22
      %s26 = sphi 0, %s25
      %s42 = sphi 0, %s26
      %s48 = sphi 0, %s50
      %s51 = sphi 0, %s48
      %s52 = sphi 0, %s51
      %s68 = sphi 0, %s52
      %s74 = sphi 0, %s76
      %s77 = sphi 0, %s74
      %s78 = sphi 0, %s77
      %s94 = sphi 0, %s78
      %s98 = sphi 0, %s98
      %s100 = sphi 0, %s98
      %s101 = sphi 0, %s100
      %s115 = sphi 0, %s101
      %s119 = sphi 0, %s119
      %s121 = sphi 0, %s119
      %s122 = sphi 0, %s121
      %s136 = sphi 0, %s122
      %s142 = sphi 0, %s144
      %s145 = sphi 0, %s142
      %s146 = sphi 0, %s145
      %s162 = sphi 0, %s146
    $region4: #{torchmd_net_forward.1} parent=1 // loop_header_branch
      %15 = sbr.rel (%p13) target = $region8
    $region5: #{torchmd_net_forward.1} parent=1 // loop_body
      %s17 = ssub.s32 %s12, 1
      %s18 = ssub.s32 %s12, 2
      %s19 = sadd.s32 %s12, 1
      %s20 = ssub.s32 %s12, %s19
      %p21 = scmp.eq.s32.totalorder %s20, 0
      %s23 = sadd.s32 %s22, 1
      %s24 = scalar_select %p21, %s22, %s23
      %p27 = pneg %p21
      %p28 = scmp.eq.s32.totalorder %s12, 1
      %p29 = por %p27, %p28
      %p30 = scmp.ne.s32.totalorder %s22, %s25
      %p31 = scmp.eq.s32.totalorder %s12, 0
      %p32 = por %p30, %p31
      %p33 = scmp.ne.s32.totalorder %s22, %s25
      %p34 = scmp.eq.s32.totalorder %s17, 1
      %p35 = por %p33, %p34
      %p36 = scmp.ne.s32.totalorder %s25, %s26
      %p37 = scmp.eq.s32.totalorder %s17, 0
      %p38 = por %p36, %p37
      %p39 = scmp.ne.s32.totalorder %s25, %s26
      %p40 = scmp.eq.s32.totalorder %s18, 1
      %p41 = por %p39, %p40
      %p43 = scmp.ne.s32.totalorder %s26, %s42
      %p44 = scmp.eq.s32.totalorder %s18, 0
      %p45 = por %p43, %p44
      %s46 = ssub.s32 %s12, %s19
      %p47 = scmp.eq.s32.totalorder %s46, 0
      %s49 = sadd.s32 %s48, 1
      %s50 = scalar_select %p47, %s48, %s49
      %p53 = pneg %p47
      %p54 = scmp.eq.s32.totalorder %s12, 1
      %p55 = por %p53, %p54
      %p56 = scmp.ne.s32.totalorder %s48, %s51
      %p57 = scmp.eq.s32.totalorder %s12, 0
      %p58 = por %p56, %p57
      %p59 = scmp.ne.s32.totalorder %s48, %s51
      %p60 = scmp.eq.s32.totalorder %s17, 1
      %p61 = por %p59, %p60
      %p62 = scmp.ne.s32.totalorder %s51, %s52
      %p63 = scmp.eq.s32.totalorder %s17, 0
      %p64 = por %p62, %p63
      %p65 = scmp.ne.s32.totalorder %s51, %s52
      %p66 = scmp.eq.s32.totalorder %s18, 1
      %p67 = por %p65, %p66
      %p69 = scmp.ne.s32.totalorder %s52, %s68
      %p70 = scmp.eq.s32.totalorder %s18, 0
      %p71 = por %p69, %p70
      %s72 = ssub.s32 %s12, %s19
      %p73 = scmp.eq.s32.totalorder %s72, 0
      %s75 = sadd.s32 %s74, 1
      %s76 = scalar_select %p73, %s74, %s75
      %p79 = pneg %p73
      %p80 = scmp.eq.s32.totalorder %s12, 1
      %p81 = por %p79, %p80
      %p82 = scmp.ne.s32.totalorder %s74, %s77
      %p83 = scmp.eq.s32.totalorder %s12, 0
      %p84 = por %p82, %p83
      %p85 = scmp.ne.s32.totalorder %s74, %s77
      %p86 = scmp.eq.s32.totalorder %s17, 1
      %p87 = por %p85, %p86
      %p88 = scmp.ne.s32.totalorder %s77, %s78
      %p89 = scmp.eq.s32.totalorder %s17, 0
      %p90 = por %p88, %p89
      %p91 = scmp.ne.s32.totalorder %s77, %s78
      %p92 = scmp.eq.s32.totalorder %s18, 1
      %p93 = por %p91, %p92
      %p95 = scmp.ne.s32.totalorder %s78, %s94
      %p96 = scmp.eq.s32.totalorder %s18, 0
      %p97 = por %p95, %p96
      %s99 = sadd.s32 %s98, 1
      %p102 = scmp.eq.s32.totalorder %s12, 1
      %p103 = scmp.ne.s32.totalorder %s98, %s100
      %p104 = scmp.eq.s32.totalorder %s12, 0
      %p105 = por %p103, %p104
      %p106 = scmp.ne.s32.totalorder %s98, %s100
      %p107 = scmp.eq.s32.totalorder %s17, 1
      %p108 = por %p106, %p107
      %p109 = scmp.ne.s32.totalorder %s100, %s101
      %p110 = scmp.eq.s32.totalorder %s17, 0
      %p111 = por %p109, %p110
      %p112 = scmp.ne.s32.totalorder %s100, %s101
      %p113 = scmp.eq.s32.totalorder %s18, 1
      %p114 = por %p112, %p113
      %p116 = scmp.ne.s32.totalorder %s101, %s115
      %p117 = scmp.eq.s32.totalorder %s18, 0
      %p118 = por %p116, %p117
      %s120 = sadd.s32 %s119, 1
      %p123 = scmp.eq.s32.totalorder %s12, 1
      %p124 = scmp.ne.s32.totalorder %s119, %s121
      %p125 = scmp.eq.s32.totalorder %s12, 0
      %p126 = por %p124, %p125
      %p127 = scmp.ne.s32.totalorder %s119, %s121
      %p128 = scmp.eq.s32.totalorder %s17, 1
      %p129 = por %p127, %p128
      %p130 = scmp.ne.s32.totalorder %s121, %s122
      %p131 = scmp.eq.s32.totalorder %s17, 0
      %p132 = por %p130, %p131
      %p133 = scmp.ne.s32.totalorder %s121, %s122
      %p134 = scmp.eq.s32.totalorder %s18, 1
      %p135 = por %p133, %p134
      %p137 = scmp.ne.s32.totalorder %s122, %s136
      %p138 = scmp.eq.s32.totalorder %s18, 0
      %p139 = por %p137, %p138
      %s140 = ssub.s32 %s12, %s19
      %p141 = scmp.eq.s32.totalorder %s140, 0
      %s143 = sadd.s32 %s142, 1
      %s144 = scalar_select %p141, %s142, %s143
      %p147 = pneg %p141
      %p148 = scmp.eq.s32.totalorder %s12, 1
      %p149 = por %p147, %p148
      %p150 = scmp.ne.s32.totalorder %s142, %s145
      %p151 = scmp.eq.s32.totalorder %s12, 0
      %p152 = por %p150, %p151
      %p153 = scmp.ne.s32.totalorder %s142, %s145
      %p154 = scmp.eq.s32.totalorder %s17, 1
      %p155 = por %p153, %p154
      %p156 = scmp.ne.s32.totalorder %s145, %s146
      %p157 = scmp.eq.s32.totalorder %s17, 0
      %p158 = por %p156, %p157
      %p159 = scmp.ne.s32.totalorder %s145, %s146
      %p160 = scmp.eq.s32.totalorder %s18, 1
      %p161 = por %p159, %p160
      %p163 = scmp.ne.s32.totalorder %s146, %s162
      %p164 = scmp.eq.s32.totalorder %s18, 0
      %p165 = por %p163, %p164
      %p166 = scmp.le.s32.totalorder 1, %s12
      %p167 = scmp.lt.s32.totalorder %s12, 3
      %p168 = pnand %p166, %p167
      %p169 = pneg %p168
      // Predicated region
      $region9: #{torchmd_net_forward.1} parent=5 // pred_check
        _
      $region10: #{torchmd_net_forward.1} parent=5 // pred_check_branch
        %171 = sbr.rel (%p168) target = $region12
      $region11: #{torchmd_net_forward.1} parent=5 // pred_region
        %s172 = ssub.s32 %s12, 1
        // Predicated region
        $region13: #{torchmd_net_forward.1} parent=11 // pred_check
          %p173 = pneg %p111
        $region14: #{torchmd_net_forward.1} parent=11 // pred_check_branch
          %175 = sbr.rel (%p173) target = $region16
        $region15: #{torchmd_net_forward.1} parent=11 // pred_region
          _
        $region16: #{torchmd_net_forward.1} parent=11 // pred_fallthru
          _
        // Predicated region
        $region17: #{torchmd_net_forward.1} parent=11 // pred_check
          %p176 = pneg %p132
        $region18: #{torchmd_net_forward.1} parent=11 // pred_check_branch
          %178 = sbr.rel (%p176) target = $region20
        $region19: #{torchmd_net_forward.1} parent=11 // pred_region
          %180 = vsyncadd [#allocation3], 0
          %s182 = sshll.u32 %s4, 4
          %s183 = int_to_ptr.vmem [resolvable:$true] %s182
          %185 = dma.vmem_to_smem %s183, 16, [#allocation2], [#allocation3]
        $region20: #{torchmd_net_forward.1} parent=11 // pred_fallthru
          _
      $region12: #{torchmd_net_forward.1} parent=5 // pred_fallthru
        _
      %p186 = scmp.lt.s32.totalorder %s12, 2
      // Predicated region
      $region21: #{torchmd_net_forward.1} parent=5 // pred_check
        %p187 = pneg %p186
      $region22: #{torchmd_net_forward.1} parent=5 // pred_check_branch
        %189 = sbr.rel (%p187) target = $region24
      $region23: #{torchmd_net_forward.1} parent=5 // pred_region
        // Predicated region
        $region25: #{torchmd_net_forward.1} parent=23 // pred_check
          %p190 = pneg %p32
        $region26: #{torchmd_net_forward.1} parent=23 // pred_check_branch
          %192 = sbr.rel (%p190) target = $region28
        $region27: #{torchmd_net_forward.1} parent=23 // pred_region
          %s193 = smul.u32 128, %s12
          %p194 = scmp.lt.s32.totalorder %s193, 255
          %s195 = scalar_select %p194, %s193, 255
          %s196 = smul.addr %s195, 8
          %s197 = scalar_lea.vmem %s0, %s196
          %s198 = smul.u32 128, %s12
        $region28: #{torchmd_net_forward.1} parent=23 // pred_fallthru
          _
        // Predicated region
        $region29: #{torchmd_net_forward.1} parent=23 // pred_check
          %p199 = pneg %p58
        $region30: #{torchmd_net_forward.1} parent=23 // pred_check_branch
          %201 = sbr.rel (%p199) target = $region32
        $region31: #{torchmd_net_forward.1} parent=23 // pred_region
          %s202 = smul.u32 128, %s12
          %p203 = scmp.lt.s32.totalorder %s202, 255
          %s204 = scalar_select %p203, %s202, 255
          %s205 = smul.addr %s204, 8
          %s206 = scalar_lea.vmem %s1, %s205
          %s207 = smul.u32 128, %s12
        $region32: #{torchmd_net_forward.1} parent=23 // pred_fallthru
          _
        // Predicated region
        $region33: #{torchmd_net_forward.1} parent=23 // pred_check
          %p208 = pneg %p84
        $region34: #{torchmd_net_forward.1} parent=23 // pred_check_branch
          %210 = sbr.rel (%p208) target = $region36
        $region35: #{torchmd_net_forward.1} parent=23 // pred_region
          %s211 = smul.u32 8, %s12
          %p212 = scmp.lt.s32.totalorder %s211, 15
          %s213 = scalar_select %p212, %s211, 15
          %s214 = smul.addr %s213, 8
          %s215 = scalar_lea.vmem %s2, %s214
          %s216 = smul.u32 8, %s12
        $region36: #{torchmd_net_forward.1} parent=23 // pred_fallthru
          _
      $region24: #{torchmd_net_forward.1} parent=5 // pred_fallthru
        _
      %p217 = scmp.le.s32.totalorder 1, %s12
      %p218 = scmp.lt.s32.totalorder %s12, 3
      %p219 = pnand %p217, %p218
      %p220 = pneg %p219
      // Predicated region
      $region37: #{torchmd_net_forward.1} parent=5 // pred_check
        _
      $region38: #{torchmd_net_forward.1} parent=5 // pred_check_branch
        %222 = sbr.rel (%p219) target = $region40
      $region39: #{torchmd_net_forward.1} parent=5 // pred_region
        %s223 = ssub.s32 %s12, 1
        // Predicated region
        $region41: #{torchmd_net_forward.1} parent=39 // pred_check
          %p224 = pneg %p132
        $region42: #{torchmd_net_forward.1} parent=39 // pred_check_branch
          %226 = sbr.rel (%p224) target = $region44
        $region43: #{torchmd_net_forward.1} parent=39 // pred_region
          %228 = dma.done [#allocation3], 16
        $region44: #{torchmd_net_forward.1} parent=39 // pred_fallthru
          _
        %229 = sfence
        %s230 = smul.u32 128, %s17
        %p231 = scmp.lt.s32.totalorder %s230, 255
        %s232 = scalar_select %p231, %s230, 255
        %s233 = smul.addr %s232, 8
        %s234 = scalar_lea.vmem %s0, %s233
        %p235 = pneg %p38
        %p236 = pneg %p35
        %s237 = smul.u32 128, %s17
        %p238 = scmp.lt.s32.totalorder %s237, 255
        %s239 = scalar_select %p238, %s237, 255
        %s240 = smul.addr %s239, 8
        %s241 = scalar_lea.vmem %s1, %s240
        %p242 = pneg %p64
        %p243 = pneg %p61
        %s244 = smul.u32 8, %s17
        %p245 = scmp.lt.s32.totalorder %s244, 15
        %s246 = scalar_select %p245, %s244, 15
        %s247 = smul.addr %s246, 8
        %s248 = scalar_lea.vmem %s2, %s247
        %p249 = pneg %p90
        %p250 = pneg %p87
        %p251 = pneg %p111
        %p252 = pneg %p108
        %p253 = pneg %p132
        %p254 = pneg %p129
        %p255 = pneg %p158
        %p256 = pneg %p155
        %p257 = scmp.lt.s32.totalorder %s17, 1
        %s258 = scalar_select %p257, %s17, 1
        %s259 = smul.addr %s258, 4
        %s260 = scalar_lea.vmem %s5, %s259
        %s261 = smul.u32 128, %s17
        %p262 = scmp.lt.s32.totalorder %s261, 255
        %s263 = scalar_select %p262, %s261, 255
        %s264 = smul.addr %s263, 8
        %s265 = scalar_lea.vmem %s0, %s264
        %s266 = smul.u32 128, %s17
        %s267 = smul.u32 128, %s17
        %p268 = scmp.lt.s32.totalorder %s267, 255
        %s269 = scalar_select %p268, %s267, 255
        %s270 = smul.addr %s269, 8
        %s271 = scalar_lea.vmem %s1, %s270
        %s272 = smul.u32 128, %s17
        %s273 = smul.u32 8, %s17
        %p274 = scmp.lt.s32.totalorder %s273, 15
        %s275 = scalar_select %p274, %s273, 15
        %s276 = smul.addr %s275, 8
        %s277 = scalar_lea.vmem %s2, %s276
        %s278 = smul.u32 8, %s17
        %p279 = scmp.lt.s32.totalorder %s17, 1
        %s280 = scalar_select %p279, %s17, 1
        %s281 = smul.addr %s280, 4
        %s282 = scalar_lea.vmem %s5, %s281
        %v283 = vld [vmem:[%s3] sm:$0xff]
        %v284 = vld [vmem:[%s3 + $0x8] sm:$0xff]
        %v285 = vld [vmem:[%s3 + $0x10] sm:$0xff]
        %v286 = vld [vmem:[%s3 + $0x18] sm:$0xff]
        %v287 = vld [vmem:[%s3 + $0x20] sm:$0xff]
        %v288 = vld [vmem:[%s3 + $0x28] sm:$0xff]
        %v289 = vld [vmem:[%s3 + $0x30] sm:$0xff]
        %v290 = vld [vmem:[%s3 + $0x38] sm:$0xff]
        %v291 = vld [vmem:[%s3 + $0x40] sm:$0xff]
        %v292 = vld [vmem:[%s3 + $0x48] sm:$0xff]
        %v293 = vld [vmem:[%s3 + $0x50] sm:$0xff]
        %v294 = vld [vmem:[%s3 + $0x58] sm:$0xff]
        %v295 = vld [vmem:[%s3 + $0x60] sm:$0xff]
        %v296 = vld [vmem:[%s3 + $0x68] sm:$0xff]
        %v297 = vld [vmem:[%s3 + $0x70] sm:$0xff]
        %v298 = vld [vmem:[%s3 + $0x78] sm:$0xff]
        %v299 = vld [vmem:[%s3 + $0x80] sm:$0xff]
        %v300 = vld [vmem:[%s3 + $0x88] sm:$0xff]
        %v301 = vld [vmem:[%s3 + $0x90] sm:$0xff]
        %v302 = vld [vmem:[%s3 + $0x98] sm:$0xff]
        %v303 = vld [vmem:[%s3 + $0xa0] sm:$0xff]
        %v304 = vld [vmem:[%s3 + $0xa8] sm:$0xff]
        %v305 = vld [vmem:[%s3 + $0xb0] sm:$0xff]
        %v306 = vld [vmem:[%s3 + $0xb8] sm:$0xff]
        %v307 = vld [vmem:[%s3 + $0xc0] sm:$0xff]
        %v308 = vld [vmem:[%s3 + $0xc8] sm:$0xff]
        %v309 = vld [vmem:[%s3 + $0xd0] sm:$0xff]
        %v310 = vld [vmem:[%s3 + $0xd8] sm:$0xff]
        %v311 = vld [vmem:[%s3 + $0xe0] sm:$0xff]
        %v312 = vld [vmem:[%s3 + $0xe8] sm:$0xff]
        %v313 = vld [vmem:[%s3 + $0xf0] sm:$0xff]
        %v314 = vld [vmem:[%s3 + $0xf8] sm:$0xff]
        %v315 = vld [vmem:[%s3 + $0x100] sm:$0xff]
        %v316 = vld [vmem:[%s3 + $0x108] sm:$0xff]
        %v317 = vld [vmem:[%s3 + $0x110] sm:$0xff]
        %v318 = vld [vmem:[%s3 + $0x118] sm:$0xff]
        %v319 = vld [vmem:[%s3 + $0x120] sm:$0xff]
        %v320 = vld [vmem:[%s3 + $0x128] sm:$0xff]
        %v321 = vld [vmem:[%s3 + $0x130] sm:$0xff]
        %v322 = vld [vmem:[%s3 + $0x138] sm:$0xff]
        %v323 = vld [vmem:[%s3 + $0x140] sm:$0xff]
        %v324 = vld [vmem:[%s3 + $0x148] sm:$0xff]
        %v325 = vld [vmem:[%s3 + $0x150] sm:$0xff]
        %v326 = vld [vmem:[%s3 + $0x158] sm:$0xff]
        %v327 = vld [vmem:[%s3 + $0x160] sm:$0xff]
        %v328 = vld [vmem:[%s3 + $0x168] sm:$0xff]
        %v329 = vld [vmem:[%s3 + $0x170] sm:$0xff]
        %v330 = vld [vmem:[%s3 + $0x178] sm:$0xff]
        %v331 = vld [vmem:[%s3 + $0x180] sm:$0xff]
        %v332 = vld [vmem:[%s3 + $0x188] sm:$0xff]
        %v333 = vld [vmem:[%s3 + $0x190] sm:$0xff]
        %v334 = vld [vmem:[%s3 + $0x198] sm:$0xff]
        %v335 = vld [vmem:[%s3 + $0x1a0] sm:$0xff]
        %v336 = vld [vmem:[%s3 + $0x1a8] sm:$0xff]
        %v337 = vld [vmem:[%s3 + $0x1b0] sm:$0xff]
        %v338 = vld [vmem:[%s3 + $0x1b8] sm:$0xff]
        %v339 = vld [vmem:[%s3 + $0x1c0] sm:$0xff]
        %v340 = vld [vmem:[%s3 + $0x1c8] sm:$0xff]
        %v341 = vld [vmem:[%s3 + $0x1d0] sm:$0xff]
        %v342 = vld [vmem:[%s3 + $0x1d8] sm:$0xff]
        %v343 = vld [vmem:[%s3 + $0x1e0] sm:$0xff]
        %v344 = vld [vmem:[%s3 + $0x1e8] sm:$0xff]
        %v345 = vld [vmem:[%s3 + $0x1f0] sm:$0xff]
        %v346 = vld [vmem:[%s3 + $0x1f8] sm:$0xff]
        %v347 = vld [vmem:[%s3 + $0x200] sm:$0xff]
        %v348 = vld [vmem:[%s3 + $0x208] sm:$0xff]
        %v349 = vld [vmem:[%s3 + $0x210] sm:$0xff]
        %v350 = vld [vmem:[%s3 + $0x218] sm:$0xff]
        %v351 = vld [vmem:[%s3 + $0x220] sm:$0xff]
        %v352 = vld [vmem:[%s3 + $0x228] sm:$0xff]
        %v353 = vld [vmem:[%s3 + $0x230] sm:$0xff]
        %v354 = vld [vmem:[%s3 + $0x238] sm:$0xff]
        %v355 = vld [vmem:[%s3 + $0x240] sm:$0xff]
        %v356 = vld [vmem:[%s3 + $0x248] sm:$0xff]
        %v357 = vld [vmem:[%s3 + $0x250] sm:$0xff]
        %v358 = vld [vmem:[%s3 + $0x258] sm:$0xff]
        %v359 = vld [vmem:[%s3 + $0x260] sm:$0xff]
        %v360 = vld [vmem:[%s3 + $0x268] sm:$0xff]
        %v361 = vld [vmem:[%s3 + $0x270] sm:$0xff]
        %v362 = vld [vmem:[%s3 + $0x278] sm:$0xff]
        %v363 = vld [vmem:[%s3 + $0x280] sm:$0xff]
        %v364 = vld [vmem:[%s3 + $0x288] sm:$0xff]
        %v365 = vld [vmem:[%s3 + $0x290] sm:$0xff]
        %v366 = vld [vmem:[%s3 + $0x298] sm:$0xff]
        %v367 = vld [vmem:[%s3 + $0x2a0] sm:$0xff]
        %v368 = vld [vmem:[%s3 + $0x2a8] sm:$0xff]
        %v369 = vld [vmem:[%s3 + $0x2b0] sm:$0xff]
        %v370 = vld [vmem:[%s3 + $0x2b8] sm:$0xff]
        %v371 = vld [vmem:[%s3 + $0x2c0] sm:$0xff]
        %v372 = vld [vmem:[%s3 + $0x2c8] sm:$0xff]
        %v373 = vld [vmem:[%s3 + $0x2d0] sm:$0xff]
        %v374 = vld [vmem:[%s3 + $0x2d8] sm:$0xff]
        %v375 = vld [vmem:[%s3 + $0x2e0] sm:$0xff]
        %v376 = vld [vmem:[%s3 + $0x2e8] sm:$0xff]
        %v377 = vld [vmem:[%s3 + $0x2f0] sm:$0xff]
        %v378 = vld [vmem:[%s3 + $0x2f8] sm:$0xff]
        %v379 = vld [vmem:[%s3 + $0x300] sm:$0xff]
        %s380 = sld [smem:[#allocation2]]
        %s381 = sld [smem:[#allocation2 + $0x1]]
        %s382 = sld [smem:[#allocation2 + $0x2]]
        %v383 = vld [vmem:[%s265] sm:$0xff]
        %v384 = vld [vmem:[%s265 + $0x8] sm:$0xff]
        %v385 = vld [vmem:[%s265 + $0x10] sm:$0xff]
        %v386 = vld [vmem:[%s265 + $0x18] sm:$0xff]
        %v387 = vld [vmem:[%s265 + $0x20] sm:$0xff]
        %v388 = vld [vmem:[%s265 + $0x28] sm:$0xff]
        %v389 = vld [vmem:[%s265 + $0x30] sm:$0xff]
        %v390 = vld [vmem:[%s265 + $0x38] sm:$0xff]
        %v391 = vld [vmem:[%s265 + $0x40] sm:$0xff]
        %v392 = vld [vmem:[%s265 + $0x48] sm:$0xff]
        %v393 = vld [vmem:[%s265 + $0x50] sm:$0xff]
        %v394 = vld [vmem:[%s265 + $0x58] sm:$0xff]
        %v395 = vld [vmem:[%s265 + $0x60] sm:$0xff]
        %v396 = vld [vmem:[%s265 + $0x68] sm:$0xff]
        %v397 = vld [vmem:[%s265 + $0x70] sm:$0xff]
        %v398 = vld [vmem:[%s265 + $0x78] sm:$0xff]
        %v399 = vld [vmem:[%s265 + $0x80] sm:$0xff]
        %v400 = vld [vmem:[%s265 + $0x88] sm:$0xff]
        %v401 = vld [vmem:[%s265 + $0x90] sm:$0xff]
        %v402 = vld [vmem:[%s265 + $0x98] sm:$0xff]
        %v403 = vld [vmem:[%s265 + $0xa0] sm:$0xff]
        %v404 = vld [vmem:[%s265 + $0xa8] sm:$0xff]
        %v405 = vld [vmem:[%s265 + $0xb0] sm:$0xff]
        %v406 = vld [vmem:[%s265 + $0xb8] sm:$0xff]
        %v407 = vld [vmem:[%s265 + $0xc0] sm:$0xff]
        %v408 = vld [vmem:[%s265 + $0xc8] sm:$0xff]
        %v409 = vld [vmem:[%s265 + $0xd0] sm:$0xff]
        %v410 = vld [vmem:[%s265 + $0xd8] sm:$0xff]
        %v411 = vld [vmem:[%s265 + $0xe0] sm:$0xff]
        %v412 = vld [vmem:[%s265 + $0xe8] sm:$0xff]
        %v413 = vld [vmem:[%s265 + $0xf0] sm:$0xff]
        %v414 = vld [vmem:[%s265 + $0xf8] sm:$0xff]
        %v415 = vld [vmem:[%s265 + $0x100] sm:$0xff]
        %v416 = vld [vmem:[%s265 + $0x108] sm:$0xff]
        %v417 = vld [vmem:[%s265 + $0x110] sm:$0xff]
        %v418 = vld [vmem:[%s265 + $0x118] sm:$0xff]
        %v419 = vld [vmem:[%s265 + $0x120] sm:$0xff]
        %v420 = vld [vmem:[%s265 + $0x128] sm:$0xff]
        %v421 = vld [vmem:[%s265 + $0x130] sm:$0xff]
        %v422 = vld [vmem:[%s265 + $0x138] sm:$0xff]
        %v423 = vld [vmem:[%s265 + $0x140] sm:$0xff]
        %v424 = vld [vmem:[%s265 + $0x148] sm:$0xff]
        %v425 = vld [vmem:[%s265 + $0x150] sm:$0xff]
        %v426 = vld [vmem:[%s265 + $0x158] sm:$0xff]
        %v427 = vld [vmem:[%s265 + $0x160] sm:$0xff]
        %v428 = vld [vmem:[%s265 + $0x168] sm:$0xff]
        %v429 = vld [vmem:[%s265 + $0x170] sm:$0xff]
        %v430 = vld [vmem:[%s265 + $0x178] sm:$0xff]
        %v431 = vld [vmem:[%s265 + $0x180] sm:$0xff]
        %v432 = vld [vmem:[%s265 + $0x188] sm:$0xff]
        %v433 = vld [vmem:[%s265 + $0x190] sm:$0xff]
        %v434 = vld [vmem:[%s265 + $0x198] sm:$0xff]
        %v435 = vld [vmem:[%s265 + $0x1a0] sm:$0xff]
        %v436 = vld [vmem:[%s265 + $0x1a8] sm:$0xff]
        %v437 = vld [vmem:[%s265 + $0x1b0] sm:$0xff]
        %v438 = vld [vmem:[%s265 + $0x1b8] sm:$0xff]
        %v439 = vld [vmem:[%s265 + $0x1c0] sm:$0xff]
        %v440 = vld [vmem:[%s265 + $0x1c8] sm:$0xff]
        %v441 = vld [vmem:[%s265 + $0x1d0] sm:$0xff]
        %v442 = vld [vmem:[%s265 + $0x1d8] sm:$0xff]
        %v443 = vld [vmem:[%s265 + $0x1e0] sm:$0xff]
        %v444 = vld [vmem:[%s265 + $0x1e8] sm:$0xff]
        %v445 = vld [vmem:[%s265 + $0x1f0] sm:$0xff]
        %v446 = vld [vmem:[%s265 + $0x1f8] sm:$0xff]
        %v447 = vld [vmem:[%s265 + $0x200] sm:$0xff]
        %v448 = vld [vmem:[%s265 + $0x208] sm:$0xff]
        %v449 = vld [vmem:[%s265 + $0x210] sm:$0xff]
        %v450 = vld [vmem:[%s265 + $0x218] sm:$0xff]
        %v451 = vld [vmem:[%s265 + $0x220] sm:$0xff]
        %v452 = vld [vmem:[%s265 + $0x228] sm:$0xff]
        %v453 = vld [vmem:[%s265 + $0x230] sm:$0xff]
        %v454 = vld [vmem:[%s265 + $0x238] sm:$0xff]
        %v455 = vld [vmem:[%s265 + $0x240] sm:$0xff]
        %v456 = vld [vmem:[%s265 + $0x248] sm:$0xff]
        %v457 = vld [vmem:[%s265 + $0x250] sm:$0xff]
        %v458 = vld [vmem:[%s265 + $0x258] sm:$0xff]
        %v459 = vld [vmem:[%s265 + $0x260] sm:$0xff]
        %v460 = vld [vmem:[%s265 + $0x268] sm:$0xff]
        %v461 = vld [vmem:[%s265 + $0x270] sm:$0xff]
        %v462 = vld [vmem:[%s265 + $0x278] sm:$0xff]
        %v463 = vld [vmem:[%s265 + $0x280] sm:$0xff]
        %v464 = vld [vmem:[%s265 + $0x288] sm:$0xff]
        %v465 = vld [vmem:[%s265 + $0x290] sm:$0xff]
        %v466 = vld [vmem:[%s265 + $0x298] sm:$0xff]
        %v467 = vld [vmem:[%s265 + $0x2a0] sm:$0xff]
        %v468 = vld [vmem:[%s265 + $0x2a8] sm:$0xff]
        %v469 = vld [vmem:[%s265 + $0x2b0] sm:$0xff]
        %v470 = vld [vmem:[%s265 + $0x2b8] sm:$0xff]
        %v471 = vld [vmem:[%s265 + $0x2c0] sm:$0xff]
        %v472 = vld [vmem:[%s265 + $0x2c8] sm:$0xff]
        %v473 = vld [vmem:[%s265 + $0x2d0] sm:$0xff]
        %v474 = vld [vmem:[%s265 + $0x2d8] sm:$0xff]
        %v475 = vld [vmem:[%s265 + $0x2e0] sm:$0xff]
        %v476 = vld [vmem:[%s265 + $0x2e8] sm:$0xff]
        %v477 = vld [vmem:[%s265 + $0x2f0] sm:$0xff]
        %v478 = vld [vmem:[%s265 + $0x2f8] sm:$0xff]
        %v479 = vld [vmem:[%s265 + $0x300] sm:$0xff]
        %v480 = vld [vmem:[%s265 + $0x308] sm:$0xff]
        %v481 = vld [vmem:[%s265 + $0x310] sm:$0xff]
        %v482 = vld [vmem:[%s265 + $0x318] sm:$0xff]
        %v483 = vld [vmem:[%s265 + $0x320] sm:$0xff]
        %v484 = vld [vmem:[%s265 + $0x328] sm:$0xff]
        %v485 = vld [vmem:[%s265 + $0x330] sm:$0xff]
        %v486 = vld [vmem:[%s265 + $0x338] sm:$0xff]
        %v487 = vld [vmem:[%s265 + $0x340] sm:$0xff]
        %v488 = vld [vmem:[%s265 + $0x348] sm:$0xff]
        %v489 = vld [vmem:[%s265 + $0x350] sm:$0xff]
        %v490 = vld [vmem:[%s265 + $0x358] sm:$0xff]
        %v491 = vld [vmem:[%s265 + $0x360] sm:$0xff]
        %v492 = vld [vmem:[%s265 + $0x368] sm:$0xff]
        %v493 = vld [vmem:[%s265 + $0x370] sm:$0xff]
        %v494 = vld [vmem:[%s265 + $0x378] sm:$0xff]
        %v495 = vld [vmem:[%s265 + $0x380] sm:$0xff]
        %v496 = vld [vmem:[%s265 + $0x388] sm:$0xff]
        %v497 = vld [vmem:[%s265 + $0x390] sm:$0xff]
        %v498 = vld [vmem:[%s265 + $0x398] sm:$0xff]
        %v499 = vld [vmem:[%s265 + $0x3a0] sm:$0xff]
        %v500 = vld [vmem:[%s265 + $0x3a8] sm:$0xff]
        %v501 = vld [vmem:[%s265 + $0x3b0] sm:$0xff]
        %v502 = vld [vmem:[%s265 + $0x3b8] sm:$0xff]
        %v503 = vld [vmem:[%s265 + $0x3c0] sm:$0xff]
        %v504 = vld [vmem:[%s265 + $0x3c8] sm:$0xff]
        %v505 = vld [vmem:[%s265 + $0x3d0] sm:$0xff]
        %v506 = vld [vmem:[%s265 + $0x3d8] sm:$0xff]
        %v507 = vld [vmem:[%s265 + $0x3e0] sm:$0xff]
        %v508 = vld [vmem:[%s265 + $0x3e8] sm:$0xff]
        %v509 = vld [vmem:[%s265 + $0x3f0] sm:$0xff]
        %v510 = vld [vmem:[%s265 + $0x3f8] sm:$0xff]
        %v511 = vld [vmem:[%s271] sm:$0xff]
        %v512 = vld [vmem:[%s271 + $0x8] sm:$0xff]
        %v513 = vld [vmem:[%s271 + $0x10] sm:$0xff]
        %v514 = vld [vmem:[%s271 + $0x18] sm:$0xff]
        %v515 = vld [vmem:[%s271 + $0x20] sm:$0xff]
        %v516 = vld [vmem:[%s271 + $0x28] sm:$0xff]
        %v517 = vld [vmem:[%s271 + $0x30] sm:$0xff]
        %v518 = vld [vmem:[%s271 + $0x38] sm:$0xff]
        %v519 = vld [vmem:[%s271 + $0x40] sm:$0xff]
        %v520 = vld [vmem:[%s271 + $0x48] sm:$0xff]
        %v521 = vld [vmem:[%s271 + $0x50] sm:$0xff]
        %v522 = vld [vmem:[%s271 + $0x58] sm:$0xff]
        %v523 = vld [vmem:[%s271 + $0x60] sm:$0xff]
        %v524 = vld [vmem:[%s271 + $0x68] sm:$0xff]
        %v525 = vld [vmem:[%s271 + $0x70] sm:$0xff]
        %v526 = vld [vmem:[%s271 + $0x78] sm:$0xff]
        %v527 = vld [vmem:[%s271 + $0x80] sm:$0xff]
        %v528 = vld [vmem:[%s271 + $0x88] sm:$0xff]
        %v529 = vld [vmem:[%s271 + $0x90] sm:$0xff]
        %v530 = vld [vmem:[%s271 + $0x98] sm:$0xff]
        %v531 = vld [vmem:[%s271 + $0xa0] sm:$0xff]
        %v532 = vld [vmem:[%s271 + $0xa8] sm:$0xff]
        %v533 = vld [vmem:[%s271 + $0xb0] sm:$0xff]
        %v534 = vld [vmem:[%s271 + $0xb8] sm:$0xff]
        %v535 = vld [vmem:[%s271 + $0xc0] sm:$0xff]
        %v536 = vld [vmem:[%s271 + $0xc8] sm:$0xff]
        %v537 = vld [vmem:[%s271 + $0xd0] sm:$0xff]
        %v538 = vld [vmem:[%s271 + $0xd8] sm:$0xff]
        %v539 = vld [vmem:[%s271 + $0xe0] sm:$0xff]
        %v540 = vld [vmem:[%s271 + $0xe8] sm:$0xff]
        %v541 = vld [vmem:[%s271 + $0xf0] sm:$0xff]
        %v542 = vld [vmem:[%s271 + $0xf8] sm:$0xff]
        %v543 = vld [vmem:[%s271 + $0x100] sm:$0xff]
        %v544 = vld [vmem:[%s271 + $0x108] sm:$0xff]
        %v545 = vld [vmem:[%s271 + $0x110] sm:$0xff]
        %v546 = vld [vmem:[%s271 + $0x118] sm:$0xff]
        %v547 = vld [vmem:[%s271 + $0x120] sm:$0xff]
        %v548 = vld [vmem:[%s271 + $0x128] sm:$0xff]
        %v549 = vld [vmem:[%s271 + $0x130] sm:$0xff]
        %v550 = vld [vmem:[%s271 + $0x138] sm:$0xff]
        %v551 = vld [vmem:[%s271 + $0x140] sm:$0xff]
        %v552 = vld [vmem:[%s271 + $0x148] sm:$0xff]
        %v553 = vld [vmem:[%s271 + $0x150] sm:$0xff]
        %v554 = vld [vmem:[%s271 + $0x158] sm:$0xff]
        %v555 = vld [vmem:[%s271 + $0x160] sm:$0xff]
        %v556 = vld [vmem:[%s271 + $0x168] sm:$0xff]
        %v557 = vld [vmem:[%s271 + $0x170] sm:$0xff]
        %v558 = vld [vmem:[%s271 + $0x178] sm:$0xff]
        %v559 = vld [vmem:[%s271 + $0x180] sm:$0xff]
        %v560 = vld [vmem:[%s271 + $0x188] sm:$0xff]
        %v561 = vld [vmem:[%s271 + $0x190] sm:$0xff]
        %v562 = vld [vmem:[%s271 + $0x198] sm:$0xff]
        %v563 = vld [vmem:[%s271 + $0x1a0] sm:$0xff]
        %v564 = vld [vmem:[%s271 + $0x1a8] sm:$0xff]
        %v565 = vld [vmem:[%s271 + $0x1b0] sm:$0xff]
        %v566 = vld [vmem:[%s271 + $0x1b8] sm:$0xff]
        %v567 = vld [vmem:[%s271 + $0x1c0] sm:$0xff]
        %v568 = vld [vmem:[%s271 + $0x1c8] sm:$0xff]
        %v569 = vld [vmem:[%s271 + $0x1d0] sm:$0xff]
        %v570 = vld [vmem:[%s271 + $0x1d8] sm:$0xff]
        %v571 = vld [vmem:[%s271 + $0x1e0] sm:$0xff]
        %v572 = vld [vmem:[%s271 + $0x1e8] sm:$0xff]
        %v573 = vld [vmem:[%s271 + $0x1f0] sm:$0xff]
        %v574 = vld [vmem:[%s271 + $0x1f8] sm:$0xff]
        %v575 = vld [vmem:[%s271 + $0x200] sm:$0xff]
        %v576 = vld [vmem:[%s271 + $0x208] sm:$0xff]
        %v577 = vld [vmem:[%s271 + $0x210] sm:$0xff]
        %v578 = vld [vmem:[%s271 + $0x218] sm:$0xff]
        %v579 = vld [vmem:[%s271 + $0x220] sm:$0xff]
        %v580 = vld [vmem:[%s271 + $0x228] sm:$0xff]
        %v581 = vld [vmem:[%s271 + $0x230] sm:$0xff]
        %v582 = vld [vmem:[%s271 + $0x238] sm:$0xff]
        %v583 = vld [vmem:[%s271 + $0x240] sm:$0xff]
        %v584 = vld [vmem:[%s271 + $0x248] sm:$0xff]
        %v585 = vld [vmem:[%s271 + $0x250] sm:$0xff]
        %v586 = vld [vmem:[%s271 + $0x258] sm:$0xff]
        %v587 = vld [vmem:[%s271 + $0x260] sm:$0xff]
        %v588 = vld [vmem:[%s271 + $0x268] sm:$0xff]
        %v589 = vld [vmem:[%s271 + $0x270] sm:$0xff]
        %v590 = vld [vmem:[%s271 + $0x278] sm:$0xff]
        %v591 = vld [vmem:[%s271 + $0x280] sm:$0xff]
        %v592 = vld [vmem:[%s271 + $0x288] sm:$0xff]
        %v593 = vld [vmem:[%s271 + $0x290] sm:$0xff]
        %v594 = vld [vmem:[%s271 + $0x298] sm:$0xff]
        %v595 = vld [vmem:[%s271 + $0x2a0] sm:$0xff]
        %v596 = vld [vmem:[%s271 + $0x2a8] sm:$0xff]
        %v597 = vld [vmem:[%s271 + $0x2b0] sm:$0xff]
        %v598 = vld [vmem:[%s271 + $0x2b8] sm:$0xff]
        %v599 = vld [vmem:[%s271 + $0x2c0] sm:$0xff]
        %v600 = vld [vmem:[%s271 + $0x2c8] sm:$0xff]
        %v601 = vld [vmem:[%s271 + $0x2d0] sm:$0xff]
        %v602 = vld [vmem:[%s271 + $0x2d8] sm:$0xff]
        %v603 = vld [vmem:[%s271 + $0x2e0] sm:$0xff]
        %v604 = vld [vmem:[%s271 + $0x2e8] sm:$0xff]
        %v605 = vld [vmem:[%s271 + $0x2f0] sm:$0xff]
        %v606 = vld [vmem:[%s271 + $0x2f8] sm:$0xff]
        %v607 = vld [vmem:[%s271 + $0x300] sm:$0xff]
        %v608 = vld [vmem:[%s271 + $0x308] sm:$0xff]
        %v609 = vld [vmem:[%s271 + $0x310] sm:$0xff]
        %v610 = vld [vmem:[%s271 + $0x318] sm:$0xff]
        %v611 = vld [vmem:[%s271 + $0x320] sm:$0xff]
        %v612 = vld [vmem:[%s271 + $0x328] sm:$0xff]
        %v613 = vld [vmem:[%s271 + $0x330] sm:$0xff]
        %v614 = vld [vmem:[%s271 + $0x338] sm:$0xff]
        %v615 = vld [vmem:[%s271 + $0x340] sm:$0xff]
        %v616 = vld [vmem:[%s271 + $0x348] sm:$0xff]
        %v617 = vld [vmem:[%s271 + $0x350] sm:$0xff]
        %v618 = vld [vmem:[%s271 + $0x358] sm:$0xff]
        %v619 = vld [vmem:[%s271 + $0x360] sm:$0xff]
        %v620 = vld [vmem:[%s271 + $0x368] sm:$0xff]
        %v621 = vld [vmem:[%s271 + $0x370] sm:$0xff]
        %v622 = vld [vmem:[%s271 + $0x378] sm:$0xff]
        %v623 = vld [vmem:[%s271 + $0x380] sm:$0xff]
        %v624 = vld [vmem:[%s271 + $0x388] sm:$0xff]
        %v625 = vld [vmem:[%s271 + $0x390] sm:$0xff]
        %v626 = vld [vmem:[%s271 + $0x398] sm:$0xff]
        %v627 = vld [vmem:[%s271 + $0x3a0] sm:$0xff]
        %v628 = vld [vmem:[%s271 + $0x3a8] sm:$0xff]
        %v629 = vld [vmem:[%s271 + $0x3b0] sm:$0xff]
        %v630 = vld [vmem:[%s271 + $0x3b8] sm:$0xff]
        %v631 = vld [vmem:[%s271 + $0x3c0] sm:$0xff]
        %v632 = vld [vmem:[%s271 + $0x3c8] sm:$0xff]
        %v633 = vld [vmem:[%s271 + $0x3d0] sm:$0xff]
        %v634 = vld [vmem:[%s271 + $0x3d8] sm:$0xff]
        %v635 = vld [vmem:[%s271 + $0x3e0] sm:$0xff]
        %v636 = vld [vmem:[%s271 + $0x3e8] sm:$0xff]
        %v637 = vld [vmem:[%s271 + $0x3f0] sm:$0xff]
        %v638 = vld [vmem:[%s271 + $0x3f8] sm:$0xff]
        %v639 = vld [vmem:[%s277] sm:$0xff]
        %v640 = vld [vmem:[%s277 + $0x8] sm:$0xff]
        %v641 = vld [vmem:[%s277 + $0x10] sm:$0xff]
        %v642 = vld [vmem:[%s277 + $0x18] sm:$0xff]
        %v643 = vld [vmem:[%s277 + $0x20] sm:$0xff]
        %v644 = vld [vmem:[%s277 + $0x28] sm:$0xff]
        %v645 = vld [vmem:[%s277 + $0x30] sm:$0xff]
        %v646 = vld [vmem:[%s277 + $0x38] sm:$0xff]
        %v647 = vsub.f32 0.0, %v379
        %v648 = vperm.slane %v379, 4
        %v649 = vsub.f32 %v383, %v648
        %v650 = vsub.f32 %v384, %v648
        %v651 = vsub.f32 %v385, %v648
        %v652 = vsub.f32 %v386, %v648
        %v653 = vsub.f32 %v387, %v648
        %v654 = vsub.f32 %v388, %v648
        %v655 = vsub.f32 %v389, %v648
        %v656 = vsub.f32 %v390, %v648
        %v657 = vsub.f32 %v391, %v648
        %v658 = vsub.f32 %v392, %v648
        %v659 = vsub.f32 %v393, %v648
        %v660 = vsub.f32 %v394, %v648
        %v661 = vsub.f32 %v395, %v648
        %v662 = vsub.f32 %v396, %v648
        %v663 = vsub.f32 %v397, %v648
        %v664 = vsub.f32 %v398, %v648
        %v665 = vsub.f32 %v399, %v648
        %v666 = vsub.f32 %v400, %v648
        %v667 = vsub.f32 %v401, %v648
        %v668 = vsub.f32 %v402, %v648
        %v669 = vsub.f32 %v403, %v648
        %v670 = vsub.f32 %v404, %v648
        %v671 = vsub.f32 %v405, %v648
        %v672 = vsub.f32 %v406, %v648
        %v673 = vsub.f32 %v407, %v648
        %v674 = vsub.f32 %v408, %v648
        %v675 = vsub.f32 %v409, %v648
        %v676 = vsub.f32 %v410, %v648
        %v677 = vsub.f32 %v411, %v648
        %v678 = vsub.f32 %v412, %v648
        %v679 = vsub.f32 %v413, %v648
        %v680 = vsub.f32 %v414, %v648
        %v681 = vsub.f32 %v415, %v648
        %v682 = vsub.f32 %v416, %v648
        %v683 = vsub.f32 %v417, %v648
        %v684 = vsub.f32 %v418, %v648
        %v685 = vsub.f32 %v419, %v648
        %v686 = vsub.f32 %v420, %v648
        %v687 = vsub.f32 %v421, %v648
        %v688 = vsub.f32 %v422, %v648
        %v689 = vsub.f32 %v423, %v648
        %v690 = vsub.f32 %v424, %v648
        %v691 = vsub.f32 %v425, %v648
        %v692 = vsub.f32 %v426, %v648
        %v693 = vsub.f32 %v427, %v648
        %v694 = vsub.f32 %v428, %v648
        %v695 = vsub.f32 %v429, %v648
        %v696 = vsub.f32 %v430, %v648
        %v697 = vsub.f32 %v431, %v648
        %v698 = vsub.f32 %v432, %v648
        %v699 = vsub.f32 %v433, %v648
        %v700 = vsub.f32 %v434, %v648
        %v701 = vsub.f32 %v435, %v648
        %v702 = vsub.f32 %v436, %v648
        %v703 = vsub.f32 %v437, %v648
        %v704 = vsub.f32 %v438, %v648
        %v705 = vsub.f32 %v439, %v648
        %v706 = vsub.f32 %v440, %v648
        %v707 = vsub.f32 %v441, %v648
        %v708 = vsub.f32 %v442, %v648
        %v709 = vsub.f32 %v443, %v648
        %v710 = vsub.f32 %v444, %v648
        %v711 = vsub.f32 %v445, %v648
        %v712 = vsub.f32 %v446, %v648
        %v713 = vsub.f32 %v447, %v648
        %v714 = vsub.f32 %v448, %v648
        %v715 = vsub.f32 %v449, %v648
        %v716 = vsub.f32 %v450, %v648
        %v717 = vsub.f32 %v451, %v648
        %v718 = vsub.f32 %v452, %v648
        %v719 = vsub.f32 %v453, %v648
        %v720 = vsub.f32 %v454, %v648
        %v721 = vsub.f32 %v455, %v648
        %v722 = vsub.f32 %v456, %v648
        %v723 = vsub.f32 %v457, %v648
        %v724 = vsub.f32 %v458, %v648
        %v725 = vsub.f32 %v459, %v648
        %v726 = vsub.f32 %v460, %v648
        %v727 = vsub.f32 %v461, %v648
        %v728 = vsub.f32 %v462, %v648
        %v729 = vsub.f32 %v463, %v648
        %v730 = vsub.f32 %v464, %v648
        %v731 = vsub.f32 %v465, %v648
        %v732 = vsub.f32 %v466, %v648
        %v733 = vsub.f32 %v467, %v648
        %v734 = vsub.f32 %v468, %v648
        %v735 = vsub.f32 %v469, %v648
        %v736 = vsub.f32 %v470, %v648
        %v737 = vsub.f32 %v471, %v648
        %v738 = vsub.f32 %v472, %v648
        %v739 = vsub.f32 %v473, %v648
        %v740 = vsub.f32 %v474, %v648
        %v741 = vsub.f32 %v475, %v648
        %v742 = vsub.f32 %v476, %v648
        %v743 = vsub.f32 %v477, %v648
        %v744 = vsub.f32 %v478, %v648
        %v745 = vsub.f32 %v479, %v648
        %v746 = vsub.f32 %v480, %v648
        %v747 = vsub.f32 %v481, %v648
        %v748 = vsub.f32 %v482, %v648
        %v749 = vsub.f32 %v483, %v648
        %v750 = vsub.f32 %v484, %v648
        %v751 = vsub.f32 %v485, %v648
        %v752 = vsub.f32 %v486, %v648
        %v753 = vsub.f32 %v487, %v648
        %v754 = vsub.f32 %v488, %v648
        %v755 = vsub.f32 %v489, %v648
        %v756 = vsub.f32 %v490, %v648
        %v757 = vsub.f32 %v491, %v648
        %v758 = vsub.f32 %v492, %v648
        %v759 = vsub.f32 %v493, %v648
        %v760 = vsub.f32 %v494, %v648
        %v761 = vsub.f32 %v495, %v648
        %v762 = vsub.f32 %v496, %v648
        %v763 = vsub.f32 %v497, %v648
        %v764 = vsub.f32 %v498, %v648
        %v765 = vsub.f32 %v499, %v648
        %v766 = vsub.f32 %v500, %v648
        %v767 = vsub.f32 %v501, %v648
        %v768 = vsub.f32 %v502, %v648
        %v769 = vsub.f32 %v503, %v648
        %v770 = vsub.f32 %v504, %v648
        %v771 = vsub.f32 %v505, %v648
        %v772 = vsub.f32 %v506, %v648
        %v773 = vsub.f32 %v507, %v648
        %v774 = vsub.f32 %v508, %v648
        %v775 = vsub.f32 %v509, %v648
        %v776 = vsub.f32 %v510, %v648
        %v777 = vmul.f32 %v649, %v649
        %v778 = vmul.f32 %v650, %v650
        %v779 = vmul.f32 %v651, %v651
        %v780 = vmul.f32 %v652, %v652
        %v781 = vmul.f32 %v653, %v653
        %v782 = vmul.f32 %v654, %v654
        %v783 = vmul.f32 %v655, %v655
        %v784 = vmul.f32 %v656, %v656
        %v785 = vmul.f32 %v657, %v657
        %v786 = vmul.f32 %v658, %v658
        %v787 = vmul.f32 %v659, %v659
        %v788 = vmul.f32 %v660, %v660
        %v789 = vmul.f32 %v661, %v661
        %v790 = vmul.f32 %v662, %v662
        %v791 = vmul.f32 %v663, %v663
        %v792 = vmul.f32 %v664, %v664
        %v793 = vmul.f32 %v665, %v665
        %v794 = vmul.f32 %v666, %v666
        %v795 = vmul.f32 %v667, %v667
        %v796 = vmul.f32 %v668, %v668
        %v797 = vmul.f32 %v669, %v669
        %v798 = vmul.f32 %v670, %v670
        %v799 = vmul.f32 %v671, %v671
        %v800 = vmul.f32 %v672, %v672
        %v801 = vmul.f32 %v673, %v673
        %v802 = vmul.f32 %v674, %v674
        %v803 = vmul.f32 %v675, %v675
        %v804 = vmul.f32 %v676, %v676
        %v805 = vmul.f32 %v677, %v677
        %v806 = vmul.f32 %v678, %v678
        %v807 = vmul.f32 %v679, %v679
        %v808 = vmul.f32 %v680, %v680
        %v809 = vmul.f32 %v681, %v681
        %v810 = vmul.f32 %v682, %v682
        %v811 = vmul.f32 %v683, %v683
        %v812 = vmul.f32 %v684, %v684
        %v813 = vmul.f32 %v685, %v685
        %v814 = vmul.f32 %v686, %v686
        %v815 = vmul.f32 %v687, %v687
        %v816 = vmul.f32 %v688, %v688
        %v817 = vmul.f32 %v689, %v689
        %v818 = vmul.f32 %v690, %v690
        %v819 = vmul.f32 %v691, %v691
        %v820 = vmul.f32 %v692, %v692
        %v821 = vmul.f32 %v693, %v693
        %v822 = vmul.f32 %v694, %v694
        %v823 = vmul.f32 %v695, %v695
        %v824 = vmul.f32 %v696, %v696
        %v825 = vmul.f32 %v697, %v697
        %v826 = vmul.f32 %v698, %v698
        %v827 = vmul.f32 %v699, %v699
        %v828 = vmul.f32 %v700, %v700
        %v829 = vmul.f32 %v701, %v701
        %v830 = vmul.f32 %v702, %v702
        %v831 = vmul.f32 %v703, %v703
        %v832 = vmul.f32 %v704, %v704
        %v833 = vmul.f32 %v705, %v705
        %v834 = vmul.f32 %v706, %v706
        %v835 = vmul.f32 %v707, %v707
        %v836 = vmul.f32 %v708, %v708
        %v837 = vmul.f32 %v709, %v709
        %v838 = vmul.f32 %v710, %v710
        %v839 = vmul.f32 %v711, %v711
        %v840 = vmul.f32 %v712, %v712
        %v841 = vmul.f32 %v713, %v713
        %v842 = vmul.f32 %v714, %v714
        %v843 = vmul.f32 %v715, %v715
        %v844 = vmul.f32 %v716, %v716
        %v845 = vmul.f32 %v717, %v717
        %v846 = vmul.f32 %v718, %v718
        %v847 = vmul.f32 %v719, %v719
        %v848 = vmul.f32 %v720, %v720
        %v849 = vmul.f32 %v721, %v721
        %v850 = vmul.f32 %v722, %v722
        %v851 = vmul.f32 %v723, %v723
        %v852 = vmul.f32 %v724, %v724
        %v853 = vmul.f32 %v725, %v725
        %v854 = vmul.f32 %v726, %v726
        %v855 = vmul.f32 %v727, %v727
        %v856 = vmul.f32 %v728, %v728
        %v857 = vmul.f32 %v729, %v729
        %v858 = vmul.f32 %v730, %v730
        %v859 = vmul.f32 %v731, %v731
        %v860 = vmul.f32 %v732, %v732
        %v861 = vmul.f32 %v733, %v733
        %v862 = vmul.f32 %v734, %v734
        %v863 = vmul.f32 %v735, %v735
        %v864 = vmul.f32 %v736, %v736
        %v865 = vmul.f32 %v737, %v737
        %v866 = vmul.f32 %v738, %v738
        %v867 = vmul.f32 %v739, %v739
        %v868 = vmul.f32 %v740, %v740
        %v869 = vmul.f32 %v741, %v741
        %v870 = vmul.f32 %v742, %v742
        %v871 = vmul.f32 %v743, %v743
        %v872 = vmul.f32 %v744, %v744
        %v873 = vmul.f32 %v745, %v745
        %v874 = vmul.f32 %v746, %v746
        %v875 = vmul.f32 %v747, %v747
        %v876 = vmul.f32 %v748, %v748
        %v877 = vmul.f32 %v749, %v749
        %v878 = vmul.f32 %v750, %v750
        %v879 = vmul.f32 %v751, %v751
        %v880 = vmul.f32 %v752, %v752
        %v881 = vmul.f32 %v753, %v753
        %v882 = vmul.f32 %v754, %v754
        %v883 = vmul.f32 %v755, %v755
        %v884 = vmul.f32 %v756, %v756
        %v885 = vmul.f32 %v757, %v757
        %v886 = vmul.f32 %v758, %v758
        %v887 = vmul.f32 %v759, %v759
        %v888 = vmul.f32 %v760, %v760
        %v889 = vmul.f32 %v761, %v761
        %v890 = vmul.f32 %v762, %v762
        %v891 = vmul.f32 %v763, %v763
        %v892 = vmul.f32 %v764, %v764
        %v893 = vmul.f32 %v765, %v765
        %v894 = vmul.f32 %v766, %v766
        %v895 = vmul.f32 %v767, %v767
        %v896 = vmul.f32 %v768, %v768
        %v897 = vmul.f32 %v769, %v769
        %v898 = vmul.f32 %v770, %v770
        %v899 = vmul.f32 %v771, %v771
        %v900 = vmul.f32 %v772, %v772
        %v901 = vmul.f32 %v773, %v773
        %v902 = vmul.f32 %v774, %v774
        %v903 = vmul.f32 %v775, %v775
        %v904 = vmul.f32 %v776, %v776
        %v905 = vperm.slane %v647, 5
        %v906 = vmul.f32 %v905, %v777
        %v907 = vmul.f32 %v905, %v778
        %v908 = vmul.f32 %v905, %v779
        %v909 = vmul.f32 %v905, %v780
        %v910 = vmul.f32 %v905, %v781
        %v911 = vmul.f32 %v905, %v782
        %v912 = vmul.f32 %v905, %v783
        %v913 = vmul.f32 %v905, %v784
        %v914 = vmul.f32 %v905, %v785
        %v915 = vmul.f32 %v905, %v786
        %v916 = vmul.f32 %v905, %v787
        %v917 = vmul.f32 %v905, %v788
        %v918 = vmul.f32 %v905, %v789
        %v919 = vmul.f32 %v905, %v790
        %v920 = vmul.f32 %v905, %v791
        %v921 = vmul.f32 %v905, %v792
        %v922 = vmul.f32 %v905, %v793
        %v923 = vmul.f32 %v905, %v794
        %v924 = vmul.f32 %v905, %v795
        %v925 = vmul.f32 %v905, %v796
        %v926 = vmul.f32 %v905, %v797
        %v927 = vmul.f32 %v905, %v798
        %v928 = vmul.f32 %v905, %v799
        %v929 = vmul.f32 %v905, %v800
        %v930 = vmul.f32 %v905, %v801
        %v931 = vmul.f32 %v905, %v802
        %v932 = vmul.f32 %v905, %v803
        %v933 = vmul.f32 %v905, %v804
        %v934 = vmul.f32 %v905, %v805
        %v935 = vmul.f32 %v905, %v806
        %v936 = vmul.f32 %v905, %v807
        %v937 = vmul.f32 %v905, %v808
        %v938 = vmul.f32 %v905, %v809
        %v939 = vmul.f32 %v905, %v810
        %v940 = vmul.f32 %v905, %v811
        %v941 = vmul.f32 %v905, %v812
        %v942 = vmul.f32 %v905, %v813
        %v943 = vmul.f32 %v905, %v814
        %v944 = vmul.f32 %v905, %v815
        %v945 = vmul.f32 %v905, %v816
        %v946 = vmul.f32 %v905, %v817
        %v947 = vmul.f32 %v905, %v818
        %v948 = vmul.f32 %v905, %v819
        %v949 = vmul.f32 %v905, %v820
        %v950 = vmul.f32 %v905, %v821
        %v951 = vmul.f32 %v905, %v822
        %v952 = vmul.f32 %v905, %v823
        %v953 = vmul.f32 %v905, %v824
        %v954 = vmul.f32 %v905, %v825
        %v955 = vmul.f32 %v905, %v826
        %v956 = vmul.f32 %v905, %v827
        %v957 = vmul.f32 %v905, %v828
        %v958 = vmul.f32 %v905, %v829
        %v959 = vmul.f32 %v905, %v830
        %v960 = vmul.f32 %v905, %v831
        %v961 = vmul.f32 %v905, %v832
        %v962 = vmul.f32 %v905, %v833
        %v963 = vmul.f32 %v905, %v834
        %v964 = vmul.f32 %v905, %v835
        %v965 = vmul.f32 %v905, %v836
        %v966 = vmul.f32 %v905, %v837
        %v967 = vmul.f32 %v905, %v838
        %v968 = vmul.f32 %v905, %v839
        %v969 = vmul.f32 %v905, %v840
        %v970 = vmul.f32 %v905, %v841
        %v971 = vmul.f32 %v905, %v842
        %v972 = vmul.f32 %v905, %v843
        %v973 = vmul.f32 %v905, %v844
        %v974 = vmul.f32 %v905, %v845
        %v975 = vmul.f32 %v905, %v846
        %v976 = vmul.f32 %v905, %v847
        %v977 = vmul.f32 %v905, %v848
        %v978 = vmul.f32 %v905, %v849
        %v979 = vmul.f32 %v905, %v850
        %v980 = vmul.f32 %v905, %v851
        %v981 = vmul.f32 %v905, %v852
        %v982 = vmul.f32 %v905, %v853
        %v983 = vmul.f32 %v905, %v854
        %v984 = vmul.f32 %v905, %v855
        %v985 = vmul.f32 %v905, %v856
        %v986 = vmul.f32 %v905, %v857
        %v987 = vmul.f32 %v905, %v858
        %v988 = vmul.f32 %v905, %v859
        %v989 = vmul.f32 %v905, %v860
        %v990 = vmul.f32 %v905, %v861
        %v991 = vmul.f32 %v905, %v862
        %v992 = vmul.f32 %v905, %v863
        %v993 = vmul.f32 %v905, %v864
        %v994 = vmul.f32 %v905, %v865
        %v995 = vmul.f32 %v905, %v866
        %v996 = vmul.f32 %v905, %v867
        %v997 = vmul.f32 %v905, %v868
        %v998 = vmul.f32 %v905, %v869
        %v999 = vmul.f32 %v905, %v870
        %v1000 = vmul.f32 %v905, %v871
        %v1001 = vmul.f32 %v905, %v872
        %v1002 = vmul.f32 %v905, %v873
        %v1003 = vmul.f32 %v905, %v874
        %v1004 = vmul.f32 %v905, %v875
        %v1005 = vmul.f32 %v905, %v876
        %v1006 = vmul.f32 %v905, %v877
        %v1007 = vmul.f32 %v905, %v878
        %v1008 = vmul.f32 %v905, %v879
        %v1009 = vmul.f32 %v905, %v880
        %v1010 = vmul.f32 %v905, %v881
        %v1011 = vmul.f32 %v905, %v882
        %v1012 = vmul.f32 %v905, %v883
        %v1013 = vmul.f32 %v905, %v884
        %v1014 = vmul.f32 %v905, %v885
        %v1015 = vmul.f32 %v905, %v886
        %v1016 = vmul.f32 %v905, %v887
        %v1017 = vmul.f32 %v905, %v888
        %v1018 = vmul.f32 %v905, %v889
        %v1019 = vmul.f32 %v905, %v890
        %v1020 = vmul.f32 %v905, %v891
        %v1021 = vmul.f32 %v905, %v892
        %v1022 = vmul.f32 %v905, %v893
        %v1023 = vmul.f32 %v905, %v894
        %v1024 = vmul.f32 %v905, %v895
        %v1025 = vmul.f32 %v905, %v896
        %v1026 = vmul.f32 %v905, %v897
        %v1027 = vmul.f32 %v905, %v898
        %v1028 = vmul.f32 %v905, %v899
        %v1029 = vmul.f32 %v905, %v900
        %v1030 = vmul.f32 %v905, %v901
        %v1031 = vmul.f32 %v905, %v902
        %v1032 = vmul.f32 %v905, %v903
        %v1033 = vmul.f32 %v905, %v904
        %v1034 = vmul.f32 %v906, 1.442695
        %v1035 = vpow.pop %v1034
        %v1036 = vmul.f32 %v907, 1.442695
        %v1037 = vpow.pop %v1036
        %v1038 = vmul.f32 %v908, 1.442695
        %v1039 = vpow.pop %v1038
        %v1040 = vmul.f32 %v909, 1.442695
        %v1041 = vpow.pop %v1040
        %v1042 = vmul.f32 %v910, 1.442695
        %v1043 = vpow.pop %v1042
        %v1044 = vmul.f32 %v911, 1.442695
        %v1045 = vpow.pop %v1044
        %v1046 = vmul.f32 %v912, 1.442695
        %v1047 = vpow.pop %v1046
        %v1048 = vmul.f32 %v913, 1.442695
        %v1049 = vpow.pop %v1048
        %v1050 = vmul.f32 %v914, 1.442695
        %v1051 = vpow.pop %v1050
        %v1052 = vmul.f32 %v915, 1.442695
        %v1053 = vpow.pop %v1052
        %v1054 = vmul.f32 %v916, 1.442695
        %v1055 = vpow.pop %v1054
        %v1056 = vmul.f32 %v917, 1.442695
        %v1057 = vpow.pop %v1056
        %v1058 = vmul.f32 %v918, 1.442695
        %v1059 = vpow.pop %v1058
        %v1060 = vmul.f32 %v919, 1.442695
        %v1061 = vpow.pop %v1060
        %v1062 = vmul.f32 %v920, 1.442695
        %v1063 = vpow.pop %v1062
        %v1064 = vmul.f32 %v921, 1.442695
        %v1065 = vpow.pop %v1064
        %v1066 = vmul.f32 %v922, 1.442695
        %v1067 = vpow.pop %v1066
        %v1068 = vmul.f32 %v923, 1.442695
        %v1069 = vpow.pop %v1068
        %v1070 = vmul.f32 %v924, 1.442695
        %v1071 = vpow.pop %v1070
        %v1072 = vmul.f32 %v925, 1.442695
        %v1073 = vpow.pop %v1072
        %v1074 = vmul.f32 %v926, 1.442695
        %v1075 = vpow.pop %v1074
        %v1076 = vmul.f32 %v927, 1.442695
        %v1077 = vpow.pop %v1076
        %v1078 = vmul.f32 %v928, 1.442695
        %v1079 = vpow.pop %v1078
        %v1080 = vmul.f32 %v929, 1.442695
        %v1081 = vpow.pop %v1080
        %v1082 = vmul.f32 %v930, 1.442695
        %v1083 = vpow.pop %v1082
        %v1084 = vmul.f32 %v931, 1.442695
        %v1085 = vpow.pop %v1084
        %v1086 = vmul.f32 %v932, 1.442695
        %v1087 = vpow.pop %v1086
        %v1088 = vmul.f32 %v933, 1.442695
        %v1089 = vpow.pop %v1088
        %v1090 = vmul.f32 %v934, 1.442695
        %v1091 = vpow.pop %v1090
        %v1092 = vmul.f32 %v935, 1.442695
        %v1093 = vpow.pop %v1092
        %v1094 = vmul.f32 %v936, 1.442695
        %v1095 = vpow.pop %v1094
        %v1096 = vmul.f32 %v937, 1.442695
        %v1097 = vpow.pop %v1096
        %v1098 = vmul.f32 %v938, 1.442695
        %v1099 = vpow.pop %v1098
        %v1100 = vmul.f32 %v939, 1.442695
        %v1101 = vpow.pop %v1100
        %v1102 = vmul.f32 %v940, 1.442695
        %v1103 = vpow.pop %v1102
        %v1104 = vmul.f32 %v941, 1.442695
        %v1105 = vpow.pop %v1104
        %v1106 = vmul.f32 %v942, 1.442695
        %v1107 = vpow.pop %v1106
        %v1108 = vmul.f32 %v943, 1.442695
        %v1109 = vpow.pop %v1108
        %v1110 = vmul.f32 %v944, 1.442695
        %v1111 = vpow.pop %v1110
        %v1112 = vmul.f32 %v945, 1.442695
        %v1113 = vpow.pop %v1112
        %v1114 = vmul.f32 %v946, 1.442695
        %v1115 = vpow.pop %v1114
        %v1116 = vmul.f32 %v947, 1.442695
        %v1117 = vpow.pop %v1116
        %v1118 = vmul.f32 %v948, 1.442695
        %v1119 = vpow.pop %v1118
        %v1120 = vmul.f32 %v949, 1.442695
        %v1121 = vpow.pop %v1120
        %v1122 = vmul.f32 %v950, 1.442695
        %v1123 = vpow.pop %v1122
        %v1124 = vmul.f32 %v951, 1.442695
        %v1125 = vpow.pop %v1124
        %v1126 = vmul.f32 %v952, 1.442695
        %v1127 = vpow.pop %v1126
        %v1128 = vmul.f32 %v953, 1.442695
        %v1129 = vpow.pop %v1128
        %v1130 = vmul.f32 %v954, 1.442695
        %v1131 = vpow.pop %v1130
        %v1132 = vmul.f32 %v955, 1.442695
        %v1133 = vpow.pop %v1132
        %v1134 = vmul.f32 %v956, 1.442695
        %v1135 = vpow.pop %v1134
        %v1136 = vmul.f32 %v957, 1.442695
        %v1137 = vpow.pop %v1136
        %v1138 = vmul.f32 %v958, 1.442695
        %v1139 = vpow.pop %v1138
        %v1140 = vmul.f32 %v959, 1.442695
        %v1141 = vpow.pop %v1140
        %v1142 = vmul.f32 %v960, 1.442695
        %v1143 = vpow.pop %v1142
        %v1144 = vmul.f32 %v961, 1.442695
        %v1145 = vpow.pop %v1144
        %v1146 = vmul.f32 %v962, 1.442695
        %v1147 = vpow.pop %v1146
        %v1148 = vmul.f32 %v963, 1.442695
        %v1149 = vpow.pop %v1148
        %v1150 = vmul.f32 %v964, 1.442695
        %v1151 = vpow.pop %v1150
        %v1152 = vmul.f32 %v965, 1.442695
        %v1153 = vpow.pop %v1152
        %v1154 = vmul.f32 %v966, 1.442695
        %v1155 = vpow.pop %v1154
        %v1156 = vmul.f32 %v967, 1.442695
        %v1157 = vpow.pop %v1156
        %v1158 = vmul.f32 %v968, 1.442695
        %v1159 = vpow.pop %v1158
        %v1160 = vmul.f32 %v969, 1.442695
        %v1161 = vpow.pop %v1160
        %v1162 = vmul.f32 %v970, 1.442695
        %v1163 = vpow.pop %v1162
        %v1164 = vmul.f32 %v971, 1.442695
        %v1165 = vpow.pop %v1164
        %v1166 = vmul.f32 %v972, 1.442695
        %v1167 = vpow.pop %v1166
        %v1168 = vmul.f32 %v973, 1.442695
        %v1169 = vpow.pop %v1168
        %v1170 = vmul.f32 %v974, 1.442695
        %v1171 = vpow.pop %v1170
        %v1172 = vmul.f32 %v975, 1.442695
        %v1173 = vpow.pop %v1172
        %v1174 = vmul.f32 %v976, 1.442695
        %v1175 = vpow.pop %v1174
        %v1176 = vmul.f32 %v977, 1.442695
        %v1177 = vpow.pop %v1176
        %v1178 = vmul.f32 %v978, 1.442695
        %v1179 = vpow.pop %v1178
        %v1180 = vmul.f32 %v979, 1.442695
        %v1181 = vpow.pop %v1180
        %v1182 = vmul.f32 %v980, 1.442695
        %v1183 = vpow.pop %v1182
        %v1184 = vmul.f32 %v981, 1.442695
        %v1185 = vpow.pop %v1184
        %v1186 = vmul.f32 %v982, 1.442695
        %v1187 = vpow.pop %v1186
        %v1188 = vmul.f32 %v983, 1.442695
        %v1189 = vpow.pop %v1188
        %v1190 = vmul.f32 %v984, 1.442695
        %v1191 = vpow.pop %v1190
        %v1192 = vmul.f32 %v985, 1.442695
        %v1193 = vpow.pop %v1192
        %v1194 = vmul.f32 %v986, 1.442695
        %v1195 = vpow.pop %v1194
        %v1196 = vmul.f32 %v987, 1.442695
        %v1197 = vpow.pop %v1196
        %v1198 = vmul.f32 %v988, 1.442695
        %v1199 = vpow.pop %v1198
        %v1200 = vmul.f32 %v989, 1.442695
        %v1201 = vpow.pop %v1200
        %v1202 = vmul.f32 %v990, 1.442695
        %v1203 = vpow.pop %v1202
        %v1204 = vmul.f32 %v991, 1.442695
        %v1205 = vpow.pop %v1204
        %v1206 = vmul.f32 %v992, 1.442695
        %v1207 = vpow.pop %v1206
        %v1208 = vmul.f32 %v993, 1.442695
        %v1209 = vpow.pop %v1208
        %v1210 = vmul.f32 %v994, 1.442695
        %v1211 = vpow.pop %v1210
        %v1212 = vmul.f32 %v995, 1.442695
        %v1213 = vpow.pop %v1212
        %v1214 = vmul.f32 %v996, 1.442695
        %v1215 = vpow.pop %v1214
        %v1216 = vmul.f32 %v997, 1.442695
        %v1217 = vpow.pop %v1216
        %v1218 = vmul.f32 %v998, 1.442695
        %v1219 = vpow.pop %v1218
        %v1220 = vmul.f32 %v999, 1.442695
        %v1221 = vpow.pop %v1220
        %v1222 = vmul.f32 %v1000, 1.442695
        %v1223 = vpow.pop %v1222
        %v1224 = vmul.f32 %v1001, 1.442695
        %v1225 = vpow.pop %v1224
        %v1226 = vmul.f32 %v1002, 1.442695
        %v1227 = vpow.pop %v1226
        %v1228 = vmul.f32 %v1003, 1.442695
        %v1229 = vpow.pop %v1228
        %v1230 = vmul.f32 %v1004, 1.442695
        %v1231 = vpow.pop %v1230
        %v1232 = vmul.f32 %v1005, 1.442695
        %v1233 = vpow.pop %v1232
        %v1234 = vmul.f32 %v1006, 1.442695
        %v1235 = vpow.pop %v1234
        %v1236 = vmul.f32 %v1007, 1.442695
        %v1237 = vpow.pop %v1236
        %v1238 = vmul.f32 %v1008, 1.442695
        %v1239 = vpow.pop %v1238
        %v1240 = vmul.f32 %v1009, 1.442695
        %v1241 = vpow.pop %v1240
        %v1242 = vmul.f32 %v1010, 1.442695
        %v1243 = vpow.pop %v1242
        %v1244 = vmul.f32 %v1011, 1.442695
        %v1245 = vpow.pop %v1244
        %v1246 = vmul.f32 %v1012, 1.442695
        %v1247 = vpow.pop %v1246
        %v1248 = vmul.f32 %v1013, 1.442695
        %v1249 = vpow.pop %v1248
        %v1250 = vmul.f32 %v1014, 1.442695
        %v1251 = vpow.pop %v1250
        %v1252 = vmul.f32 %v1015, 1.442695
        %v1253 = vpow.pop %v1252
        %v1254 = vmul.f32 %v1016, 1.442695
        %v1255 = vpow.pop %v1254
        %v1256 = vmul.f32 %v1017, 1.442695
        %v1257 = vpow.pop %v1256
        %v1258 = vmul.f32 %v1018, 1.442695
        %v1259 = vpow.pop %v1258
        %v1260 = vmul.f32 %v1019, 1.442695
        %v1261 = vpow.pop %v1260
        %v1262 = vmul.f32 %v1020, 1.442695
        %v1263 = vpow.pop %v1262
        %v1264 = vmul.f32 %v1021, 1.442695
        %v1265 = vpow.pop %v1264
        %v1266 = vmul.f32 %v1022, 1.442695
        %v1267 = vpow.pop %v1266
        %v1268 = vmul.f32 %v1023, 1.442695
        %v1269 = vpow.pop %v1268
        %v1270 = vmul.f32 %v1024, 1.442695
        %v1271 = vpow.pop %v1270
        %v1272 = vmul.f32 %v1025, 1.442695
        %v1273 = vpow.pop %v1272
        %v1274 = vmul.f32 %v1026, 1.442695
        %v1275 = vpow.pop %v1274
        %v1276 = vmul.f32 %v1027, 1.442695
        %v1277 = vpow.pop %v1276
        %v1278 = vmul.f32 %v1028, 1.442695
        %v1279 = vpow.pop %v1278
        %v1280 = vmul.f32 %v1029, 1.442695
        %v1281 = vpow.pop %v1280
        %v1282 = vmul.f32 %v1030, 1.442695
        %v1283 = vpow.pop %v1282
        %v1284 = vmul.f32 %v1031, 1.442695
        %v1285 = vpow.pop %v1284
        %v1286 = vmul.f32 %v1032, 1.442695
        %v1287 = vpow.pop %v1286
        %v1288 = vmul.f32 %v1033, 1.442695
        %v1289 = vpow.pop %v1288
        %v1290 = vperm.slane %v379, 0
        %1291 = vmatpush.msra.mxu0 %v298
        %1292 = vmatpush.msra.mxu0 %v297
        %1293 = vmatpush.msra.mxu0 %v296
        %1294 = vmatpush.msra.mxu0 %v295
        %1295 = vmatpush.msra.mxu0 %v294
        %1296 = vmatpush.msra.mxu0 %v293
        %1297 = vmatpush.msra.mxu0 %v292
        %1298 = vmatpush.msra.mxu0 %v291
        %1299 = vmatpush.msra.mxu0 %v290
        %1300 = vmatpush.msra.mxu0 %v289
        %1301 = vmatpush.msra.mxu0 %v288
        %1302 = vmatpush.msra.mxu0 %v287
        %1303 = vmatpush.msra.mxu0 %v286
        %1304 = vmatpush.msra.mxu0 %v285
        %1305 = vmatpush.msra.mxu0 %v284
        %1306 = vmatpush.msra.mxu0 %v283
        %1307 = vmatmul.f32.gmra.mxu0 %v1035
        %v1308 = vpop.f32.mrf.mxu0
        %v1309 = vadd.f32 %v1290, %v1308
        %1310 = vmatmul.f32.gmra.mxu0 %v1037
        %v1311 = vpop.f32.mrf.mxu0
        %v1312 = vadd.f32 %v1290, %v1311
        %1313 = vmatmul.f32.gmra.mxu0 %v1039
        %v1314 = vpop.f32.mrf.mxu0
        %v1315 = vadd.f32 %v1290, %v1314
        %1316 = vmatmul.f32.gmra.mxu0 %v1041
        %v1317 = vpop.f32.mrf.mxu0
        %v1318 = vadd.f32 %v1290, %v1317
        %1319 = vmatmul.f32.gmra.mxu0 %v1043
        %v1320 = vpop.f32.mrf.mxu0
        %v1321 = vadd.f32 %v1290, %v1320
        %1322 = vmatmul.f32.gmra.mxu0 %v1045
        %v1323 = vpop.f32.mrf.mxu0
        %v1324 = vadd.f32 %v1290, %v1323
        %1325 = vmatmul.f32.gmra.mxu0 %v1047
        %v1326 = vpop.f32.mrf.mxu0
        %v1327 = vadd.f32 %v1290, %v1326
        %1328 = vmatmul.f32.gmra.mxu0 %v1049
        %v1329 = vpop.f32.mrf.mxu0
        %v1330 = vadd.f32 %v1290, %v1329
        %1331 = vmatmul.f32.gmra.mxu0 %v1051
        %v1332 = vpop.f32.mrf.mxu0
        %v1333 = vadd.f32 %v1290, %v1332
        %1334 = vmatmul.f32.gmra.mxu0 %v1053
        %v1335 = vpop.f32.mrf.mxu0
        %v1336 = vadd.f32 %v1290, %v1335
        %1337 = vmatmul.f32.gmra.mxu0 %v1055
        %v1338 = vpop.f32.mrf.mxu0
        %v1339 = vadd.f32 %v1290, %v1338
        %1340 = vmatmul.f32.gmra.mxu0 %v1057
        %v1341 = vpop.f32.mrf.mxu0
        %v1342 = vadd.f32 %v1290, %v1341
        %1343 = vmatmul.f32.gmra.mxu0 %v1059
        %v1344 = vpop.f32.mrf.mxu0
        %v1345 = vadd.f32 %v1290, %v1344
        %1346 = vmatmul.f32.gmra.mxu0 %v1061
        %v1347 = vpop.f32.mrf.mxu0
        %v1348 = vadd.f32 %v1290, %v1347
        %1349 = vmatmul.f32.gmra.mxu0 %v1063
        %v1350 = vpop.f32.mrf.mxu0
        %v1351 = vadd.f32 %v1290, %v1350
        %1352 = vmatmul.f32.gmra.mxu0 %v1065
        %v1353 = vpop.f32.mrf.mxu0
        %v1354 = vadd.f32 %v1290, %v1353
        %1355 = vmatmul.f32.gmra.mxu0 %v1067
        %v1356 = vpop.f32.mrf.mxu0
        %v1357 = vadd.f32 %v1290, %v1356
        %1358 = vmatmul.f32.gmra.mxu0 %v1069
        %v1359 = vpop.f32.mrf.mxu0
        %v1360 = vadd.f32 %v1290, %v1359
        %1361 = vmatmul.f32.gmra.mxu0 %v1071
        %v1362 = vpop.f32.mrf.mxu0
        %v1363 = vadd.f32 %v1290, %v1362
        %1364 = vmatmul.f32.gmra.mxu0 %v1073
        %v1365 = vpop.f32.mrf.mxu0
        %v1366 = vadd.f32 %v1290, %v1365
        %1367 = vmatmul.f32.gmra.mxu0 %v1075
        %v1368 = vpop.f32.mrf.mxu0
        %v1369 = vadd.f32 %v1290, %v1368
        %1370 = vmatmul.f32.gmra.mxu0 %v1077
        %v1371 = vpop.f32.mrf.mxu0
        %v1372 = vadd.f32 %v1290, %v1371
        %1373 = vmatmul.f32.gmra.mxu0 %v1079
        %v1374 = vpop.f32.mrf.mxu0
        %v1375 = vadd.f32 %v1290, %v1374
        %1376 = vmatmul.f32.gmra.mxu0 %v1081
        %v1377 = vpop.f32.mrf.mxu0
        %v1378 = vadd.f32 %v1290, %v1377
        %1379 = vmatmul.f32.gmra.mxu0 %v1083
        %v1380 = vpop.f32.mrf.mxu0
        %v1381 = vadd.f32 %v1290, %v1380
        %1382 = vmatmul.f32.gmra.mxu0 %v1085
        %v1383 = vpop.f32.mrf.mxu0
        %v1384 = vadd.f32 %v1290, %v1383
        %1385 = vmatmul.f32.gmra.mxu0 %v1087
        %v1386 = vpop.f32.mrf.mxu0
        %v1387 = vadd.f32 %v1290, %v1386
        %1388 = vmatmul.f32.gmra.mxu0 %v1089
        %v1389 = vpop.f32.mrf.mxu0
        %v1390 = vadd.f32 %v1290, %v1389
        %1391 = vmatmul.f32.gmra.mxu0 %v1091
        %v1392 = vpop.f32.mrf.mxu0
        %v1393 = vadd.f32 %v1290, %v1392
        %1394 = vmatmul.f32.gmra.mxu0 %v1093
        %v1395 = vpop.f32.mrf.mxu0
        %v1396 = vadd.f32 %v1290, %v1395
        %1397 = vmatmul.f32.gmra.mxu0 %v1095
        %v1398 = vpop.f32.mrf.mxu0
        %v1399 = vadd.f32 %v1290, %v1398
        %1400 = vmatmul.f32.gmra.mxu0 %v1097
        %v1401 = vpop.f32.mrf.mxu0
        %v1402 = vadd.f32 %v1290, %v1401
        %1403 = vmatmul.f32.gmra.mxu0 %v1099
        %v1404 = vpop.f32.mrf.mxu0
        %v1405 = vadd.f32 %v1290, %v1404
        %1406 = vmatmul.f32.gmra.mxu0 %v1101
        %v1407 = vpop.f32.mrf.mxu0
        %v1408 = vadd.f32 %v1290, %v1407
        %1409 = vmatmul.f32.gmra.mxu0 %v1103
        %v1410 = vpop.f32.mrf.mxu0
        %v1411 = vadd.f32 %v1290, %v1410
        %1412 = vmatmul.f32.gmra.mxu0 %v1105
        %v1413 = vpop.f32.mrf.mxu0
        %v1414 = vadd.f32 %v1290, %v1413
        %1415 = vmatmul.f32.gmra.mxu0 %v1107
        %v1416 = vpop.f32.mrf.mxu0
        %v1417 = vadd.f32 %v1290, %v1416
        %1418 = vmatmul.f32.gmra.mxu0 %v1109
        %v1419 = vpop.f32.mrf.mxu0
        %v1420 = vadd.f32 %v1290, %v1419
        %1421 = vmatmul.f32.gmra.mxu0 %v1111
        %v1422 = vpop.f32.mrf.mxu0
        %v1423 = vadd.f32 %v1290, %v1422
        %1424 = vmatmul.f32.gmra.mxu0 %v1113
        %v1425 = vpop.f32.mrf.mxu0
        %v1426 = vadd.f32 %v1290, %v1425
        %1427 = vmatmul.f32.gmra.mxu0 %v1115
        %v1428 = vpop.f32.mrf.mxu0
        %v1429 = vadd.f32 %v1290, %v1428
        %1430 = vmatmul.f32.gmra.mxu0 %v1117
        %v1431 = vpop.f32.mrf.mxu0
        %v1432 = vadd.f32 %v1290, %v1431
        %1433 = vmatmul.f32.gmra.mxu0 %v1119
        %v1434 = vpop.f32.mrf.mxu0
        %v1435 = vadd.f32 %v1290, %v1434
        %1436 = vmatmul.f32.gmra.mxu0 %v1121
        %v1437 = vpop.f32.mrf.mxu0
        %v1438 = vadd.f32 %v1290, %v1437
        %1439 = vmatmul.f32.gmra.mxu0 %v1123
        %v1440 = vpop.f32.mrf.mxu0
        %v1441 = vadd.f32 %v1290, %v1440
        %1442 = vmatmul.f32.gmra.mxu0 %v1125
        %v1443 = vpop.f32.mrf.mxu0
        %v1444 = vadd.f32 %v1290, %v1443
        %1445 = vmatmul.f32.gmra.mxu0 %v1127
        %v1446 = vpop.f32.mrf.mxu0
        %v1447 = vadd.f32 %v1290, %v1446
        %1448 = vmatmul.f32.gmra.mxu0 %v1129
        %v1449 = vpop.f32.mrf.mxu0
        %v1450 = vadd.f32 %v1290, %v1449
        %1451 = vmatmul.f32.gmra.mxu0 %v1131
        %v1452 = vpop.f32.mrf.mxu0
        %v1453 = vadd.f32 %v1290, %v1452
        %1454 = vmatmul.f32.gmra.mxu0 %v1133
        %v1455 = vpop.f32.mrf.mxu0
        %v1456 = vadd.f32 %v1290, %v1455
        %1457 = vmatmul.f32.gmra.mxu0 %v1135
        %v1458 = vpop.f32.mrf.mxu0
        %v1459 = vadd.f32 %v1290, %v1458
        %1460 = vmatmul.f32.gmra.mxu0 %v1137
        %v1461 = vpop.f32.mrf.mxu0
        %v1462 = vadd.f32 %v1290, %v1461
        %1463 = vmatmul.f32.gmra.mxu0 %v1139
        %v1464 = vpop.f32.mrf.mxu0
        %v1465 = vadd.f32 %v1290, %v1464
        %1466 = vmatmul.f32.gmra.mxu0 %v1141
        %v1467 = vpop.f32.mrf.mxu0
        %v1468 = vadd.f32 %v1290, %v1467
        %1469 = vmatmul.f32.gmra.mxu0 %v1143
        %v1470 = vpop.f32.mrf.mxu0
        %v1471 = vadd.f32 %v1290, %v1470
        %1472 = vmatmul.f32.gmra.mxu0 %v1145
        %v1473 = vpop.f32.mrf.mxu0
        %v1474 = vadd.f32 %v1290, %v1473
        %1475 = vmatmul.f32.gmra.mxu0 %v1147
        %v1476 = vpop.f32.mrf.mxu0
        %v1477 = vadd.f32 %v1290, %v1476
        %1478 = vmatmul.f32.gmra.mxu0 %v1149
        %v1479 = vpop.f32.mrf.mxu0
        %v1480 = vadd.f32 %v1290, %v1479
        %1481 = vmatmul.f32.gmra.mxu0 %v1151
        %v1482 = vpop.f32.mrf.mxu0
        %v1483 = vadd.f32 %v1290, %v1482
        %1484 = vmatmul.f32.gmra.mxu0 %v1153
        %v1485 = vpop.f32.mrf.mxu0
        %v1486 = vadd.f32 %v1290, %v1485
        %1487 = vmatmul.f32.gmra.mxu0 %v1155
        %v1488 = vpop.f32.mrf.mxu0
        %v1489 = vadd.f32 %v1290, %v1488
        %1490 = vmatmul.f32.gmra.mxu0 %v1157
        %v1491 = vpop.f32.mrf.mxu0
        %v1492 = vadd.f32 %v1290, %v1491
        %1493 = vmatmul.f32.gmra.mxu0 %v1159
        %v1494 = vpop.f32.mrf.mxu0
        %v1495 = vadd.f32 %v1290, %v1494
        %1496 = vmatmul.f32.gmra.mxu0 %v1161
        %v1497 = vpop.f32.mrf.mxu0
        %v1498 = vadd.f32 %v1290, %v1497
        %1499 = vmatmul.f32.gmra.mxu0 %v1163
        %v1500 = vpop.f32.mrf.mxu0
        %v1501 = vadd.f32 %v1290, %v1500
        %1502 = vmatmul.f32.gmra.mxu0 %v1165
        %v1503 = vpop.f32.mrf.mxu0
        %v1504 = vadd.f32 %v1290, %v1503
        %1505 = vmatmul.f32.gmra.mxu0 %v1167
        %v1506 = vpop.f32.mrf.mxu0
        %v1507 = vadd.f32 %v1290, %v1506
        %1508 = vmatmul.f32.gmra.mxu0 %v1169
        %v1509 = vpop.f32.mrf.mxu0
        %v1510 = vadd.f32 %v1290, %v1509
        %1511 = vmatmul.f32.gmra.mxu0 %v1171
        %v1512 = vpop.f32.mrf.mxu0
        %v1513 = vadd.f32 %v1290, %v1512
        %1514 = vmatmul.f32.gmra.mxu0 %v1173
        %v1515 = vpop.f32.mrf.mxu0
        %v1516 = vadd.f32 %v1290, %v1515
        %1517 = vmatmul.f32.gmra.mxu0 %v1175
        %v1518 = vpop.f32.mrf.mxu0
        %v1519 = vadd.f32 %v1290, %v1518
        %1520 = vmatmul.f32.gmra.mxu0 %v1177
        %v1521 = vpop.f32.mrf.mxu0
        %v1522 = vadd.f32 %v1290, %v1521
        %1523 = vmatmul.f32.gmra.mxu0 %v1179
        %v1524 = vpop.f32.mrf.mxu0
        %v1525 = vadd.f32 %v1290, %v1524
        %1526 = vmatmul.f32.gmra.mxu0 %v1181
        %v1527 = vpop.f32.mrf.mxu0
        %v1528 = vadd.f32 %v1290, %v1527
        %1529 = vmatmul.f32.gmra.mxu0 %v1183
        %v1530 = vpop.f32.mrf.mxu0
        %v1531 = vadd.f32 %v1290, %v1530
        %1532 = vmatmul.f32.gmra.mxu0 %v1185
        %v1533 = vpop.f32.mrf.mxu0
        %v1534 = vadd.f32 %v1290, %v1533
        %1535 = vmatmul.f32.gmra.mxu0 %v1187
        %v1536 = vpop.f32.mrf.mxu0
        %v1537 = vadd.f32 %v1290, %v1536
        %1538 = vmatmul.f32.gmra.mxu0 %v1189
        %v1539 = vpop.f32.mrf.mxu0
        %v1540 = vadd.f32 %v1290, %v1539
        %1541 = vmatmul.f32.gmra.mxu0 %v1191
        %v1542 = vpop.f32.mrf.mxu0
        %v1543 = vadd.f32 %v1290, %v1542
        %1544 = vmatmul.f32.gmra.mxu0 %v1193
        %v1545 = vpop.f32.mrf.mxu0
        %v1546 = vadd.f32 %v1290, %v1545
        %1547 = vmatmul.f32.gmra.mxu0 %v1195
        %v1548 = vpop.f32.mrf.mxu0
        %v1549 = vadd.f32 %v1290, %v1548
        %1550 = vmatmul.f32.gmra.mxu0 %v1197
        %v1551 = vpop.f32.mrf.mxu0
        %v1552 = vadd.f32 %v1290, %v1551
        %1553 = vmatmul.f32.gmra.mxu0 %v1199
        %v1554 = vpop.f32.mrf.mxu0
        %v1555 = vadd.f32 %v1290, %v1554
        %1556 = vmatmul.f32.gmra.mxu0 %v1201
        %v1557 = vpop.f32.mrf.mxu0
        %v1558 = vadd.f32 %v1290, %v1557
        %1559 = vmatmul.f32.gmra.mxu0 %v1203
        %v1560 = vpop.f32.mrf.mxu0
        %v1561 = vadd.f32 %v1290, %v1560
        %1562 = vmatmul.f32.gmra.mxu0 %v1205
        %v1563 = vpop.f32.mrf.mxu0
        %v1564 = vadd.f32 %v1290, %v1563
        %1565 = vmatmul.f32.gmra.mxu0 %v1207
        %v1566 = vpop.f32.mrf.mxu0
        %v1567 = vadd.f32 %v1290, %v1566
        %1568 = vmatmul.f32.gmra.mxu0 %v1209
        %v1569 = vpop.f32.mrf.mxu0
        %v1570 = vadd.f32 %v1290, %v1569
        %1571 = vmatmul.f32.gmra.mxu0 %v1211
        %v1572 = vpop.f32.mrf.mxu0
        %v1573 = vadd.f32 %v1290, %v1572
        %1574 = vmatmul.f32.gmra.mxu0 %v1213
        %v1575 = vpop.f32.mrf.mxu0
        %v1576 = vadd.f32 %v1290, %v1575
        %1577 = vmatmul.f32.gmra.mxu0 %v1215
        %v1578 = vpop.f32.mrf.mxu0
        %v1579 = vadd.f32 %v1290, %v1578
        %1580 = vmatmul.f32.gmra.mxu0 %v1217
        %v1581 = vpop.f32.mrf.mxu0
        %v1582 = vadd.f32 %v1290, %v1581
        %1583 = vmatmul.f32.gmra.mxu0 %v1219
        %v1584 = vpop.f32.mrf.mxu0
        %v1585 = vadd.f32 %v1290, %v1584
        %1586 = vmatmul.f32.gmra.mxu0 %v1221
        %v1587 = vpop.f32.mrf.mxu0
        %v1588 = vadd.f32 %v1290, %v1587
        %1589 = vmatmul.f32.gmra.mxu0 %v1223
        %v1590 = vpop.f32.mrf.mxu0
        %v1591 = vadd.f32 %v1290, %v1590
        %1592 = vmatmul.f32.gmra.mxu0 %v1225
        %v1593 = vpop.f32.mrf.mxu0
        %v1594 = vadd.f32 %v1290, %v1593
        %1595 = vmatmul.f32.gmra.mxu0 %v1227
        %v1596 = vpop.f32.mrf.mxu0
        %v1597 = vadd.f32 %v1290, %v1596
        %1598 = vmatmul.f32.gmra.mxu0 %v1229
        %v1599 = vpop.f32.mrf.mxu0
        %v1600 = vadd.f32 %v1290, %v1599
        %1601 = vmatmul.f32.gmra.mxu0 %v1231
        %v1602 = vpop.f32.mrf.mxu0
        %v1603 = vadd.f32 %v1290, %v1602
        %1604 = vmatmul.f32.gmra.mxu0 %v1233
        %v1605 = vpop.f32.mrf.mxu0
        %v1606 = vadd.f32 %v1290, %v1605
        %1607 = vmatmul.f32.gmra.mxu0 %v1235
        %v1608 = vpop.f32.mrf.mxu0
        %v1609 = vadd.f32 %v1290, %v1608
        %1610 = vmatmul.f32.gmra.mxu0 %v1237
        %v1611 = vpop.f32.mrf.mxu0
        %v1612 = vadd.f32 %v1290, %v1611
        %1613 = vmatmul.f32.gmra.mxu0 %v1239
        %v1614 = vpop.f32.mrf.mxu0
        %v1615 = vadd.f32 %v1290, %v1614
        %1616 = vmatmul.f32.gmra.mxu0 %v1241
        %v1617 = vpop.f32.mrf.mxu0
        %v1618 = vadd.f32 %v1290, %v1617
        %1619 = vmatmul.f32.gmra.mxu0 %v1243
        %v1620 = vpop.f32.mrf.mxu0
        %v1621 = vadd.f32 %v1290, %v1620
        %1622 = vmatmul.f32.gmra.mxu0 %v1245
        %v1623 = vpop.f32.mrf.mxu0
        %v1624 = vadd.f32 %v1290, %v1623
        %1625 = vmatmul.f32.gmra.mxu0 %v1247
        %v1626 = vpop.f32.mrf.mxu0
        %v1627 = vadd.f32 %v1290, %v1626
        %1628 = vmatmul.f32.gmra.mxu0 %v1249
        %v1629 = vpop.f32.mrf.mxu0
        %v1630 = vadd.f32 %v1290, %v1629
        %1631 = vmatmul.f32.gmra.mxu0 %v1251
        %v1632 = vpop.f32.mrf.mxu0
        %v1633 = vadd.f32 %v1290, %v1632
        %1634 = vmatmul.f32.gmra.mxu0 %v1253
        %v1635 = vpop.f32.mrf.mxu0
        %v1636 = vadd.f32 %v1290, %v1635
        %1637 = vmatmul.f32.gmra.mxu0 %v1255
        %v1638 = vpop.f32.mrf.mxu0
        %v1639 = vadd.f32 %v1290, %v1638
        %1640 = vmatmul.f32.gmra.mxu0 %v1257
        %v1641 = vpop.f32.mrf.mxu0
        %v1642 = vadd.f32 %v1290, %v1641
        %1643 = vmatmul.f32.gmra.mxu0 %v1259
        %v1644 = vpop.f32.mrf.mxu0
        %v1645 = vadd.f32 %v1290, %v1644
        %1646 = vmatmul.f32.gmra.mxu0 %v1261
        %v1647 = vpop.f32.mrf.mxu0
        %v1648 = vadd.f32 %v1290, %v1647
        %1649 = vmatmul.f32.gmra.mxu0 %v1263
        %v1650 = vpop.f32.mrf.mxu0
        %v1651 = vadd.f32 %v1290, %v1650
        %1652 = vmatmul.f32.gmra.mxu0 %v1265
        %v1653 = vpop.f32.mrf.mxu0
        %v1654 = vadd.f32 %v1290, %v1653
        %1655 = vmatmul.f32.gmra.mxu0 %v1267
        %v1656 = vpop.f32.mrf.mxu0
        %v1657 = vadd.f32 %v1290, %v1656
        %1658 = vmatmul.f32.gmra.mxu0 %v1269
        %v1659 = vpop.f32.mrf.mxu0
        %v1660 = vadd.f32 %v1290, %v1659
        %1661 = vmatmul.f32.gmra.mxu0 %v1271
        %v1662 = vpop.f32.mrf.mxu0
        %v1663 = vadd.f32 %v1290, %v1662
        %1664 = vmatmul.f32.gmra.mxu0 %v1273
        %v1665 = vpop.f32.mrf.mxu0
        %v1666 = vadd.f32 %v1290, %v1665
        %1667 = vmatmul.f32.gmra.mxu0 %v1275
        %v1668 = vpop.f32.mrf.mxu0
        %v1669 = vadd.f32 %v1290, %v1668
        %1670 = vmatmul.f32.gmra.mxu0 %v1277
        %v1671 = vpop.f32.mrf.mxu0
        %v1672 = vadd.f32 %v1290, %v1671
        %1673 = vmatmul.f32.gmra.mxu0 %v1279
        %v1674 = vpop.f32.mrf.mxu0
        %v1675 = vadd.f32 %v1290, %v1674
        %1676 = vmatmul.f32.gmra.mxu0 %v1281
        %v1677 = vpop.f32.mrf.mxu0
        %v1678 = vadd.f32 %v1290, %v1677
        %1679 = vmatmul.f32.gmra.mxu0 %v1283
        %v1680 = vpop.f32.mrf.mxu0
        %v1681 = vadd.f32 %v1290, %v1680
        %1682 = vmatmul.f32.gmra.mxu0 %v1285
        %v1683 = vpop.f32.mrf.mxu0
        %v1684 = vadd.f32 %v1290, %v1683
        %1685 = vmatmul.f32.gmra.mxu0 %v1287
        %v1686 = vpop.f32.mrf.mxu0
        %v1687 = vadd.f32 %v1290, %v1686
        %1688 = vmatmul.f32.gmra.mxu0 %v1289
        %v1689 = vpop.f32.mrf.mxu0
        %v1690 = vadd.f32 %v1290, %v1689
        %1691 = vdwg.mxu0
        %v1692 = vsub.f32 0.0, %v1309
        %v1693 = vsub.f32 0.0, %v1312
        %v1694 = vsub.f32 0.0, %v1315
        %v1695 = vsub.f32 0.0, %v1318
        %v1696 = vsub.f32 0.0, %v1321
        %v1697 = vsub.f32 0.0, %v1324
        %v1698 = vsub.f32 0.0, %v1327
        %v1699 = vsub.f32 0.0, %v1330
        %v1700 = vsub.f32 0.0, %v1333
        %v1701 = vsub.f32 0.0, %v1336
        %v1702 = vsub.f32 0.0, %v1339
        %v1703 = vsub.f32 0.0, %v1342
        %v1704 = vsub.f32 0.0, %v1345
        %v1705 = vsub.f32 0.0, %v1348
        %v1706 = vsub.f32 0.0, %v1351
        %v1707 = vsub.f32 0.0, %v1354
        %v1708 = vsub.f32 0.0, %v1357
        %v1709 = vsub.f32 0.0, %v1360
        %v1710 = vsub.f32 0.0, %v1363
        %v1711 = vsub.f32 0.0, %v1366
        %v1712 = vsub.f32 0.0, %v1369
        %v1713 = vsub.f32 0.0, %v1372
        %v1714 = vsub.f32 0.0, %v1375
        %v1715 = vsub.f32 0.0, %v1378
        %v1716 = vsub.f32 0.0, %v1381
        %v1717 = vsub.f32 0.0, %v1384
        %v1718 = vsub.f32 0.0, %v1387
        %v1719 = vsub.f32 0.0, %v1390
        %v1720 = vsub.f32 0.0, %v1393
        %v1721 = vsub.f32 0.0, %v1396
        %v1722 = vsub.f32 0.0, %v1399
        %v1723 = vsub.f32 0.0, %v1402
        %v1724 = vsub.f32 0.0, %v1405
        %v1725 = vsub.f32 0.0, %v1408
        %v1726 = vsub.f32 0.0, %v1411
        %v1727 = vsub.f32 0.0, %v1414
        %v1728 = vsub.f32 0.0, %v1417
        %v1729 = vsub.f32 0.0, %v1420
        %v1730 = vsub.f32 0.0, %v1423
        %v1731 = vsub.f32 0.0, %v1426
        %v1732 = vsub.f32 0.0, %v1429
        %v1733 = vsub.f32 0.0, %v1432
        %v1734 = vsub.f32 0.0, %v1435
        %v1735 = vsub.f32 0.0, %v1438
        %v1736 = vsub.f32 0.0, %v1441
        %v1737 = vsub.f32 0.0, %v1444
        %v1738 = vsub.f32 0.0, %v1447
        %v1739 = vsub.f32 0.0, %v1450
        %v1740 = vsub.f32 0.0, %v1453
        %v1741 = vsub.f32 0.0, %v1456
        %v1742 = vsub.f32 0.0, %v1459
        %v1743 = vsub.f32 0.0, %v1462
        %v1744 = vsub.f32 0.0, %v1465
        %v1745 = vsub.f32 0.0, %v1468
        %v1746 = vsub.f32 0.0, %v1471
        %v1747 = vsub.f32 0.0, %v1474
        %v1748 = vsub.f32 0.0, %v1477
        %v1749 = vsub.f32 0.0, %v1480
        %v1750 = vsub.f32 0.0, %v1483
        %v1751 = vsub.f32 0.0, %v1486
        %v1752 = vsub.f32 0.0, %v1489
        %v1753 = vsub.f32 0.0, %v1492
        %v1754 = vsub.f32 0.0, %v1495
        %v1755 = vsub.f32 0.0, %v1498
        %v1756 = vsub.f32 0.0, %v1501
        %v1757 = vsub.f32 0.0, %v1504
        %v1758 = vsub.f32 0.0, %v1507
        %v1759 = vsub.f32 0.0, %v1510
        %v1760 = vsub.f32 0.0, %v1513
        %v1761 = vsub.f32 0.0, %v1516
        %v1762 = vsub.f32 0.0, %v1519
        %v1763 = vsub.f32 0.0, %v1522
        %v1764 = vsub.f32 0.0, %v1525
        %v1765 = vsub.f32 0.0, %v1528
        %v1766 = vsub.f32 0.0, %v1531
        %v1767 = vsub.f32 0.0, %v1534
        %v1768 = vsub.f32 0.0, %v1537
        %v1769 = vsub.f32 0.0, %v1540
        %v1770 = vsub.f32 0.0, %v1543
        %v1771 = vsub.f32 0.0, %v1546
        %v1772 = vsub.f32 0.0, %v1549
        %v1773 = vsub.f32 0.0, %v1552
        %v1774 = vsub.f32 0.0, %v1555
        %v1775 = vsub.f32 0.0, %v1558
        %v1776 = vsub.f32 0.0, %v1561
        %v1777 = vsub.f32 0.0, %v1564
        %v1778 = vsub.f32 0.0, %v1567
        %v1779 = vsub.f32 0.0, %v1570
        %v1780 = vsub.f32 0.0, %v1573
        %v1781 = vsub.f32 0.0, %v1576
        %v1782 = vsub.f32 0.0, %v1579
        %v1783 = vsub.f32 0.0, %v1582
        %v1784 = vsub.f32 0.0, %v1585
        %v1785 = vsub.f32 0.0, %v1588
        %v1786 = vsub.f32 0.0, %v1591
        %v1787 = vsub.f32 0.0, %v1594
        %v1788 = vsub.f32 0.0, %v1597
        %v1789 = vsub.f32 0.0, %v1600
        %v1790 = vsub.f32 0.0, %v1603
        %v1791 = vsub.f32 0.0, %v1606
        %v1792 = vsub.f32 0.0, %v1609
        %v1793 = vsub.f32 0.0, %v1612
        %v1794 = vsub.f32 0.0, %v1615
        %v1795 = vsub.f32 0.0, %v1618
        %v1796 = vsub.f32 0.0, %v1621
        %v1797 = vsub.f32 0.0, %v1624
        %v1798 = vsub.f32 0.0, %v1627
        %v1799 = vsub.f32 0.0, %v1630
        %v1800 = vsub.f32 0.0, %v1633
        %v1801 = vsub.f32 0.0, %v1636
        %v1802 = vsub.f32 0.0, %v1639
        %v1803 = vsub.f32 0.0, %v1642
        %v1804 = vsub.f32 0.0, %v1645
        %v1805 = vsub.f32 0.0, %v1648
        %v1806 = vsub.f32 0.0, %v1651
        %v1807 = vsub.f32 0.0, %v1654
        %v1808 = vsub.f32 0.0, %v1657
        %v1809 = vsub.f32 0.0, %v1660
        %v1810 = vsub.f32 0.0, %v1663
        %v1811 = vsub.f32 0.0, %v1666
        %v1812 = vsub.f32 0.0, %v1669
        %v1813 = vsub.f32 0.0, %v1672
        %v1814 = vsub.f32 0.0, %v1675
        %v1815 = vsub.f32 0.0, %v1678
        %v1816 = vsub.f32 0.0, %v1681
        %v1817 = vsub.f32 0.0, %v1684
        %v1818 = vsub.f32 0.0, %v1687
        %v1819 = vsub.f32 0.0, %v1690
        %v1820 = vmul.f32 %v1692, 1.442695
        %v1821 = vpow.pop %v1820
        %v1822 = vmul.f32 %v1693, 1.442695
        %v1823 = vpow.pop %v1822
        %v1824 = vmul.f32 %v1694, 1.442695
        %v1825 = vpow.pop %v1824
        %v1826 = vmul.f32 %v1695, 1.442695
        %v1827 = vpow.pop %v1826
        %v1828 = vmul.f32 %v1696, 1.442695
        %v1829 = vpow.pop %v1828
        %v1830 = vmul.f32 %v1697, 1.442695
        %v1831 = vpow.pop %v1830
        %v1832 = vmul.f32 %v1698, 1.442695
        %v1833 = vpow.pop %v1832
        %v1834 = vmul.f32 %v1699, 1.442695
        %v1835 = vpow.pop %v1834
        %v1836 = vmul.f32 %v1700, 1.442695
        %v1837 = vpow.pop %v1836
        %v1838 = vmul.f32 %v1701, 1.442695
        %v1839 = vpow.pop %v1838
        %v1840 = vmul.f32 %v1702, 1.442695
        %v1841 = vpow.pop %v1840
        %v1842 = vmul.f32 %v1703, 1.442695
        %v1843 = vpow.pop %v1842
        %v1844 = vmul.f32 %v1704, 1.442695
        %v1845 = vpow.pop %v1844
        %v1846 = vmul.f32 %v1705, 1.442695
        %v1847 = vpow.pop %v1846
        %v1848 = vmul.f32 %v1706, 1.442695
        %v1849 = vpow.pop %v1848
        %v1850 = vmul.f32 %v1707, 1.442695
        %v1851 = vpow.pop %v1850
        %v1852 = vmul.f32 %v1708, 1.442695
        %v1853 = vpow.pop %v1852
        %v1854 = vmul.f32 %v1709, 1.442695
        %v1855 = vpow.pop %v1854
        %v1856 = vmul.f32 %v1710, 1.442695
        %v1857 = vpow.pop %v1856
        %v1858 = vmul.f32 %v1711, 1.442695
        %v1859 = vpow.pop %v1858
        %v1860 = vmul.f32 %v1712, 1.442695
        %v1861 = vpow.pop %v1860
        %v1862 = vmul.f32 %v1713, 1.442695
        %v1863 = vpow.pop %v1862
        %v1864 = vmul.f32 %v1714, 1.442695
        %v1865 = vpow.pop %v1864
        %v1866 = vmul.f32 %v1715, 1.442695
        %v1867 = vpow.pop %v1866
        %v1868 = vmul.f32 %v1716, 1.442695
        %v1869 = vpow.pop %v1868
        %v1870 = vmul.f32 %v1717, 1.442695
        %v1871 = vpow.pop %v1870
        %v1872 = vmul.f32 %v1718, 1.442695
        %v1873 = vpow.pop %v1872
        %v1874 = vmul.f32 %v1719, 1.442695
        %v1875 = vpow.pop %v1874
        %v1876 = vmul.f32 %v1720, 1.442695
        %v1877 = vpow.pop %v1876
        %v1878 = vmul.f32 %v1721, 1.442695
        %v1879 = vpow.pop %v1878
        %v1880 = vmul.f32 %v1722, 1.442695
        %v1881 = vpow.pop %v1880
        %v1882 = vmul.f32 %v1723, 1.442695
        %v1883 = vpow.pop %v1882
        %v1884 = vmul.f32 %v1724, 1.442695
        %v1885 = vpow.pop %v1884
        %v1886 = vmul.f32 %v1725, 1.442695
        %v1887 = vpow.pop %v1886
        %v1888 = vmul.f32 %v1726, 1.442695
        %v1889 = vpow.pop %v1888
        %v1890 = vmul.f32 %v1727, 1.442695
        %v1891 = vpow.pop %v1890
        %v1892 = vmul.f32 %v1728, 1.442695
        %v1893 = vpow.pop %v1892
        %v1894 = vmul.f32 %v1729, 1.442695
        %v1895 = vpow.pop %v1894
        %v1896 = vmul.f32 %v1730, 1.442695
        %v1897 = vpow.pop %v1896
        %v1898 = vmul.f32 %v1731, 1.442695
        %v1899 = vpow.pop %v1898
        %v1900 = vmul.f32 %v1732, 1.442695
        %v1901 = vpow.pop %v1900
        %v1902 = vmul.f32 %v1733, 1.442695
        %v1903 = vpow.pop %v1902
        %v1904 = vmul.f32 %v1734, 1.442695
        %v1905 = vpow.pop %v1904
        %v1906 = vmul.f32 %v1735, 1.442695
        %v1907 = vpow.pop %v1906
        %v1908 = vmul.f32 %v1736, 1.442695
        %v1909 = vpow.pop %v1908
        %v1910 = vmul.f32 %v1737, 1.442695
        %v1911 = vpow.pop %v1910
        %v1912 = vmul.f32 %v1738, 1.442695
        %v1913 = vpow.pop %v1912
        %v1914 = vmul.f32 %v1739, 1.442695
        %v1915 = vpow.pop %v1914
        %v1916 = vmul.f32 %v1740, 1.442695
        %v1917 = vpow.pop %v1916
        %v1918 = vmul.f32 %v1741, 1.442695
        %v1919 = vpow.pop %v1918
        %v1920 = vmul.f32 %v1742, 1.442695
        %v1921 = vpow.pop %v1920
        %v1922 = vmul.f32 %v1743, 1.442695
        %v1923 = vpow.pop %v1922
        %v1924 = vmul.f32 %v1744, 1.442695
        %v1925 = vpow.pop %v1924
        %v1926 = vmul.f32 %v1745, 1.442695
        %v1927 = vpow.pop %v1926
        %v1928 = vmul.f32 %v1746, 1.442695
        %v1929 = vpow.pop %v1928
        %v1930 = vmul.f32 %v1747, 1.442695
        %v1931 = vpow.pop %v1930
        %v1932 = vmul.f32 %v1748, 1.442695
        %v1933 = vpow.pop %v1932
        %v1934 = vmul.f32 %v1749, 1.442695
        %v1935 = vpow.pop %v1934
        %v1936 = vmul.f32 %v1750, 1.442695
        %v1937 = vpow.pop %v1936
        %v1938 = vmul.f32 %v1751, 1.442695
        %v1939 = vpow.pop %v1938
        %v1940 = vmul.f32 %v1752, 1.442695
        %v1941 = vpow.pop %v1940
        %v1942 = vmul.f32 %v1753, 1.442695
        %v1943 = vpow.pop %v1942
        %v1944 = vmul.f32 %v1754, 1.442695
        %v1945 = vpow.pop %v1944
        %v1946 = vmul.f32 %v1755, 1.442695
        %v1947 = vpow.pop %v1946
        %v1948 = vmul.f32 %v1756, 1.442695
        %v1949 = vpow.pop %v1948
        %v1950 = vmul.f32 %v1757, 1.442695
        %v1951 = vpow.pop %v1950
        %v1952 = vmul.f32 %v1758, 1.442695
        %v1953 = vpow.pop %v1952
        %v1954 = vmul.f32 %v1759, 1.442695
        %v1955 = vpow.pop %v1954
        %v1956 = vmul.f32 %v1760, 1.442695
        %v1957 = vpow.pop %v1956
        %v1958 = vmul.f32 %v1761, 1.442695
        %v1959 = vpow.pop %v1958
        %v1960 = vmul.f32 %v1762, 1.442695
        %v1961 = vpow.pop %v1960
        %v1962 = vmul.f32 %v1763, 1.442695
        %v1963 = vpow.pop %v1962
        %v1964 = vmul.f32 %v1764, 1.442695
        %v1965 = vpow.pop %v1964
        %v1966 = vmul.f32 %v1765, 1.442695
        %v1967 = vpow.pop %v1966
        %v1968 = vmul.f32 %v1766, 1.442695
        %v1969 = vpow.pop %v1968
        %v1970 = vmul.f32 %v1767, 1.442695
        %v1971 = vpow.pop %v1970
        %v1972 = vmul.f32 %v1768, 1.442695
        %v1973 = vpow.pop %v1972
        %v1974 = vmul.f32 %v1769, 1.442695
        %v1975 = vpow.pop %v1974
        %v1976 = vmul.f32 %v1770, 1.442695
        %v1977 = vpow.pop %v1976
        %v1978 = vmul.f32 %v1771, 1.442695
        %v1979 = vpow.pop %v1978
        %v1980 = vmul.f32 %v1772, 1.442695
        %v1981 = vpow.pop %v1980
        %v1982 = vmul.f32 %v1773, 1.442695
        %v1983 = vpow.pop %v1982
        %v1984 = vmul.f32 %v1774, 1.442695
        %v1985 = vpow.pop %v1984
        %v1986 = vmul.f32 %v1775, 1.442695
        %v1987 = vpow.pop %v1986
        %v1988 = vmul.f32 %v1776, 1.442695
        %v1989 = vpow.pop %v1988
        %v1990 = vmul.f32 %v1777, 1.442695
        %v1991 = vpow.pop %v1990
        %v1992 = vmul.f32 %v1778, 1.442695
        %v1993 = vpow.pop %v1992
        %v1994 = vmul.f32 %v1779, 1.442695
        %v1995 = vpow.pop %v1994
        %v1996 = vmul.f32 %v1780, 1.442695
        %v1997 = vpow.pop %v1996
        %v1998 = vmul.f32 %v1781, 1.442695
        %v1999 = vpow.pop %v1998
        %v2000 = vmul.f32 %v1782, 1.442695
        %v2001 = vpow.pop %v2000
        %v2002 = vmul.f32 %v1783, 1.442695
        %v2003 = vpow.pop %v2002
        %v2004 = vmul.f32 %v1784, 1.442695
        %v2005 = vpow.pop %v2004
        %v2006 = vmul.f32 %v1785, 1.442695
        %v2007 = vpow.pop %v2006
        %v2008 = vmul.f32 %v1786, 1.442695
        %v2009 = vpow.pop %v2008
        %v2010 = vmul.f32 %v1787, 1.442695
        %v2011 = vpow.pop %v2010
        %v2012 = vmul.f32 %v1788, 1.442695
        %v2013 = vpow.pop %v2012
        %v2014 = vmul.f32 %v1789, 1.442695
        %v2015 = vpow.pop %v2014
        %v2016 = vmul.f32 %v1790, 1.442695
        %v2017 = vpow.pop %v2016
        %v2018 = vmul.f32 %v1791, 1.442695
        %v2019 = vpow.pop %v2018
        %v2020 = vmul.f32 %v1792, 1.442695
        %v2021 = vpow.pop %v2020
        %v2022 = vmul.f32 %v1793, 1.442695
        %v2023 = vpow.pop %v2022
        %v2024 = vmul.f32 %v1794, 1.442695
        %v2025 = vpow.pop %v2024
        %v2026 = vmul.f32 %v1795, 1.442695
        %v2027 = vpow.pop %v2026
        %v2028 = vmul.f32 %v1796, 1.442695
        %v2029 = vpow.pop %v2028
        %v2030 = vmul.f32 %v1797, 1.442695
        %v2031 = vpow.pop %v2030
        %v2032 = vmul.f32 %v1798, 1.442695
        %v2033 = vpow.pop %v2032
        %v2034 = vmul.f32 %v1799, 1.442695
        %v2035 = vpow.pop %v2034
        %v2036 = vmul.f32 %v1800, 1.442695
        %v2037 = vpow.pop %v2036
        %v2038 = vmul.f32 %v1801, 1.442695
        %v2039 = vpow.pop %v2038
        %v2040 = vmul.f32 %v1802, 1.442695
        %v2041 = vpow.pop %v2040
        %v2042 = vmul.f32 %v1803, 1.442695
        %v2043 = vpow.pop %v2042
        %v2044 = vmul.f32 %v1804, 1.442695
        %v2045 = vpow.pop %v2044
        %v2046 = vmul.f32 %v1805, 1.442695
        %v2047 = vpow.pop %v2046
        %v2048 = vmul.f32 %v1806, 1.442695
        %v2049 = vpow.pop %v2048
        %v2050 = vmul.f32 %v1807, 1.442695
        %v2051 = vpow.pop %v2050
        %v2052 = vmul.f32 %v1808, 1.442695
        %v2053 = vpow.pop %v2052
        %v2054 = vmul.f32 %v1809, 1.442695
        %v2055 = vpow.pop %v2054
        %v2056 = vmul.f32 %v1810, 1.442695
        %v2057 = vpow.pop %v2056
        %v2058 = vmul.f32 %v1811, 1.442695
        %v2059 = vpow.pop %v2058
        %v2060 = vmul.f32 %v1812, 1.442695
        %v2061 = vpow.pop %v2060
        %v2062 = vmul.f32 %v1813, 1.442695
        %v2063 = vpow.pop %v2062
        %v2064 = vmul.f32 %v1814, 1.442695
        %v2065 = vpow.pop %v2064
        %v2066 = vmul.f32 %v1815, 1.442695
        %v2067 = vpow.pop %v2066
        %v2068 = vmul.f32 %v1816, 1.442695
        %v2069 = vpow.pop %v2068
        %v2070 = vmul.f32 %v1817, 1.442695
        %v2071 = vpow.pop %v2070
        %v2072 = vmul.f32 %v1818, 1.442695
        %v2073 = vpow.pop %v2072
        %v2074 = vmul.f32 %v1819, 1.442695
        %v2075 = vpow.pop %v2074
        %v2076 = vadd.f32 %v1821, 1.0
        %v2077 = vadd.f32 %v1823, 1.0
        %v2078 = vadd.f32 %v1825, 1.0
        %v2079 = vadd.f32 %v1827, 1.0
        %v2080 = vadd.f32 %v1829, 1.0
        %v2081 = vadd.f32 %v1831, 1.0
        %v2082 = vadd.f32 %v1833, 1.0
        %v2083 = vadd.f32 %v1835, 1.0
        %v2084 = vadd.f32 %v1837, 1.0
        %v2085 = vadd.f32 %v1839, 1.0
        %v2086 = vadd.f32 %v1841, 1.0
        %v2087 = vadd.f32 %v1843, 1.0
        %v2088 = vadd.f32 %v1845, 1.0
        %v2089 = vadd.f32 %v1847, 1.0
        %v2090 = vadd.f32 %v1849, 1.0
        %v2091 = vadd.f32 %v1851, 1.0
        %v2092 = vadd.f32 %v1853, 1.0
        %v2093 = vadd.f32 %v1855, 1.0
        %v2094 = vadd.f32 %v1857, 1.0
        %v2095 = vadd.f32 %v1859, 1.0
        %v2096 = vadd.f32 %v1861, 1.0
        %v2097 = vadd.f32 %v1863, 1.0
        %v2098 = vadd.f32 %v1865, 1.0
        %v2099 = vadd.f32 %v1867, 1.0
        %v2100 = vadd.f32 %v1869, 1.0
        %v2101 = vadd.f32 %v1871, 1.0
        %v2102 = vadd.f32 %v1873, 1.0
        %v2103 = vadd.f32 %v1875, 1.0
        %v2104 = vadd.f32 %v1877, 1.0
        %v2105 = vadd.f32 %v1879, 1.0
        %v2106 = vadd.f32 %v1881, 1.0
        %v2107 = vadd.f32 %v1883, 1.0
        %v2108 = vadd.f32 %v1885, 1.0
        %v2109 = vadd.f32 %v1887, 1.0
        %v2110 = vadd.f32 %v1889, 1.0
        %v2111 = vadd.f32 %v1891, 1.0
        %v2112 = vadd.f32 %v1893, 1.0
        %v2113 = vadd.f32 %v1895, 1.0
        %v2114 = vadd.f32 %v1897, 1.0
        %v2115 = vadd.f32 %v1899, 1.0
        %v2116 = vadd.f32 %v1901, 1.0
        %v2117 = vadd.f32 %v1903, 1.0
        %v2118 = vadd.f32 %v1905, 1.0
        %v2119 = vadd.f32 %v1907, 1.0
        %v2120 = vadd.f32 %v1909, 1.0
        %v2121 = vadd.f32 %v1911, 1.0
        %v2122 = vadd.f32 %v1913, 1.0
        %v2123 = vadd.f32 %v1915, 1.0
        %v2124 = vadd.f32 %v1917, 1.0
        %v2125 = vadd.f32 %v1919, 1.0
        %v2126 = vadd.f32 %v1921, 1.0
        %v2127 = vadd.f32 %v1923, 1.0
        %v2128 = vadd.f32 %v1925, 1.0
        %v2129 = vadd.f32 %v1927, 1.0
        %v2130 = vadd.f32 %v1929, 1.0
        %v2131 = vadd.f32 %v1931, 1.0
        %v2132 = vadd.f32 %v1933, 1.0
        %v2133 = vadd.f32 %v1935, 1.0
        %v2134 = vadd.f32 %v1937, 1.0
        %v2135 = vadd.f32 %v1939, 1.0
        %v2136 = vadd.f32 %v1941, 1.0
        %v2137 = vadd.f32 %v1943, 1.0
        %v2138 = vadd.f32 %v1945, 1.0
        %v2139 = vadd.f32 %v1947, 1.0
        %v2140 = vadd.f32 %v1949, 1.0
        %v2141 = vadd.f32 %v1951, 1.0
        %v2142 = vadd.f32 %v1953, 1.0
        %v2143 = vadd.f32 %v1955, 1.0
        %v2144 = vadd.f32 %v1957, 1.0
        %v2145 = vadd.f32 %v1959, 1.0
        %v2146 = vadd.f32 %v1961, 1.0
        %v2147 = vadd.f32 %v1963, 1.0
        %v2148 = vadd.f32 %v1965, 1.0
        %v2149 = vadd.f32 %v1967, 1.0
        %v2150 = vadd.f32 %v1969, 1.0
        %v2151 = vadd.f32 %v1971, 1.0
        %v2152 = vadd.f32 %v1973, 1.0
        %v2153 = vadd.f32 %v1975, 1.0
        %v2154 = vadd.f32 %v1977, 1.0
        %v2155 = vadd.f32 %v1979, 1.0
        %v2156 = vadd.f32 %v1981, 1.0
        %v2157 = vadd.f32 %v1983, 1.0
        %v2158 = vadd.f32 %v1985, 1.0
        %v2159 = vadd.f32 %v1987, 1.0
        %v2160 = vadd.f32 %v1989, 1.0
        %v2161 = vadd.f32 %v1991, 1.0
        %v2162 = vadd.f32 %v1993, 1.0
        %v2163 = vadd.f32 %v1995, 1.0
        %v2164 = vadd.f32 %v1997, 1.0
        %v2165 = vadd.f32 %v1999, 1.0
        %v2166 = vadd.f32 %v2001, 1.0
        %v2167 = vadd.f32 %v2003, 1.0
        %v2168 = vadd.f32 %v2005, 1.0
        %v2169 = vadd.f32 %v2007, 1.0
        %v2170 = vadd.f32 %v2009, 1.0
        %v2171 = vadd.f32 %v2011, 1.0
        %v2172 = vadd.f32 %v2013, 1.0
        %v2173 = vadd.f32 %v2015, 1.0
        %v2174 = vadd.f32 %v2017, 1.0
        %v2175 = vadd.f32 %v2019, 1.0
        %v2176 = vadd.f32 %v2021, 1.0
        %v2177 = vadd.f32 %v2023, 1.0
        %v2178 = vadd.f32 %v2025, 1.0
        %v2179 = vadd.f32 %v2027, 1.0
        %v2180 = vadd.f32 %v2029, 1.0
        %v2181 = vadd.f32 %v2031, 1.0
        %v2182 = vadd.f32 %v2033, 1.0
        %v2183 = vadd.f32 %v2035, 1.0
        %v2184 = vadd.f32 %v2037, 1.0
        %v2185 = vadd.f32 %v2039, 1.0
        %v2186 = vadd.f32 %v2041, 1.0
        %v2187 = vadd.f32 %v2043, 1.0
        %v2188 = vadd.f32 %v2045, 1.0
        %v2189 = vadd.f32 %v2047, 1.0
        %v2190 = vadd.f32 %v2049, 1.0
        %v2191 = vadd.f32 %v2051, 1.0
        %v2192 = vadd.f32 %v2053, 1.0
        %v2193 = vadd.f32 %v2055, 1.0
        %v2194 = vadd.f32 %v2057, 1.0
        %v2195 = vadd.f32 %v2059, 1.0
        %v2196 = vadd.f32 %v2061, 1.0
        %v2197 = vadd.f32 %v2063, 1.0
        %v2198 = vadd.f32 %v2065, 1.0
        %v2199 = vadd.f32 %v2067, 1.0
        %v2200 = vadd.f32 %v2069, 1.0
        %v2201 = vadd.f32 %v2071, 1.0
        %v2202 = vadd.f32 %v2073, 1.0
        %v2203 = vadd.f32 %v2075, 1.0
        %v2204 = vrcp.pop %v2076
        %v2205 = vrcp.pop %v2077
        %v2206 = vrcp.pop %v2078
        %v2207 = vrcp.pop %v2079
        %v2208 = vrcp.pop %v2080
        %v2209 = vrcp.pop %v2081
        %v2210 = vrcp.pop %v2082
        %v2211 = vrcp.pop %v2083
        %v2212 = vrcp.pop %v2084
        %v2213 = vrcp.pop %v2085
        %v2214 = vrcp.pop %v2086
        %v2215 = vrcp.pop %v2087
        %v2216 = vrcp.pop %v2088
        %v2217 = vrcp.pop %v2089
        %v2218 = vrcp.pop %v2090
        %v2219 = vrcp.pop %v2091
        %v2220 = vrcp.pop %v2092
        %v2221 = vrcp.pop %v2093
        %v2222 = vrcp.pop %v2094
        %v2223 = vrcp.pop %v2095
        %v2224 = vrcp.pop %v2096
        %v2225 = vrcp.pop %v2097
        %v2226 = vrcp.pop %v2098
        %v2227 = vrcp.pop %v2099
        %v2228 = vrcp.pop %v2100
        %v2229 = vrcp.pop %v2101
        %v2230 = vrcp.pop %v2102
        %v2231 = vrcp.pop %v2103
        %v2232 = vrcp.pop %v2104
        %v2233 = vrcp.pop %v2105
        %v2234 = vrcp.pop %v2106
        %v2235 = vrcp.pop %v2107
        %v2236 = vrcp.pop %v2108
        %v2237 = vrcp.pop %v2109
        %v2238 = vrcp.pop %v2110
        %v2239 = vrcp.pop %v2111
        %v2240 = vrcp.pop %v2112
        %v2241 = vrcp.pop %v2113
        %v2242 = vrcp.pop %v2114
        %v2243 = vrcp.pop %v2115
        %v2244 = vrcp.pop %v2116
        %v2245 = vrcp.pop %v2117
        %v2246 = vrcp.pop %v2118
        %v2247 = vrcp.pop %v2119
        %v2248 = vrcp.pop %v2120
        %v2249 = vrcp.pop %v2121
        %v2250 = vrcp.pop %v2122
        %v2251 = vrcp.pop %v2123
        %v2252 = vrcp.pop %v2124
        %v2253 = vrcp.pop %v2125
        %v2254 = vrcp.pop %v2126
        %v2255 = vrcp.pop %v2127
        %v2256 = vrcp.pop %v2128
        %v2257 = vrcp.pop %v2129
        %v2258 = vrcp.pop %v2130
        %v2259 = vrcp.pop %v2131
        %v2260 = vrcp.pop %v2132
        %v2261 = vrcp.pop %v2133
        %v2262 = vrcp.pop %v2134
        %v2263 = vrcp.pop %v2135
        %v2264 = vrcp.pop %v2136
        %v2265 = vrcp.pop %v2137
        %v2266 = vrcp.pop %v2138
        %v2267 = vrcp.pop %v2139
        %v2268 = vrcp.pop %v2140
        %v2269 = vrcp.pop %v2141
        %v2270 = vrcp.pop %v2142
        %v2271 = vrcp.pop %v2143
        %v2272 = vrcp.pop %v2144
        %v2273 = vrcp.pop %v2145
        %v2274 = vrcp.pop %v2146
        %v2275 = vrcp.pop %v2147
        %v2276 = vrcp.pop %v2148
        %v2277 = vrcp.pop %v2149
        %v2278 = vrcp.pop %v2150
        %v2279 = vrcp.pop %v2151
        %v2280 = vrcp.pop %v2152
        %v2281 = vrcp.pop %v2153
        %v2282 = vrcp.pop %v2154
        %v2283 = vrcp.pop %v2155
        %v2284 = vrcp.pop %v2156
        %v2285 = vrcp.pop %v2157
        %v2286 = vrcp.pop %v2158
        %v2287 = vrcp.pop %v2159
        %v2288 = vrcp.pop %v2160
        %v2289 = vrcp.pop %v2161
        %v2290 = vrcp.pop %v2162
        %v2291 = vrcp.pop %v2163
        %v2292 = vrcp.pop %v2164
        %v2293 = vrcp.pop %v2165
        %v2294 = vrcp.pop %v2166
        %v2295 = vrcp.pop %v2167
        %v2296 = vrcp.pop %v2168
        %v2297 = vrcp.pop %v2169
        %v2298 = vrcp.pop %v2170
        %v2299 = vrcp.pop %v2171
        %v2300 = vrcp.pop %v2172
        %v2301 = vrcp.pop %v2173
        %v2302 = vrcp.pop %v2174
        %v2303 = vrcp.pop %v2175
        %v2304 = vrcp.pop %v2176
        %v2305 = vrcp.pop %v2177
        %v2306 = vrcp.pop %v2178
        %v2307 = vrcp.pop %v2179
        %v2308 = vrcp.pop %v2180
        %v2309 = vrcp.pop %v2181
        %v2310 = vrcp.pop %v2182
        %v2311 = vrcp.pop %v2183
        %v2312 = vrcp.pop %v2184
        %v2313 = vrcp.pop %v2185
        %v2314 = vrcp.pop %v2186
        %v2315 = vrcp.pop %v2187
        %v2316 = vrcp.pop %v2188
        %v2317 = vrcp.pop %v2189
        %v2318 = vrcp.pop %v2190
        %v2319 = vrcp.pop %v2191
        %v2320 = vrcp.pop %v2192
        %v2321 = vrcp.pop %v2193
        %v2322 = vrcp.pop %v2194
        %v2323 = vrcp.pop %v2195
        %v2324 = vrcp.pop %v2196
        %v2325 = vrcp.pop %v2197
        %v2326 = vrcp.pop %v2198
        %v2327 = vrcp.pop %v2199
        %v2328 = vrcp.pop %v2200
        %v2329 = vrcp.pop %v2201
        %v2330 = vrcp.pop %v2202
        %v2331 = vrcp.pop %v2203
        %v2332 = vmul.f32 %v1309, %v2204
        %v2333 = vmul.f32 %v1312, %v2205
        %v2334 = vmul.f32 %v1315, %v2206
        %v2335 = vmul.f32 %v1318, %v2207
        %v2336 = vmul.f32 %v1321, %v2208
        %v2337 = vmul.f32 %v1324, %v2209
        %v2338 = vmul.f32 %v1327, %v2210
        %v2339 = vmul.f32 %v1330, %v2211
        %v2340 = vmul.f32 %v1333, %v2212
        %v2341 = vmul.f32 %v1336, %v2213
        %v2342 = vmul.f32 %v1339, %v2214
        %v2343 = vmul.f32 %v1342, %v2215
        %v2344 = vmul.f32 %v1345, %v2216
        %v2345 = vmul.f32 %v1348, %v2217
        %v2346 = vmul.f32 %v1351, %v2218
        %v2347 = vmul.f32 %v1354, %v2219
        %v2348 = vmul.f32 %v1357, %v2220
        %v2349 = vmul.f32 %v1360, %v2221
        %v2350 = vmul.f32 %v1363, %v2222
        %v2351 = vmul.f32 %v1366, %v2223
        %v2352 = vmul.f32 %v1369, %v2224
        %v2353 = vmul.f32 %v1372, %v2225
        %v2354 = vmul.f32 %v1375, %v2226
        %v2355 = vmul.f32 %v1378, %v2227
        %v2356 = vmul.f32 %v1381, %v2228
        %v2357 = vmul.f32 %v1384, %v2229
        %v2358 = vmul.f32 %v1387, %v2230
        %v2359 = vmul.f32 %v1390, %v2231
        %v2360 = vmul.f32 %v1393, %v2232
        %v2361 = vmul.f32 %v1396, %v2233
        %v2362 = vmul.f32 %v1399, %v2234
        %v2363 = vmul.f32 %v1402, %v2235
        %v2364 = vmul.f32 %v1405, %v2236
        %v2365 = vmul.f32 %v1408, %v2237
        %v2366 = vmul.f32 %v1411, %v2238
        %v2367 = vmul.f32 %v1414, %v2239
        %v2368 = vmul.f32 %v1417, %v2240
        %v2369 = vmul.f32 %v1420, %v2241
        %v2370 = vmul.f32 %v1423, %v2242
        %v2371 = vmul.f32 %v1426, %v2243
        %v2372 = vmul.f32 %v1429, %v2244
        %v2373 = vmul.f32 %v1432, %v2245
        %v2374 = vmul.f32 %v1435, %v2246
        %v2375 = vmul.f32 %v1438, %v2247
        %v2376 = vmul.f32 %v1441, %v2248
        %v2377 = vmul.f32 %v1444, %v2249
        %v2378 = vmul.f32 %v1447, %v2250
        %v2379 = vmul.f32 %v1450, %v2251
        %v2380 = vmul.f32 %v1453, %v2252
        %v2381 = vmul.f32 %v1456, %v2253
        %v2382 = vmul.f32 %v1459, %v2254
        %v2383 = vmul.f32 %v1462, %v2255
        %v2384 = vmul.f32 %v1465, %v2256
        %v2385 = vmul.f32 %v1468, %v2257
        %v2386 = vmul.f32 %v1471, %v2258
        %v2387 = vmul.f32 %v1474, %v2259
        %v2388 = vmul.f32 %v1477, %v2260
        %v2389 = vmul.f32 %v1480, %v2261
        %v2390 = vmul.f32 %v1483, %v2262
        %v2391 = vmul.f32 %v1486, %v2263
        %v2392 = vmul.f32 %v1489, %v2264
        %v2393 = vmul.f32 %v1492, %v2265
        %v2394 = vmul.f32 %v1495, %v2266
        %v2395 = vmul.f32 %v1498, %v2267
        %v2396 = vmul.f32 %v1501, %v2268
        %v2397 = vmul.f32 %v1504, %v2269
        %v2398 = vmul.f32 %v1507, %v2270
        %v2399 = vmul.f32 %v1510, %v2271
        %v2400 = vmul.f32 %v1513, %v2272
        %v2401 = vmul.f32 %v1516, %v2273
        %v2402 = vmul.f32 %v1519, %v2274
        %v2403 = vmul.f32 %v1522, %v2275
        %v2404 = vmul.f32 %v1525, %v2276
        %v2405 = vmul.f32 %v1528, %v2277
        %v2406 = vmul.f32 %v1531, %v2278
        %v2407 = vmul.f32 %v1534, %v2279
        %v2408 = vmul.f32 %v1537, %v2280
        %v2409 = vmul.f32 %v1540, %v2281
        %v2410 = vmul.f32 %v1543, %v2282
        %v2411 = vmul.f32 %v1546, %v2283
        %v2412 = vmul.f32 %v1549, %v2284
        %v2413 = vmul.f32 %v1552, %v2285
        %v2414 = vmul.f32 %v1555, %v2286
        %v2415 = vmul.f32 %v1558, %v2287
        %v2416 = vmul.f32 %v1561, %v2288
        %v2417 = vmul.f32 %v1564, %v2289
        %v2418 = vmul.f32 %v1567, %v2290
        %v2419 = vmul.f32 %v1570, %v2291
        %v2420 = vmul.f32 %v1573, %v2292
        %v2421 = vmul.f32 %v1576, %v2293
        %v2422 = vmul.f32 %v1579, %v2294
        %v2423 = vmul.f32 %v1582, %v2295
        %v2424 = vmul.f32 %v1585, %v2296
        %v2425 = vmul.f32 %v1588, %v2297
        %v2426 = vmul.f32 %v1591, %v2298
        %v2427 = vmul.f32 %v1594, %v2299
        %v2428 = vmul.f32 %v1597, %v2300
        %v2429 = vmul.f32 %v1600, %v2301
        %v2430 = vmul.f32 %v1603, %v2302
        %v2431 = vmul.f32 %v1606, %v2303
        %v2432 = vmul.f32 %v1609, %v2304
        %v2433 = vmul.f32 %v1612, %v2305
        %v2434 = vmul.f32 %v1615, %v2306
        %v2435 = vmul.f32 %v1618, %v2307
        %v2436 = vmul.f32 %v1621, %v2308
        %v2437 = vmul.f32 %v1624, %v2309
        %v2438 = vmul.f32 %v1627, %v2310
        %v2439 = vmul.f32 %v1630, %v2311
        %v2440 = vmul.f32 %v1633, %v2312
        %v2441 = vmul.f32 %v1636, %v2313
        %v2442 = vmul.f32 %v1639, %v2314
        %v2443 = vmul.f32 %v1642, %v2315
        %v2444 = vmul.f32 %v1645, %v2316
        %v2445 = vmul.f32 %v1648, %v2317
        %v2446 = vmul.f32 %v1651, %v2318
        %v2447 = vmul.f32 %v1654, %v2319
        %v2448 = vmul.f32 %v1657, %v2320
        %v2449 = vmul.f32 %v1660, %v2321
        %v2450 = vmul.f32 %v1663, %v2322
        %v2451 = vmul.f32 %v1666, %v2323
        %v2452 = vmul.f32 %v1669, %v2324
        %v2453 = vmul.f32 %v1672, %v2325
        %v2454 = vmul.f32 %v1675, %v2326
        %v2455 = vmul.f32 %v1678, %v2327
        %v2456 = vmul.f32 %v1681, %v2328
        %v2457 = vmul.f32 %v1684, %v2329
        %v2458 = vmul.f32 %v1687, %v2330
        %v2459 = vmul.f32 %v1690, %v2331
        %v2460 = vperm.slane %v379, 1
        %2461 = vmatpush.msra.mxu0 %v314
        %2462 = vmatpush.msra.mxu0 %v313
        %2463 = vmatpush.msra.mxu0 %v312
        %2464 = vmatpush.msra.mxu0 %v311
        %2465 = vmatpush.msra.mxu0 %v310
        %2466 = vmatpush.msra.mxu0 %v309
        %2467 = vmatpush.msra.mxu0 %v308
        %2468 = vmatpush.msra.mxu0 %v307
        %2469 = vmatpush.msra.mxu0 %v306
        %2470 = vmatpush.msra.mxu0 %v305
        %2471 = vmatpush.msra.mxu0 %v304
        %2472 = vmatpush.msra.mxu0 %v303
        %2473 = vmatpush.msra.mxu0 %v302
        %2474 = vmatpush.msra.mxu0 %v301
        %2475 = vmatpush.msra.mxu0 %v300
        %2476 = vmatpush.msra.mxu0 %v299
        %2477 = vmatmul.f32.gmra.mxu0 %v2332
        %v2478 = vpop.f32.mrf.mxu0
        %v2479 = vadd.f32 %v2460, %v2478
        %2480 = vmatmul.f32.gmra.mxu0 %v2333
        %v2481 = vpop.f32.mrf.mxu0
        %v2482 = vadd.f32 %v2460, %v2481
        %2483 = vmatmul.f32.gmra.mxu0 %v2334
        %v2484 = vpop.f32.mrf.mxu0
        %v2485 = vadd.f32 %v2460, %v2484
        %2486 = vmatmul.f32.gmra.mxu0 %v2335
        %v2487 = vpop.f32.mrf.mxu0
        %v2488 = vadd.f32 %v2460, %v2487
        %2489 = vmatmul.f32.gmra.mxu0 %v2336
        %v2490 = vpop.f32.mrf.mxu0
        %v2491 = vadd.f32 %v2460, %v2490
        %2492 = vmatmul.f32.gmra.mxu0 %v2337
        %v2493 = vpop.f32.mrf.mxu0
        %v2494 = vadd.f32 %v2460, %v2493
        %2495 = vmatmul.f32.gmra.mxu0 %v2338
        %v2496 = vpop.f32.mrf.mxu0
        %v2497 = vadd.f32 %v2460, %v2496
        %2498 = vmatmul.f32.gmra.mxu0 %v2339
        %v2499 = vpop.f32.mrf.mxu0
        %v2500 = vadd.f32 %v2460, %v2499
        %2501 = vmatmul.f32.gmra.mxu0 %v2340
        %v2502 = vpop.f32.mrf.mxu0
        %v2503 = vadd.f32 %v2460, %v2502
        %2504 = vmatmul.f32.gmra.mxu0 %v2341
        %v2505 = vpop.f32.mrf.mxu0
        %v2506 = vadd.f32 %v2460, %v2505
        %2507 = vmatmul.f32.gmra.mxu0 %v2342
        %v2508 = vpop.f32.mrf.mxu0
        %v2509 = vadd.f32 %v2460, %v2508
        %2510 = vmatmul.f32.gmra.mxu0 %v2343
        %v2511 = vpop.f32.mrf.mxu0
        %v2512 = vadd.f32 %v2460, %v2511
        %2513 = vmatmul.f32.gmra.mxu0 %v2344
        %v2514 = vpop.f32.mrf.mxu0
        %v2515 = vadd.f32 %v2460, %v2514
        %2516 = vmatmul.f32.gmra.mxu0 %v2345
        %v2517 = vpop.f32.mrf.mxu0
        %v2518 = vadd.f32 %v2460, %v2517
        %2519 = vmatmul.f32.gmra.mxu0 %v2346
        %v2520 = vpop.f32.mrf.mxu0
        %v2521 = vadd.f32 %v2460, %v2520
        %2522 = vmatmul.f32.gmra.mxu0 %v2347
        %v2523 = vpop.f32.mrf.mxu0
        %v2524 = vadd.f32 %v2460, %v2523
        %2525 = vmatmul.f32.gmra.mxu0 %v2348
        %v2526 = vpop.f32.mrf.mxu0
        %v2527 = vadd.f32 %v2460, %v2526
        %2528 = vmatmul.f32.gmra.mxu0 %v2349
        %v2529 = vpop.f32.mrf.mxu0
        %v2530 = vadd.f32 %v2460, %v2529
        %2531 = vmatmul.f32.gmra.mxu0 %v2350
        %v2532 = vpop.f32.mrf.mxu0
        %v2533 = vadd.f32 %v2460, %v2532
        %2534 = vmatmul.f32.gmra.mxu0 %v2351
        %v2535 = vpop.f32.mrf.mxu0
        %v2536 = vadd.f32 %v2460, %v2535
        %2537 = vmatmul.f32.gmra.mxu0 %v2352
        %v2538 = vpop.f32.mrf.mxu0
        %v2539 = vadd.f32 %v2460, %v2538
        %2540 = vmatmul.f32.gmra.mxu0 %v2353
        %v2541 = vpop.f32.mrf.mxu0
        %v2542 = vadd.f32 %v2460, %v2541
        %2543 = vmatmul.f32.gmra.mxu0 %v2354
        %v2544 = vpop.f32.mrf.mxu0
        %v2545 = vadd.f32 %v2460, %v2544
        %2546 = vmatmul.f32.gmra.mxu0 %v2355
        %v2547 = vpop.f32.mrf.mxu0
        %v2548 = vadd.f32 %v2460, %v2547
        %2549 = vmatmul.f32.gmra.mxu0 %v2356
        %v2550 = vpop.f32.mrf.mxu0
        %v2551 = vadd.f32 %v2460, %v2550
        %2552 = vmatmul.f32.gmra.mxu0 %v2357
        %v2553 = vpop.f32.mrf.mxu0
        %v2554 = vadd.f32 %v2460, %v2553
        %2555 = vmatmul.f32.gmra.mxu0 %v2358
        %v2556 = vpop.f32.mrf.mxu0
        %v2557 = vadd.f32 %v2460, %v2556
        %2558 = vmatmul.f32.gmra.mxu0 %v2359
        %v2559 = vpop.f32.mrf.mxu0
        %v2560 = vadd.f32 %v2460, %v2559
        %2561 = vmatmul.f32.gmra.mxu0 %v2360
        %v2562 = vpop.f32.mrf.mxu0
        %v2563 = vadd.f32 %v2460, %v2562
        %2564 = vmatmul.f32.gmra.mxu0 %v2361
        %v2565 = vpop.f32.mrf.mxu0
        %v2566 = vadd.f32 %v2460, %v2565
        %2567 = vmatmul.f32.gmra.mxu0 %v2362
        %v2568 = vpop.f32.mrf.mxu0
        %v2569 = vadd.f32 %v2460, %v2568
        %2570 = vmatmul.f32.gmra.mxu0 %v2363
        %v2571 = vpop.f32.mrf.mxu0
        %v2572 = vadd.f32 %v2460, %v2571
        %2573 = vmatmul.f32.gmra.mxu0 %v2364
        %v2574 = vpop.f32.mrf.mxu0
        %v2575 = vadd.f32 %v2460, %v2574
        %2576 = vmatmul.f32.gmra.mxu0 %v2365
        %v2577 = vpop.f32.mrf.mxu0
        %v2578 = vadd.f32 %v2460, %v2577
        %2579 = vmatmul.f32.gmra.mxu0 %v2366
        %v2580 = vpop.f32.mrf.mxu0
        %v2581 = vadd.f32 %v2460, %v2580
        %2582 = vmatmul.f32.gmra.mxu0 %v2367
        %v2583 = vpop.f32.mrf.mxu0
        %v2584 = vadd.f32 %v2460, %v2583
        %2585 = vmatmul.f32.gmra.mxu0 %v2368
        %v2586 = vpop.f32.mrf.mxu0
        %v2587 = vadd.f32 %v2460, %v2586
        %2588 = vmatmul.f32.gmra.mxu0 %v2369
        %v2589 = vpop.f32.mrf.mxu0
        %v2590 = vadd.f32 %v2460, %v2589
        %2591 = vmatmul.f32.gmra.mxu0 %v2370
        %v2592 = vpop.f32.mrf.mxu0
        %v2593 = vadd.f32 %v2460, %v2592
        %2594 = vmatmul.f32.gmra.mxu0 %v2371
        %v2595 = vpop.f32.mrf.mxu0
        %v2596 = vadd.f32 %v2460, %v2595
        %2597 = vmatmul.f32.gmra.mxu0 %v2372
        %v2598 = vpop.f32.mrf.mxu0
        %v2599 = vadd.f32 %v2460, %v2598
        %2600 = vmatmul.f32.gmra.mxu0 %v2373
        %v2601 = vpop.f32.mrf.mxu0
        %v2602 = vadd.f32 %v2460, %v2601
        %2603 = vmatmul.f32.gmra.mxu0 %v2374
        %v2604 = vpop.f32.mrf.mxu0
        %v2605 = vadd.f32 %v2460, %v2604
        %2606 = vmatmul.f32.gmra.mxu0 %v2375
        %v2607 = vpop.f32.mrf.mxu0
        %v2608 = vadd.f32 %v2460, %v2607
        %2609 = vmatmul.f32.gmra.mxu0 %v2376
        %v2610 = vpop.f32.mrf.mxu0
        %v2611 = vadd.f32 %v2460, %v2610
        %2612 = vmatmul.f32.gmra.mxu0 %v2377
        %v2613 = vpop.f32.mrf.mxu0
        %v2614 = vadd.f32 %v2460, %v2613
        %2615 = vmatmul.f32.gmra.mxu0 %v2378
        %v2616 = vpop.f32.mrf.mxu0
        %v2617 = vadd.f32 %v2460, %v2616
        %2618 = vmatmul.f32.gmra.mxu0 %v2379
        %v2619 = vpop.f32.mrf.mxu0
        %v2620 = vadd.f32 %v2460, %v2619
        %2621 = vmatmul.f32.gmra.mxu0 %v2380
        %v2622 = vpop.f32.mrf.mxu0
        %v2623 = vadd.f32 %v2460, %v2622
        %2624 = vmatmul.f32.gmra.mxu0 %v2381
        %v2625 = vpop.f32.mrf.mxu0
        %v2626 = vadd.f32 %v2460, %v2625
        %2627 = vmatmul.f32.gmra.mxu0 %v2382
        %v2628 = vpop.f32.mrf.mxu0
        %v2629 = vadd.f32 %v2460, %v2628
        %2630 = vmatmul.f32.gmra.mxu0 %v2383
        %v2631 = vpop.f32.mrf.mxu0
        %v2632 = vadd.f32 %v2460, %v2631
        %2633 = vmatmul.f32.gmra.mxu0 %v2384
        %v2634 = vpop.f32.mrf.mxu0
        %v2635 = vadd.f32 %v2460, %v2634
        %2636 = vmatmul.f32.gmra.mxu0 %v2385
        %v2637 = vpop.f32.mrf.mxu0
        %v2638 = vadd.f32 %v2460, %v2637
        %2639 = vmatmul.f32.gmra.mxu0 %v2386
        %v2640 = vpop.f32.mrf.mxu0
        %v2641 = vadd.f32 %v2460, %v2640
        %2642 = vmatmul.f32.gmra.mxu0 %v2387
        %v2643 = vpop.f32.mrf.mxu0
        %v2644 = vadd.f32 %v2460, %v2643
        %2645 = vmatmul.f32.gmra.mxu0 %v2388
        %v2646 = vpop.f32.mrf.mxu0
        %v2647 = vadd.f32 %v2460, %v2646
        %2648 = vmatmul.f32.gmra.mxu0 %v2389
        %v2649 = vpop.f32.mrf.mxu0
        %v2650 = vadd.f32 %v2460, %v2649
        %2651 = vmatmul.f32.gmra.mxu0 %v2390
        %v2652 = vpop.f32.mrf.mxu0
        %v2653 = vadd.f32 %v2460, %v2652
        %2654 = vmatmul.f32.gmra.mxu0 %v2391
        %v2655 = vpop.f32.mrf.mxu0
        %v2656 = vadd.f32 %v2460, %v2655
        %2657 = vmatmul.f32.gmra.mxu0 %v2392
        %v2658 = vpop.f32.mrf.mxu0
        %v2659 = vadd.f32 %v2460, %v2658
        %2660 = vmatmul.f32.gmra.mxu0 %v2393
        %v2661 = vpop.f32.mrf.mxu0
        %v2662 = vadd.f32 %v2460, %v2661
        %2663 = vmatmul.f32.gmra.mxu0 %v2394
        %v2664 = vpop.f32.mrf.mxu0
        %v2665 = vadd.f32 %v2460, %v2664
        %2666 = vmatmul.f32.gmra.mxu0 %v2395
        %v2667 = vpop.f32.mrf.mxu0
        %v2668 = vadd.f32 %v2460, %v2667
        %2669 = vmatmul.f32.gmra.mxu0 %v2396
        %v2670 = vpop.f32.mrf.mxu0
        %v2671 = vadd.f32 %v2460, %v2670
        %2672 = vmatmul.f32.gmra.mxu0 %v2397
        %v2673 = vpop.f32.mrf.mxu0
        %v2674 = vadd.f32 %v2460, %v2673
        %2675 = vmatmul.f32.gmra.mxu0 %v2398
        %v2676 = vpop.f32.mrf.mxu0
        %v2677 = vadd.f32 %v2460, %v2676
        %2678 = vmatmul.f32.gmra.mxu0 %v2399
        %v2679 = vpop.f32.mrf.mxu0
        %v2680 = vadd.f32 %v2460, %v2679
        %2681 = vmatmul.f32.gmra.mxu0 %v2400
        %v2682 = vpop.f32.mrf.mxu0
        %v2683 = vadd.f32 %v2460, %v2682
        %2684 = vmatmul.f32.gmra.mxu0 %v2401
        %v2685 = vpop.f32.mrf.mxu0
        %v2686 = vadd.f32 %v2460, %v2685
        %2687 = vmatmul.f32.gmra.mxu0 %v2402
        %v2688 = vpop.f32.mrf.mxu0
        %v2689 = vadd.f32 %v2460, %v2688
        %2690 = vmatmul.f32.gmra.mxu0 %v2403
        %v2691 = vpop.f32.mrf.mxu0
        %v2692 = vadd.f32 %v2460, %v2691
        %2693 = vmatmul.f32.gmra.mxu0 %v2404
        %v2694 = vpop.f32.mrf.mxu0
        %v2695 = vadd.f32 %v2460, %v2694
        %2696 = vmatmul.f32.gmra.mxu0 %v2405
        %v2697 = vpop.f32.mrf.mxu0
        %v2698 = vadd.f32 %v2460, %v2697
        %2699 = vmatmul.f32.gmra.mxu0 %v2406
        %v2700 = vpop.f32.mrf.mxu0
        %v2701 = vadd.f32 %v2460, %v2700
        %2702 = vmatmul.f32.gmra.mxu0 %v2407
        %v2703 = vpop.f32.mrf.mxu0
        %v2704 = vadd.f32 %v2460, %v2703
        %2705 = vmatmul.f32.gmra.mxu0 %v2408
        %v2706 = vpop.f32.mrf.mxu0
        %v2707 = vadd.f32 %v2460, %v2706
        %2708 = vmatmul.f32.gmra.mxu0 %v2409
        %v2709 = vpop.f32.mrf.mxu0
        %v2710 = vadd.f32 %v2460, %v2709
        %2711 = vmatmul.f32.gmra.mxu0 %v2410
        %v2712 = vpop.f32.mrf.mxu0
        %v2713 = vadd.f32 %v2460, %v2712
        %2714 = vmatmul.f32.gmra.mxu0 %v2411
        %v2715 = vpop.f32.mrf.mxu0
        %v2716 = vadd.f32 %v2460, %v2715
        %2717 = vmatmul.f32.gmra.mxu0 %v2412
        %v2718 = vpop.f32.mrf.mxu0
        %v2719 = vadd.f32 %v2460, %v2718
        %2720 = vmatmul.f32.gmra.mxu0 %v2413
        %v2721 = vpop.f32.mrf.mxu0
        %v2722 = vadd.f32 %v2460, %v2721
        %2723 = vmatmul.f32.gmra.mxu0 %v2414
        %v2724 = vpop.f32.mrf.mxu0
        %v2725 = vadd.f32 %v2460, %v2724
        %2726 = vmatmul.f32.gmra.mxu0 %v2415
        %v2727 = vpop.f32.mrf.mxu0
        %v2728 = vadd.f32 %v2460, %v2727
        %2729 = vmatmul.f32.gmra.mxu0 %v2416
        %v2730 = vpop.f32.mrf.mxu0
        %v2731 = vadd.f32 %v2460, %v2730
        %2732 = vmatmul.f32.gmra.mxu0 %v2417
        %v2733 = vpop.f32.mrf.mxu0
        %v2734 = vadd.f32 %v2460, %v2733
        %2735 = vmatmul.f32.gmra.mxu0 %v2418
        %v2736 = vpop.f32.mrf.mxu0
        %v2737 = vadd.f32 %v2460, %v2736
        %2738 = vmatmul.f32.gmra.mxu0 %v2419
        %v2739 = vpop.f32.mrf.mxu0
        %v2740 = vadd.f32 %v2460, %v2739
        %2741 = vmatmul.f32.gmra.mxu0 %v2420
        %v2742 = vpop.f32.mrf.mxu0
        %v2743 = vadd.f32 %v2460, %v2742
        %2744 = vmatmul.f32.gmra.mxu0 %v2421
        %v2745 = vpop.f32.mrf.mxu0
        %v2746 = vadd.f32 %v2460, %v2745
        %2747 = vmatmul.f32.gmra.mxu0 %v2422
        %v2748 = vpop.f32.mrf.mxu0
        %v2749 = vadd.f32 %v2460, %v2748
        %2750 = vmatmul.f32.gmra.mxu0 %v2423
        %v2751 = vpop.f32.mrf.mxu0
        %v2752 = vadd.f32 %v2460, %v2751
        %2753 = vmatmul.f32.gmra.mxu0 %v2424
        %v2754 = vpop.f32.mrf.mxu0
        %v2755 = vadd.f32 %v2460, %v2754
        %2756 = vmatmul.f32.gmra.mxu0 %v2425
        %v2757 = vpop.f32.mrf.mxu0
        %v2758 = vadd.f32 %v2460, %v2757
        %2759 = vmatmul.f32.gmra.mxu0 %v2426
        %v2760 = vpop.f32.mrf.mxu0
        %v2761 = vadd.f32 %v2460, %v2760
        %2762 = vmatmul.f32.gmra.mxu0 %v2427
        %v2763 = vpop.f32.mrf.mxu0
        %v2764 = vadd.f32 %v2460, %v2763
        %2765 = vmatmul.f32.gmra.mxu0 %v2428
        %v2766 = vpop.f32.mrf.mxu0
        %v2767 = vadd.f32 %v2460, %v2766
        %2768 = vmatmul.f32.gmra.mxu0 %v2429
        %v2769 = vpop.f32.mrf.mxu0
        %v2770 = vadd.f32 %v2460, %v2769
        %2771 = vmatmul.f32.gmra.mxu0 %v2430
        %v2772 = vpop.f32.mrf.mxu0
        %v2773 = vadd.f32 %v2460, %v2772
        %2774 = vmatmul.f32.gmra.mxu0 %v2431
        %v2775 = vpop.f32.mrf.mxu0
        %v2776 = vadd.f32 %v2460, %v2775
        %2777 = vmatmul.f32.gmra.mxu0 %v2432
        %v2778 = vpop.f32.mrf.mxu0
        %v2779 = vadd.f32 %v2460, %v2778
        %2780 = vmatmul.f32.gmra.mxu0 %v2433
        %v2781 = vpop.f32.mrf.mxu0
        %v2782 = vadd.f32 %v2460, %v2781
        %2783 = vmatmul.f32.gmra.mxu0 %v2434
        %v2784 = vpop.f32.mrf.mxu0
        %v2785 = vadd.f32 %v2460, %v2784
        %2786 = vmatmul.f32.gmra.mxu0 %v2435
        %v2787 = vpop.f32.mrf.mxu0
        %v2788 = vadd.f32 %v2460, %v2787
        %2789 = vmatmul.f32.gmra.mxu0 %v2436
        %v2790 = vpop.f32.mrf.mxu0
        %v2791 = vadd.f32 %v2460, %v2790
        %2792 = vmatmul.f32.gmra.mxu0 %v2437
        %v2793 = vpop.f32.mrf.mxu0
        %v2794 = vadd.f32 %v2460, %v2793
        %2795 = vmatmul.f32.gmra.mxu0 %v2438
        %v2796 = vpop.f32.mrf.mxu0
        %v2797 = vadd.f32 %v2460, %v2796
        %2798 = vmatmul.f32.gmra.mxu0 %v2439
        %v2799 = vpop.f32.mrf.mxu0
        %v2800 = vadd.f32 %v2460, %v2799
        %2801 = vmatmul.f32.gmra.mxu0 %v2440
        %v2802 = vpop.f32.mrf.mxu0
        %v2803 = vadd.f32 %v2460, %v2802
        %2804 = vmatmul.f32.gmra.mxu0 %v2441
        %v2805 = vpop.f32.mrf.mxu0
        %v2806 = vadd.f32 %v2460, %v2805
        %2807 = vmatmul.f32.gmra.mxu0 %v2442
        %v2808 = vpop.f32.mrf.mxu0
        %v2809 = vadd.f32 %v2460, %v2808
        %2810 = vmatmul.f32.gmra.mxu0 %v2443
        %v2811 = vpop.f32.mrf.mxu0
        %v2812 = vadd.f32 %v2460, %v2811
        %2813 = vmatmul.f32.gmra.mxu0 %v2444
        %v2814 = vpop.f32.mrf.mxu0
        %v2815 = vadd.f32 %v2460, %v2814
        %2816 = vmatmul.f32.gmra.mxu0 %v2445
        %v2817 = vpop.f32.mrf.mxu0
        %v2818 = vadd.f32 %v2460, %v2817
        %2819 = vmatmul.f32.gmra.mxu0 %v2446
        %v2820 = vpop.f32.mrf.mxu0
        %v2821 = vadd.f32 %v2460, %v2820
        %2822 = vmatmul.f32.gmra.mxu0 %v2447
        %v2823 = vpop.f32.mrf.mxu0
        %v2824 = vadd.f32 %v2460, %v2823
        %2825 = vmatmul.f32.gmra.mxu0 %v2448
        %v2826 = vpop.f32.mrf.mxu0
        %v2827 = vadd.f32 %v2460, %v2826
        %2828 = vmatmul.f32.gmra.mxu0 %v2449
        %v2829 = vpop.f32.mrf.mxu0
        %v2830 = vadd.f32 %v2460, %v2829
        %2831 = vmatmul.f32.gmra.mxu0 %v2450
        %v2832 = vpop.f32.mrf.mxu0
        %v2833 = vadd.f32 %v2460, %v2832
        %2834 = vmatmul.f32.gmra.mxu0 %v2451
        %v2835 = vpop.f32.mrf.mxu0
        %v2836 = vadd.f32 %v2460, %v2835
        %2837 = vmatmul.f32.gmra.mxu0 %v2452
        %v2838 = vpop.f32.mrf.mxu0
        %v2839 = vadd.f32 %v2460, %v2838
        %2840 = vmatmul.f32.gmra.mxu0 %v2453
        %v2841 = vpop.f32.mrf.mxu0
        %v2842 = vadd.f32 %v2460, %v2841
        %2843 = vmatmul.f32.gmra.mxu0 %v2454
        %v2844 = vpop.f32.mrf.mxu0
        %v2845 = vadd.f32 %v2460, %v2844
        %2846 = vmatmul.f32.gmra.mxu0 %v2455
        %v2847 = vpop.f32.mrf.mxu0
        %v2848 = vadd.f32 %v2460, %v2847
        %2849 = vmatmul.f32.gmra.mxu0 %v2456
        %v2850 = vpop.f32.mrf.mxu0
        %v2851 = vadd.f32 %v2460, %v2850
        %2852 = vmatmul.f32.gmra.mxu0 %v2457
        %v2853 = vpop.f32.mrf.mxu0
        %v2854 = vadd.f32 %v2460, %v2853
        %2855 = vmatmul.f32.gmra.mxu0 %v2458
        %v2856 = vpop.f32.mrf.mxu0
        %v2857 = vadd.f32 %v2460, %v2856
        %2858 = vmatmul.f32.gmra.mxu0 %v2459
        %v2859 = vpop.f32.mrf.mxu0
        %v2860 = vadd.f32 %v2460, %v2859
        %2861 = vdwg.mxu0
        %v2862 = vmul.f32 %v2479, %v511
        %v2863 = vmul.f32 %v2482, %v512
        %v2864 = vmul.f32 %v2485, %v513
        %v2865 = vmul.f32 %v2488, %v514
        %v2866 = vmul.f32 %v2491, %v515
        %v2867 = vmul.f32 %v2494, %v516
        %v2868 = vmul.f32 %v2497, %v517
        %v2869 = vmul.f32 %v2500, %v518
        %v2870 = vmul.f32 %v2503, %v519
        %v2871 = vmul.f32 %v2506, %v520
        %v2872 = vmul.f32 %v2509, %v521
        %v2873 = vmul.f32 %v2512, %v522
        %v2874 = vmul.f32 %v2515, %v523
        %v2875 = vmul.f32 %v2518, %v524
        %v2876 = vmul.f32 %v2521, %v525
        %v2877 = vmul.f32 %v2524, %v526
        %v2878 = vmul.f32 %v2527, %v527
        %v2879 = vmul.f32 %v2530, %v528
        %v2880 = vmul.f32 %v2533, %v529
        %v2881 = vmul.f32 %v2536, %v530
        %v2882 = vmul.f32 %v2539, %v531
        %v2883 = vmul.f32 %v2542, %v532
        %v2884 = vmul.f32 %v2545, %v533
        %v2885 = vmul.f32 %v2548, %v534
        %v2886 = vmul.f32 %v2551, %v535
        %v2887 = vmul.f32 %v2554, %v536
        %v2888 = vmul.f32 %v2557, %v537
        %v2889 = vmul.f32 %v2560, %v538
        %v2890 = vmul.f32 %v2563, %v539
        %v2891 = vmul.f32 %v2566, %v540
        %v2892 = vmul.f32 %v2569, %v541
        %v2893 = vmul.f32 %v2572, %v542
        %v2894 = vmul.f32 %v2575, %v543
        %v2895 = vmul.f32 %v2578, %v544
        %v2896 = vmul.f32 %v2581, %v545
        %v2897 = vmul.f32 %v2584, %v546
        %v2898 = vmul.f32 %v2587, %v547
        %v2899 = vmul.f32 %v2590, %v548
        %v2900 = vmul.f32 %v2593, %v549
        %v2901 = vmul.f32 %v2596, %v550
        %v2902 = vmul.f32 %v2599, %v551
        %v2903 = vmul.f32 %v2602, %v552
        %v2904 = vmul.f32 %v2605, %v553
        %v2905 = vmul.f32 %v2608, %v554
        %v2906 = vmul.f32 %v2611, %v555
        %v2907 = vmul.f32 %v2614, %v556
        %v2908 = vmul.f32 %v2617, %v557
        %v2909 = vmul.f32 %v2620, %v558
        %v2910 = vmul.f32 %v2623, %v559
        %v2911 = vmul.f32 %v2626, %v560
        %v2912 = vmul.f32 %v2629, %v561
        %v2913 = vmul.f32 %v2632, %v562
        %v2914 = vmul.f32 %v2635, %v563
        %v2915 = vmul.f32 %v2638, %v564
        %v2916 = vmul.f32 %v2641, %v565
        %v2917 = vmul.f32 %v2644, %v566
        %v2918 = vmul.f32 %v2647, %v567
        %v2919 = vmul.f32 %v2650, %v568
        %v2920 = vmul.f32 %v2653, %v569
        %v2921 = vmul.f32 %v2656, %v570
        %v2922 = vmul.f32 %v2659, %v571
        %v2923 = vmul.f32 %v2662, %v572
        %v2924 = vmul.f32 %v2665, %v573
        %v2925 = vmul.f32 %v2668, %v574
        %v2926 = vmul.f32 %v2671, %v575
        %v2927 = vmul.f32 %v2674, %v576
        %v2928 = vmul.f32 %v2677, %v577
        %v2929 = vmul.f32 %v2680, %v578
        %v2930 = vmul.f32 %v2683, %v579
        %v2931 = vmul.f32 %v2686, %v580
        %v2932 = vmul.f32 %v2689, %v581
        %v2933 = vmul.f32 %v2692, %v582
        %v2934 = vmul.f32 %v2695, %v583
        %v2935 = vmul.f32 %v2698, %v584
        %v2936 = vmul.f32 %v2701, %v585
        %v2937 = vmul.f32 %v2704, %v586
        %v2938 = vmul.f32 %v2707, %v587
        %v2939 = vmul.f32 %v2710, %v588
        %v2940 = vmul.f32 %v2713, %v589
        %v2941 = vmul.f32 %v2716, %v590
        %v2942 = vmul.f32 %v2719, %v591
        %v2943 = vmul.f32 %v2722, %v592
        %v2944 = vmul.f32 %v2725, %v593
        %v2945 = vmul.f32 %v2728, %v594
        %v2946 = vmul.f32 %v2731, %v595
        %v2947 = vmul.f32 %v2734, %v596
        %v2948 = vmul.f32 %v2737, %v597
        %v2949 = vmul.f32 %v2740, %v598
        %v2950 = vmul.f32 %v2743, %v599
        %v2951 = vmul.f32 %v2746, %v600
        %v2952 = vmul.f32 %v2749, %v601
        %v2953 = vmul.f32 %v2752, %v602
        %v2954 = vmul.f32 %v2755, %v603
        %v2955 = vmul.f32 %v2758, %v604
        %v2956 = vmul.f32 %v2761, %v605
        %v2957 = vmul.f32 %v2764, %v606
        %v2958 = vmul.f32 %v2767, %v607
        %v2959 = vmul.f32 %v2770, %v608
        %v2960 = vmul.f32 %v2773, %v609
        %v2961 = vmul.f32 %v2776, %v610
        %v2962 = vmul.f32 %v2779, %v611
        %v2963 = vmul.f32 %v2782, %v612
        %v2964 = vmul.f32 %v2785, %v613
        %v2965 = vmul.f32 %v2788, %v614
        %v2966 = vmul.f32 %v2791, %v615
        %v2967 = vmul.f32 %v2794, %v616
        %v2968 = vmul.f32 %v2797, %v617
        %v2969 = vmul.f32 %v2800, %v618
        %v2970 = vmul.f32 %v2803, %v619
        %v2971 = vmul.f32 %v2806, %v620
        %v2972 = vmul.f32 %v2809, %v621
        %v2973 = vmul.f32 %v2812, %v622
        %v2974 = vmul.f32 %v2815, %v623
        %v2975 = vmul.f32 %v2818, %v624
        %v2976 = vmul.f32 %v2821, %v625
        %v2977 = vmul.f32 %v2824, %v626
        %v2978 = vmul.f32 %v2827, %v627
        %v2979 = vmul.f32 %v2830, %v628
        %v2980 = vmul.f32 %v2833, %v629
        %v2981 = vmul.f32 %v2836, %v630
        %v2982 = vmul.f32 %v2839, %v631
        %v2983 = vmul.f32 %v2842, %v632
        %v2984 = vmul.f32 %v2845, %v633
        %v2985 = vmul.f32 %v2848, %v634
        %v2986 = vmul.f32 %v2851, %v635
        %v2987 = vmul.f32 %v2854, %v636
        %v2988 = vmul.f32 %v2857, %v637
        %v2989 = vmul.f32 %v2860, %v638
        %2990 = vmatpush.msra.mxu0 %v330
        %2991 = vmatpush.msra.mxu0 %v329
        %2992 = vmatpush.msra.mxu0 %v328
        %2993 = vmatpush.msra.mxu0 %v327
        %2994 = vmatpush.msra.mxu0 %v326
        %2995 = vmatpush.msra.mxu0 %v325
        %2996 = vmatpush.msra.mxu0 %v324
        %2997 = vmatpush.msra.mxu0 %v323
        %2998 = vmatpush.msra.mxu0 %v322
        %2999 = vmatpush.msra.mxu0 %v321
        %3000 = vmatpush.msra.mxu0 %v320
        %3001 = vmatpush.msra.mxu0 %v319
        %3002 = vmatpush.msra.mxu0 %v318
        %3003 = vmatpush.msra.mxu0 %v317
        %3004 = vmatpush.msra.mxu0 %v316
        %3005 = vmatpush.msra.mxu0 %v315
        %3006 = vmatmul.f32.gmra.mxu0 %v639
        %v3007 = vpop.f32.mrf.mxu0
        %v3008 = vadd.f32 0.0, %v3007
        %3009 = vmatmul.f32.gmra.mxu0 %v640
        %v3010 = vpop.f32.mrf.mxu0
        %v3011 = vadd.f32 0.0, %v3010
        %3012 = vmatmul.f32.gmra.mxu0 %v641
        %v3013 = vpop.f32.mrf.mxu0
        %v3014 = vadd.f32 0.0, %v3013
        %3015 = vmatmul.f32.gmra.mxu0 %v642
        %v3016 = vpop.f32.mrf.mxu0
        %v3017 = vadd.f32 0.0, %v3016
        %3018 = vmatmul.f32.gmra.mxu0 %v643
        %v3019 = vpop.f32.mrf.mxu0
        %v3020 = vadd.f32 0.0, %v3019
        %3021 = vmatmul.f32.gmra.mxu0 %v644
        %v3022 = vpop.f32.mrf.mxu0
        %v3023 = vadd.f32 0.0, %v3022
        %3024 = vmatmul.f32.gmra.mxu0 %v645
        %v3025 = vpop.f32.mrf.mxu0
        %v3026 = vadd.f32 0.0, %v3025
        %3027 = vmatmul.f32.gmra.mxu0 %v646
        %v3028 = vpop.f32.mrf.mxu0
        %v3029 = vadd.f32 0.0, %v3028
        %3030 = vdwg.mxu0
        %v3031 = vperm.slane %v3008, 0
        %v3032 = vperm.slane %v3014, 0
        %v3033 = vperm.slane %v3020, 0
        %v3034 = vperm.slane %v3026, 0
        %v3035 = vmul.f32 %v2862, %v3031
        %v3036 = vmul.f32 %v2863, %v3031
        %v3037 = vmul.f32 %v2894, %v3032
        %v3038 = vmul.f32 %v2895, %v3032
        %v3039 = vmul.f32 %v2926, %v3033
        %v3040 = vmul.f32 %v2927, %v3033
        %v3041 = vmul.f32 %v2958, %v3034
        %v3042 = vmul.f32 %v2959, %v3034
        %v3043 = vadd.f32 %v3035, 0.0
        %v3044 = vadd.f32 %v3036, 0.0
        %v3045 = vadd.f32 %v3037, 0.0
        %v3046 = vadd.f32 %v3038, 0.0
        %v3047 = vadd.f32 %v3039, 0.0
        %v3048 = vadd.f32 %v3040, 0.0
        %v3049 = vadd.f32 %v3041, 0.0
        %v3050 = vadd.f32 %v3042, 0.0
        %v3051 = vperm.slane %v3008, 1
        %v3052 = vperm.slane %v3014, 1
        %v3053 = vperm.slane %v3020, 1
        %v3054 = vperm.slane %v3026, 1
        %v3055 = vmul.f32 %v2864, %v3051
        %v3056 = vmul.f32 %v2865, %v3051
        %v3057 = vmul.f32 %v2896, %v3052
        %v3058 = vmul.f32 %v2897, %v3052
        %v3059 = vmul.f32 %v2928, %v3053
        %v3060 = vmul.f32 %v2929, %v3053
        %v3061 = vmul.f32 %v2960, %v3054
        %v3062 = vmul.f32 %v2961, %v3054
        %v3063 = vadd.f32 %v3043, %v3055
        %v3064 = vadd.f32 %v3044, %v3056
        %v3065 = vadd.f32 %v3045, %v3057
        %v3066 = vadd.f32 %v3046, %v3058
        %v3067 = vadd.f32 %v3047, %v3059
        %v3068 = vadd.f32 %v3048, %v3060
        %v3069 = vadd.f32 %v3049, %v3061
        %v3070 = vadd.f32 %v3050, %v3062
        %v3071 = vperm.slane %v3008, 2
        %v3072 = vperm.slane %v3014, 2
        %v3073 = vperm.slane %v3020, 2
        %v3074 = vperm.slane %v3026, 2
        %v3075 = vmul.f32 %v2866, %v3071
        %v3076 = vmul.f32 %v2867, %v3071
        %v3077 = vmul.f32 %v2898, %v3072
        %v3078 = vmul.f32 %v2899, %v3072
        %v3079 = vmul.f32 %v2930, %v3073
        %v3080 = vmul.f32 %v2931, %v3073
        %v3081 = vmul.f32 %v2962, %v3074
        %v3082 = vmul.f32 %v2963, %v3074
        %v3083 = vadd.f32 %v3063, %v3075
        %v3084 = vadd.f32 %v3064, %v3076
        %v3085 = vadd.f32 %v3065, %v3077
        %v3086 = vadd.f32 %v3066, %v3078
        %v3087 = vadd.f32 %v3067, %v3079
        %v3088 = vadd.f32 %v3068, %v3080
        %v3089 = vadd.f32 %v3069, %v3081
        %v3090 = vadd.f32 %v3070, %v3082
        %v3091 = vperm.slane %v3008, 3
        %v3092 = vperm.slane %v3014, 3
        %v3093 = vperm.slane %v3020, 3
        %v3094 = vperm.slane %v3026, 3
        %v3095 = vmul.f32 %v2868, %v3091
        %v3096 = vmul.f32 %v2869, %v3091
        %v3097 = vmul.f32 %v2900, %v3092
        %v3098 = vmul.f32 %v2901, %v3092
        %v3099 = vmul.f32 %v2932, %v3093
        %v3100 = vmul.f32 %v2933, %v3093
        %v3101 = vmul.f32 %v2964, %v3094
        %v3102 = vmul.f32 %v2965, %v3094
        %v3103 = vadd.f32 %v3083, %v3095
        %v3104 = vadd.f32 %v3084, %v3096
        %v3105 = vadd.f32 %v3085, %v3097
        %v3106 = vadd.f32 %v3086, %v3098
        %v3107 = vadd.f32 %v3087, %v3099
        %v3108 = vadd.f32 %v3088, %v3100
        %v3109 = vadd.f32 %v3089, %v3101
        %v3110 = vadd.f32 %v3090, %v3102
        %v3111 = vperm.slane %v3008, 4
        %v3112 = vperm.slane %v3014, 4
        %v3113 = vperm.slane %v3020, 4
        %v3114 = vperm.slane %v3026, 4
        %v3115 = vmul.f32 %v2870, %v3111
        %v3116 = vmul.f32 %v2871, %v3111
        %v3117 = vmul.f32 %v2902, %v3112
        %v3118 = vmul.f32 %v2903, %v3112
        %v3119 = vmul.f32 %v2934, %v3113
        %v3120 = vmul.f32 %v2935, %v3113
        %v3121 = vmul.f32 %v2966, %v3114
        %v3122 = vmul.f32 %v2967, %v3114
        %v3123 = vadd.f32 %v3103, %v3115
        %v3124 = vadd.f32 %v3104, %v3116
        %v3125 = vadd.f32 %v3105, %v3117
        %v3126 = vadd.f32 %v3106, %v3118
        %v3127 = vadd.f32 %v3107, %v3119
        %v3128 = vadd.f32 %v3108, %v3120
        %v3129 = vadd.f32 %v3109, %v3121
        %v3130 = vadd.f32 %v3110, %v3122
        %v3131 = vperm.slane %v3008, 5
        %v3132 = vperm.slane %v3014, 5
        %v3133 = vperm.slane %v3020, 5
        %v3134 = vperm.slane %v3026, 5
        %v3135 = vmul.f32 %v2872, %v3131
        %v3136 = vmul.f32 %v2873, %v3131
        %v3137 = vmul.f32 %v2904, %v3132
        %v3138 = vmul.f32 %v2905, %v3132
        %v3139 = vmul.f32 %v2936, %v3133
        %v3140 = vmul.f32 %v2937, %v3133
        %v3141 = vmul.f32 %v2968, %v3134
        %v3142 = vmul.f32 %v2969, %v3134
        %v3143 = vadd.f32 %v3123, %v3135
        %v3144 = vadd.f32 %v3124, %v3136
        %v3145 = vadd.f32 %v3125, %v3137
        %v3146 = vadd.f32 %v3126, %v3138
        %v3147 = vadd.f32 %v3127, %v3139
        %v3148 = vadd.f32 %v3128, %v3140
        %v3149 = vadd.f32 %v3129, %v3141
        %v3150 = vadd.f32 %v3130, %v3142
        %v3151 = vperm.slane %v3008, 6
        %v3152 = vperm.slane %v3014, 6
        %v3153 = vperm.slane %v3020, 6
        %v3154 = vperm.slane %v3026, 6
        %v3155 = vmul.f32 %v2874, %v3151
        %v3156 = vmul.f32 %v2875, %v3151
        %v3157 = vmul.f32 %v2906, %v3152
        %v3158 = vmul.f32 %v2907, %v3152
        %v3159 = vmul.f32 %v2938, %v3153
        %v3160 = vmul.f32 %v2939, %v3153
        %v3161 = vmul.f32 %v2970, %v3154
        %v3162 = vmul.f32 %v2971, %v3154
        %v3163 = vadd.f32 %v3143, %v3155
        %v3164 = vadd.f32 %v3144, %v3156
        %v3165 = vadd.f32 %v3145, %v3157
        %v3166 = vadd.f32 %v3146, %v3158
        %v3167 = vadd.f32 %v3147, %v3159
        %v3168 = vadd.f32 %v3148, %v3160
        %v3169 = vadd.f32 %v3149, %v3161
        %v3170 = vadd.f32 %v3150, %v3162
        %v3171 = vperm.slane %v3008, 7
        %v3172 = vperm.slane %v3014, 7
        %v3173 = vperm.slane %v3020, 7
        %v3174 = vperm.slane %v3026, 7
        %v3175 = vmul.f32 %v2876, %v3171
        %v3176 = vmul.f32 %v2877, %v3171
        %v3177 = vmul.f32 %v2908, %v3172
        %v3178 = vmul.f32 %v2909, %v3172
        %v3179 = vmul.f32 %v2940, %v3173
        %v3180 = vmul.f32 %v2941, %v3173
        %v3181 = vmul.f32 %v2972, %v3174
        %v3182 = vmul.f32 %v2973, %v3174
        %v3183 = vadd.f32 %v3163, %v3175
        %v3184 = vadd.f32 %v3164, %v3176
        %v3185 = vadd.f32 %v3165, %v3177
        %v3186 = vadd.f32 %v3166, %v3178
        %v3187 = vadd.f32 %v3167, %v3179
        %v3188 = vadd.f32 %v3168, %v3180
        %v3189 = vadd.f32 %v3169, %v3181
        %v3190 = vadd.f32 %v3170, %v3182
        %v3191 = vperm.slane %v3011, 0
        %v3192 = vperm.slane %v3017, 0
        %v3193 = vperm.slane %v3023, 0
        %v3194 = vperm.slane %v3029, 0
        %v3195 = vmul.f32 %v2878, %v3191
        %v3196 = vmul.f32 %v2879, %v3191
        %v3197 = vmul.f32 %v2910, %v3192
        %v3198 = vmul.f32 %v2911, %v3192
        %v3199 = vmul.f32 %v2942, %v3193
        %v3200 = vmul.f32 %v2943, %v3193
        %v3201 = vmul.f32 %v2974, %v3194
        %v3202 = vmul.f32 %v2975, %v3194
        %v3203 = vadd.f32 %v3183, %v3195
        %v3204 = vadd.f32 %v3184, %v3196
        %v3205 = vadd.f32 %v3185, %v3197
        %v3206 = vadd.f32 %v3186, %v3198
        %v3207 = vadd.f32 %v3187, %v3199
        %v3208 = vadd.f32 %v3188, %v3200
        %v3209 = vadd.f32 %v3189, %v3201
        %v3210 = vadd.f32 %v3190, %v3202
        %v3211 = vperm.slane %v3011, 1
        %v3212 = vperm.slane %v3017, 1
        %v3213 = vperm.slane %v3023, 1
        %v3214 = vperm.slane %v3029, 1
        %v3215 = vmul.f32 %v2880, %v3211
        %v3216 = vmul.f32 %v2881, %v3211
        %v3217 = vmul.f32 %v2912, %v3212
        %v3218 = vmul.f32 %v2913, %v3212
        %v3219 = vmul.f32 %v2944, %v3213
        %v3220 = vmul.f32 %v2945, %v3213
        %v3221 = vmul.f32 %v2976, %v3214
        %v3222 = vmul.f32 %v2977, %v3214
        %v3223 = vadd.f32 %v3203, %v3215
        %v3224 = vadd.f32 %v3204, %v3216
        %v3225 = vadd.f32 %v3205, %v3217
        %v3226 = vadd.f32 %v3206, %v3218
        %v3227 = vadd.f32 %v3207, %v3219
        %v3228 = vadd.f32 %v3208, %v3220
        %v3229 = vadd.f32 %v3209, %v3221
        %v3230 = vadd.f32 %v3210, %v3222
        %v3231 = vperm.slane %v3011, 2
        %v3232 = vperm.slane %v3017, 2
        %v3233 = vperm.slane %v3023, 2
        %v3234 = vperm.slane %v3029, 2
        %v3235 = vmul.f32 %v2882, %v3231
        %v3236 = vmul.f32 %v2883, %v3231
        %v3237 = vmul.f32 %v2914, %v3232
        %v3238 = vmul.f32 %v2915, %v3232
        %v3239 = vmul.f32 %v2946, %v3233
        %v3240 = vmul.f32 %v2947, %v3233
        %v3241 = vmul.f32 %v2978, %v3234
        %v3242 = vmul.f32 %v2979, %v3234
        %v3243 = vadd.f32 %v3223, %v3235
        %v3244 = vadd.f32 %v3224, %v3236
        %v3245 = vadd.f32 %v3225, %v3237
        %v3246 = vadd.f32 %v3226, %v3238
        %v3247 = vadd.f32 %v3227, %v3239
        %v3248 = vadd.f32 %v3228, %v3240
        %v3249 = vadd.f32 %v3229, %v3241
        %v3250 = vadd.f32 %v3230, %v3242
        %v3251 = vperm.slane %v3011, 3
        %v3252 = vperm.slane %v3017, 3
        %v3253 = vperm.slane %v3023, 3
        %v3254 = vperm.slane %v3029, 3
        %v3255 = vmul.f32 %v2884, %v3251
        %v3256 = vmul.f32 %v2885, %v3251
        %v3257 = vmul.f32 %v2916, %v3252
        %v3258 = vmul.f32 %v2917, %v3252
        %v3259 = vmul.f32 %v2948, %v3253
        %v3260 = vmul.f32 %v2949, %v3253
        %v3261 = vmul.f32 %v2980, %v3254
        %v3262 = vmul.f32 %v2981, %v3254
        %v3263 = vadd.f32 %v3243, %v3255
        %v3264 = vadd.f32 %v3244, %v3256
        %v3265 = vadd.f32 %v3245, %v3257
        %v3266 = vadd.f32 %v3246, %v3258
        %v3267 = vadd.f32 %v3247, %v3259
        %v3268 = vadd.f32 %v3248, %v3260
        %v3269 = vadd.f32 %v3249, %v3261
        %v3270 = vadd.f32 %v3250, %v3262
        %v3271 = vperm.slane %v3011, 4
        %v3272 = vperm.slane %v3017, 4
        %v3273 = vperm.slane %v3023, 4
        %v3274 = vperm.slane %v3029, 4
        %v3275 = vmul.f32 %v2886, %v3271
        %v3276 = vmul.f32 %v2887, %v3271
        %v3277 = vmul.f32 %v2918, %v3272
        %v3278 = vmul.f32 %v2919, %v3272
        %v3279 = vmul.f32 %v2950, %v3273
        %v3280 = vmul.f32 %v2951, %v3273
        %v3281 = vmul.f32 %v2982, %v3274
        %v3282 = vmul.f32 %v2983, %v3274
        %v3283 = vadd.f32 %v3263, %v3275
        %v3284 = vadd.f32 %v3264, %v3276
        %v3285 = vadd.f32 %v3265, %v3277
        %v3286 = vadd.f32 %v3266, %v3278
        %v3287 = vadd.f32 %v3267, %v3279
        %v3288 = vadd.f32 %v3268, %v3280
        %v3289 = vadd.f32 %v3269, %v3281
        %v3290 = vadd.f32 %v3270, %v3282
        %v3291 = vperm.slane %v3011, 5
        %v3292 = vperm.slane %v3017, 5
        %v3293 = vperm.slane %v3023, 5
        %v3294 = vperm.slane %v3029, 5
        %v3295 = vmul.f32 %v2888, %v3291
        %v3296 = vmul.f32 %v2889, %v3291
        %v3297 = vmul.f32 %v2920, %v3292
        %v3298 = vmul.f32 %v2921, %v3292
        %v3299 = vmul.f32 %v2952, %v3293
        %v3300 = vmul.f32 %v2953, %v3293
        %v3301 = vmul.f32 %v2984, %v3294
        %v3302 = vmul.f32 %v2985, %v3294
        %v3303 = vadd.f32 %v3283, %v3295
        %v3304 = vadd.f32 %v3284, %v3296
        %v3305 = vadd.f32 %v3285, %v3297
        %v3306 = vadd.f32 %v3286, %v3298
        %v3307 = vadd.f32 %v3287, %v3299
        %v3308 = vadd.f32 %v3288, %v3300
        %v3309 = vadd.f32 %v3289, %v3301
        %v3310 = vadd.f32 %v3290, %v3302
        %v3311 = vperm.slane %v3011, 6
        %v3312 = vperm.slane %v3017, 6
        %v3313 = vperm.slane %v3023, 6
        %v3314 = vperm.slane %v3029, 6
        %v3315 = vmul.f32 %v2890, %v3311
        %v3316 = vmul.f32 %v2891, %v3311
        %v3317 = vmul.f32 %v2922, %v3312
        %v3318 = vmul.f32 %v2923, %v3312
        %v3319 = vmul.f32 %v2954, %v3313
        %v3320 = vmul.f32 %v2955, %v3313
        %v3321 = vmul.f32 %v2986, %v3314
        %v3322 = vmul.f32 %v2987, %v3314
        %v3323 = vadd.f32 %v3303, %v3315
        %v3324 = vadd.f32 %v3304, %v3316
        %v3325 = vadd.f32 %v3305, %v3317
        %v3326 = vadd.f32 %v3306, %v3318
        %v3327 = vadd.f32 %v3307, %v3319
        %v3328 = vadd.f32 %v3308, %v3320
        %v3329 = vadd.f32 %v3309, %v3321
        %v3330 = vadd.f32 %v3310, %v3322
        %v3331 = vperm.slane %v3011, 7
        %v3332 = vperm.slane %v3017, 7
        %v3333 = vperm.slane %v3023, 7
        %v3334 = vperm.slane %v3029, 7
        %v3335 = vmul.f32 %v2892, %v3331
        %v3336 = vmul.f32 %v2893, %v3331
        %v3337 = vmul.f32 %v2924, %v3332
        %v3338 = vmul.f32 %v2925, %v3332
        %v3339 = vmul.f32 %v2956, %v3333
        %v3340 = vmul.f32 %v2957, %v3333
        %v3341 = vmul.f32 %v2988, %v3334
        %v3342 = vmul.f32 %v2989, %v3334
        %v3343 = vadd.f32 %v3323, %v3335
        %v3344 = vadd.f32 %v3324, %v3336
        %v3345 = vadd.f32 %v3325, %v3337
        %v3346 = vadd.f32 %v3326, %v3338
        %v3347 = vadd.f32 %v3327, %v3339
        %v3348 = vadd.f32 %v3328, %v3340
        %v3349 = vadd.f32 %v3329, %v3341
        %v3350 = vadd.f32 %v3330, %v3342
        %v3351 = vperm.slane %v379, 2
        %3352 = vmatpush.msra.mxu0 %v346
        %3353 = vmatpush.msra.mxu0 %v345
        %3354 = vmatpush.msra.mxu0 %v344
        %3355 = vmatpush.msra.mxu0 %v343
        %3356 = vmatpush.msra.mxu0 %v342
        %3357 = vmatpush.msra.mxu0 %v341
        %3358 = vmatpush.msra.mxu0 %v340
        %3359 = vmatpush.msra.mxu0 %v339
        %3360 = vmatpush.msra.mxu0 %v338
        %3361 = vmatpush.msra.mxu0 %v337
        %3362 = vmatpush.msra.mxu0 %v336
        %3363 = vmatpush.msra.mxu0 %v335
        %3364 = vmatpush.msra.mxu0 %v334
        %3365 = vmatpush.msra.mxu0 %v333
        %3366 = vmatpush.msra.mxu0 %v332
        %3367 = vmatpush.msra.mxu0 %v331
        %3368 = vmatmul.f32.gmra.mxu0 %v3343
        %v3369 = vpop.f32.mrf.mxu0
        %v3370 = vadd.f32 %v3351, %v3369
        %3371 = vmatmul.f32.gmra.mxu0 %v3344
        %v3372 = vpop.f32.mrf.mxu0
        %v3373 = vadd.f32 %v3351, %v3372
        %3374 = vmatmul.f32.gmra.mxu0 %v3345
        %v3375 = vpop.f32.mrf.mxu0
        %v3376 = vadd.f32 %v3351, %v3375
        %3377 = vmatmul.f32.gmra.mxu0 %v3346
        %v3378 = vpop.f32.mrf.mxu0
        %v3379 = vadd.f32 %v3351, %v3378
        %3380 = vmatmul.f32.gmra.mxu0 %v3347
        %v3381 = vpop.f32.mrf.mxu0
        %v3382 = vadd.f32 %v3351, %v3381
        %3383 = vmatmul.f32.gmra.mxu0 %v3348
        %v3384 = vpop.f32.mrf.mxu0
        %v3385 = vadd.f32 %v3351, %v3384
        %3386 = vmatmul.f32.gmra.mxu0 %v3349
        %v3387 = vpop.f32.mrf.mxu0
        %v3388 = vadd.f32 %v3351, %v3387
        %3389 = vmatmul.f32.gmra.mxu0 %v3350
        %v3390 = vpop.f32.mrf.mxu0
        %v3391 = vadd.f32 %v3351, %v3390
        %3392 = vdwg.mxu0
        %v3393 = vsub.f32 0.0, %v3370
        %v3394 = vsub.f32 0.0, %v3373
        %v3395 = vsub.f32 0.0, %v3376
        %v3396 = vsub.f32 0.0, %v3379
        %v3397 = vsub.f32 0.0, %v3382
        %v3398 = vsub.f32 0.0, %v3385
        %v3399 = vsub.f32 0.0, %v3388
        %v3400 = vsub.f32 0.0, %v3391
        %v3401 = vmul.f32 %v3393, 1.442695
        %v3402 = vpow.pop %v3401
        %v3403 = vmul.f32 %v3394, 1.442695
        %v3404 = vpow.pop %v3403
        %v3405 = vmul.f32 %v3395, 1.442695
        %v3406 = vpow.pop %v3405
        %v3407 = vmul.f32 %v3396, 1.442695
        %v3408 = vpow.pop %v3407
        %v3409 = vmul.f32 %v3397, 1.442695
        %v3410 = vpow.pop %v3409
        %v3411 = vmul.f32 %v3398, 1.442695
        %v3412 = vpow.pop %v3411
        %v3413 = vmul.f32 %v3399, 1.442695
        %v3414 = vpow.pop %v3413
        %v3415 = vmul.f32 %v3400, 1.442695
        %v3416 = vpow.pop %v3415
        %v3417 = vadd.f32 %v3402, 1.0
        %v3418 = vadd.f32 %v3404, 1.0
        %v3419 = vadd.f32 %v3406, 1.0
        %v3420 = vadd.f32 %v3408, 1.0
        %v3421 = vadd.f32 %v3410, 1.0
        %v3422 = vadd.f32 %v3412, 1.0
        %v3423 = vadd.f32 %v3414, 1.0
        %v3424 = vadd.f32 %v3416, 1.0
        %v3425 = vrcp.pop %v3417
        %v3426 = vrcp.pop %v3418
        %v3427 = vrcp.pop %v3419
        %v3428 = vrcp.pop %v3420
        %v3429 = vrcp.pop %v3421
        %v3430 = vrcp.pop %v3422
        %v3431 = vrcp.pop %v3423
        %v3432 = vrcp.pop %v3424
        %v3433 = vmul.f32 %v3370, %v3425
        %v3434 = vmul.f32 %v3373, %v3426
        %v3435 = vmul.f32 %v3376, %v3427
        %v3436 = vmul.f32 %v3379, %v3428
        %v3437 = vmul.f32 %v3382, %v3429
        %v3438 = vmul.f32 %v3385, %v3430
        %v3439 = vmul.f32 %v3388, %v3431
        %v3440 = vmul.f32 %v3391, %v3432
        %v3441 = vadd.f32 %v639, %v3433
        %v3442 = vadd.f32 %v640, %v3434
        %v3443 = vadd.f32 %v641, %v3435
        %v3444 = vadd.f32 %v642, %v3436
        %v3445 = vadd.f32 %v643, %v3437
        %v3446 = vadd.f32 %v644, %v3438
        %v3447 = vadd.f32 %v645, %v3439
        %v3448 = vadd.f32 %v646, %v3440
        %v3449 = vperm.slane %v379, 3
        %3450 = vmatpush.msra.mxu0 %v362
        %3451 = vmatpush.msra.mxu0 %v361
        %3452 = vmatpush.msra.mxu0 %v360
        %3453 = vmatpush.msra.mxu0 %v359
        %3454 = vmatpush.msra.mxu0 %v358
        %3455 = vmatpush.msra.mxu0 %v357
        %3456 = vmatpush.msra.mxu0 %v356
        %3457 = vmatpush.msra.mxu0 %v355
        %3458 = vmatpush.msra.mxu0 %v354
        %3459 = vmatpush.msra.mxu0 %v353
        %3460 = vmatpush.msra.mxu0 %v352
        %3461 = vmatpush.msra.mxu0 %v351
        %3462 = vmatpush.msra.mxu0 %v350
        %3463 = vmatpush.msra.mxu0 %v349
        %3464 = vmatpush.msra.mxu0 %v348
        %3465 = vmatpush.msra.mxu0 %v347
        %3466 = vmatmul.f32.gmra.mxu0 %v3441
        %v3467 = vpop.f32.mrf.mxu0
        %v3468 = vadd.f32 %v3449, %v3467
        %3469 = vmatmul.f32.gmra.mxu0 %v3442
        %v3470 = vpop.f32.mrf.mxu0
        %v3471 = vadd.f32 %v3449, %v3470
        %3472 = vmatmul.f32.gmra.mxu0 %v3443
        %v3473 = vpop.f32.mrf.mxu0
        %v3474 = vadd.f32 %v3449, %v3473
        %3475 = vmatmul.f32.gmra.mxu0 %v3444
        %v3476 = vpop.f32.mrf.mxu0
        %v3477 = vadd.f32 %v3449, %v3476
        %3478 = vmatmul.f32.gmra.mxu0 %v3445
        %v3479 = vpop.f32.mrf.mxu0
        %v3480 = vadd.f32 %v3449, %v3479
        %3481 = vmatmul.f32.gmra.mxu0 %v3446
        %v3482 = vpop.f32.mrf.mxu0
        %v3483 = vadd.f32 %v3449, %v3482
        %3484 = vmatmul.f32.gmra.mxu0 %v3447
        %v3485 = vpop.f32.mrf.mxu0
        %v3486 = vadd.f32 %v3449, %v3485
        %3487 = vmatmul.f32.gmra.mxu0 %v3448
        %v3488 = vpop.f32.mrf.mxu0
        %v3489 = vadd.f32 %v3449, %v3488
        %3490 = vdwg.mxu0
        %v3491 = vsub.f32 0.0, %v3468
        %v3492 = vsub.f32 0.0, %v3471
        %v3493 = vsub.f32 0.0, %v3474
        %v3494 = vsub.f32 0.0, %v3477
        %v3495 = vsub.f32 0.0, %v3480
        %v3496 = vsub.f32 0.0, %v3483
        %v3497 = vsub.f32 0.0, %v3486
        %v3498 = vsub.f32 0.0, %v3489
        %v3499 = vmul.f32 %v3491, 1.442695
        %v3500 = vpow.pop %v3499
        %v3501 = vmul.f32 %v3492, 1.442695
        %v3502 = vpow.pop %v3501
        %v3503 = vmul.f32 %v3493, 1.442695
        %v3504 = vpow.pop %v3503
        %v3505 = vmul.f32 %v3494, 1.442695
        %v3506 = vpow.pop %v3505
        %v3507 = vmul.f32 %v3495, 1.442695
        %v3508 = vpow.pop %v3507
        %v3509 = vmul.f32 %v3496, 1.442695
        %v3510 = vpow.pop %v3509
        %v3511 = vmul.f32 %v3497, 1.442695
        %v3512 = vpow.pop %v3511
        %v3513 = vmul.f32 %v3498, 1.442695
        %v3514 = vpow.pop %v3513
        %v3515 = vadd.f32 %v3500, 1.0
        %v3516 = vadd.f32 %v3502, 1.0
        %v3517 = vadd.f32 %v3504, 1.0
        %v3518 = vadd.f32 %v3506, 1.0
        %v3519 = vadd.f32 %v3508, 1.0
        %v3520 = vadd.f32 %v3510, 1.0
        %v3521 = vadd.f32 %v3512, 1.0
        %v3522 = vadd.f32 %v3514, 1.0
        %v3523 = vrcp.pop %v3515
        %v3524 = vmul.f32 %v3515, %v3523
        %v3525 = vsub.f32 1.0, %v3524
        %v3526 = vmul.f32 %v3523, %v3525
        %v3527 = vadd.f32 %v3523, %v3526
        %vm3528 = vweird.f32 %v3515
        %vm3529 = vweird.f32 %v3523
        %vm3530 = vmor %vm3528, %vm3529
        %v3531 = vsel %vm3530, %v3523, %v3527
        %v3532 = vand.u32 2147483647, %v3515
        %vm3533 = vcmp.eq.f32.partialorder %v3532, 8.507059e+37
        %v3534 = vand.u32 %v3515, 2147483648
        %v3535 = vor.u32 1.1754944e-38, %v3534
        %v3536 = vsel %vm3533, %v3535, %v3531
        %v3537 = vmul.f32 1.0, %v3536
        %v3538 = vrcp.pop %v3516
        %v3539 = vmul.f32 %v3516, %v3538
        %v3540 = vsub.f32 1.0, %v3539
        %v3541 = vmul.f32 %v3538, %v3540
        %v3542 = vadd.f32 %v3538, %v3541
        %vm3543 = vweird.f32 %v3516
        %vm3544 = vweird.f32 %v3538
        %vm3545 = vmor %vm3543, %vm3544
        %v3546 = vsel %vm3545, %v3538, %v3542
        %v3547 = vand.u32 2147483647, %v3516
        %vm3548 = vcmp.eq.f32.partialorder %v3547, 8.507059e+37
        %v3549 = vand.u32 %v3516, 2147483648
        %v3550 = vor.u32 1.1754944e-38, %v3549
        %v3551 = vsel %vm3548, %v3550, %v3546
        %v3552 = vmul.f32 1.0, %v3551
        %v3553 = vrcp.pop %v3517
        %v3554 = vmul.f32 %v3517, %v3553
        %v3555 = vsub.f32 1.0, %v3554
        %v3556 = vmul.f32 %v3553, %v3555
        %v3557 = vadd.f32 %v3553, %v3556
        %vm3558 = vweird.f32 %v3517
        %vm3559 = vweird.f32 %v3553
        %vm3560 = vmor %vm3558, %vm3559
        %v3561 = vsel %vm3560, %v3553, %v3557
        %v3562 = vand.u32 2147483647, %v3517
        %vm3563 = vcmp.eq.f32.partialorder %v3562, 8.507059e+37
        %v3564 = vand.u32 %v3517, 2147483648
        %v3565 = vor.u32 1.1754944e-38, %v3564
        %v3566 = vsel %vm3563, %v3565, %v3561
        %v3567 = vmul.f32 1.0, %v3566
        %v3568 = vrcp.pop %v3518
        %v3569 = vmul.f32 %v3518, %v3568
        %v3570 = vsub.f32 1.0, %v3569
        %v3571 = vmul.f32 %v3568, %v3570
        %v3572 = vadd.f32 %v3568, %v3571
        %vm3573 = vweird.f32 %v3518
        %vm3574 = vweird.f32 %v3568
        %vm3575 = vmor %vm3573, %vm3574
        %v3576 = vsel %vm3575, %v3568, %v3572
        %v3577 = vand.u32 2147483647, %v3518
        %vm3578 = vcmp.eq.f32.partialorder %v3577, 8.507059e+37
        %v3579 = vand.u32 %v3518, 2147483648
        %v3580 = vor.u32 1.1754944e-38, %v3579
        %v3581 = vsel %vm3578, %v3580, %v3576
        %v3582 = vmul.f32 1.0, %v3581
        %v3583 = vrcp.pop %v3519
        %v3584 = vmul.f32 %v3519, %v3583
        %v3585 = vsub.f32 1.0, %v3584
        %v3586 = vmul.f32 %v3583, %v3585
        %v3587 = vadd.f32 %v3583, %v3586
        %vm3588 = vweird.f32 %v3519
        %vm3589 = vweird.f32 %v3583
        %vm3590 = vmor %vm3588, %vm3589
        %v3591 = vsel %vm3590, %v3583, %v3587
        %v3592 = vand.u32 2147483647, %v3519
        %vm3593 = vcmp.eq.f32.partialorder %v3592, 8.507059e+37
        %v3594 = vand.u32 %v3519, 2147483648
        %v3595 = vor.u32 1.1754944e-38, %v3594
        %v3596 = vsel %vm3593, %v3595, %v3591
        %v3597 = vmul.f32 1.0, %v3596
        %v3598 = vrcp.pop %v3520
        %v3599 = vmul.f32 %v3520, %v3598
        %v3600 = vsub.f32 1.0, %v3599
        %v3601 = vmul.f32 %v3598, %v3600
        %v3602 = vadd.f32 %v3598, %v3601
        %vm3603 = vweird.f32 %v3520
        %vm3604 = vweird.f32 %v3598
        %vm3605 = vmor %vm3603, %vm3604
        %v3606 = vsel %vm3605, %v3598, %v3602
        %v3607 = vand.u32 2147483647, %v3520
        %vm3608 = vcmp.eq.f32.partialorder %v3607, 8.507059e+37
        %v3609 = vand.u32 %v3520, 2147483648
        %v3610 = vor.u32 1.1754944e-38, %v3609
        %v3611 = vsel %vm3608, %v3610, %v3606
        %v3612 = vmul.f32 1.0, %v3611
        %v3613 = vrcp.pop %v3521
        %v3614 = vmul.f32 %v3521, %v3613
        %v3615 = vsub.f32 1.0, %v3614
        %v3616 = vmul.f32 %v3613, %v3615
        %v3617 = vadd.f32 %v3613, %v3616
        %vm3618 = vweird.f32 %v3521
        %vm3619 = vweird.f32 %v3613
        %vm3620 = vmor %vm3618, %vm3619
        %v3621 = vsel %vm3620, %v3613, %v3617
        %v3622 = vand.u32 2147483647, %v3521
        %vm3623 = vcmp.eq.f32.partialorder %v3622, 8.507059e+37
        %v3624 = vand.u32 %v3521, 2147483648
        %v3625 = vor.u32 1.1754944e-38, %v3624
        %v3626 = vsel %vm3623, %v3625, %v3621
        %v3627 = vmul.f32 1.0, %v3626
        %v3628 = vrcp.pop %v3522
        %v3629 = vmul.f32 %v3522, %v3628
        %v3630 = vsub.f32 1.0, %v3629
        %v3631 = vmul.f32 %v3628, %v3630
        %v3632 = vadd.f32 %v3628, %v3631
        %vm3633 = vweird.f32 %v3522
        %vm3634 = vweird.f32 %v3628
        %vm3635 = vmor %vm3633, %vm3634
        %v3636 = vsel %vm3635, %v3628, %v3632
        %v3637 = vand.u32 2147483647, %v3522
        %vm3638 = vcmp.eq.f32.partialorder %v3637, 8.507059e+37
        %v3639 = vand.u32 %v3522, 2147483648
        %v3640 = vor.u32 1.1754944e-38, %v3639
        %v3641 = vsel %vm3638, %v3640, %v3636
        %v3642 = vmul.f32 1.0, %v3641
        %v3643 = vmul.f32 %v3468, %v3537
        %v3644 = vmul.f32 %v3471, %v3552
        %v3645 = vmul.f32 %v3474, %v3567
        %v3646 = vmul.f32 %v3477, %v3582
        %v3647 = vmul.f32 %v3480, %v3597
        %v3648 = vmul.f32 %v3483, %v3612
        %v3649 = vmul.f32 %v3486, %v3627
        %v3650 = vmul.f32 %v3489, %v3642
        %3651 = vmatpush.msra.mxu0 %v378
        %3652 = vmatpush.msra.mxu0 %v377
        %3653 = vmatpush.msra.mxu0 %v376
        %3654 = vmatpush.msra.mxu0 %v375
        %3655 = vmatpush.msra.mxu0 %v374
        %3656 = vmatpush.msra.mxu0 %v373
        %3657 = vmatpush.msra.mxu0 %v372
        %3658 = vmatpush.msra.mxu0 %v371
        %3659 = vmatpush.msra.mxu0 %v370
        %3660 = vmatpush.msra.mxu0 %v369
        %3661 = vmatpush.msra.mxu0 %v368
        %3662 = vmatpush.msra.mxu0 %v367
        %3663 = vmatpush.msra.mxu0 %v366
        %3664 = vmatpush.msra.mxu0 %v365
        %3665 = vmatpush.msra.mxu0 %v364
        %3666 = vmatpush.msra.mxu0 %v363
        %3667 = vmatmul.f32.gmra.mxu0 %v3643
        %v3668 = vpop.f32.mrf.mxu0
        %v3669 = vadd.f32 0.0, %v3668
        %3670 = vmatmul.f32.gmra.mxu0 %v3644
        %v3671 = vpop.f32.mrf.mxu0
        %v3672 = vadd.f32 0.0, %v3671
        %3673 = vmatmul.f32.gmra.mxu0 %v3645
        %v3674 = vpop.f32.mrf.mxu0
        %v3675 = vadd.f32 0.0, %v3674
        %3676 = vmatmul.f32.gmra.mxu0 %v3646
        %v3677 = vpop.f32.mrf.mxu0
        %v3678 = vadd.f32 0.0, %v3677
        %3679 = vmatmul.f32.gmra.mxu0 %v3647
        %v3680 = vpop.f32.mrf.mxu0
        %v3681 = vadd.f32 0.0, %v3680
        %3682 = vmatmul.f32.gmra.mxu0 %v3648
        %v3683 = vpop.f32.mrf.mxu0
        %v3684 = vadd.f32 0.0, %v3683
        %3685 = vmatmul.f32.gmra.mxu0 %v3649
        %v3686 = vpop.f32.mrf.mxu0
        %v3687 = vadd.f32 0.0, %v3686
        %3688 = vmatmul.f32.gmra.mxu0 %v3650
        %v3689 = vpop.f32.mrf.mxu0
        %v3690 = vadd.f32 0.0, %v3689
        %3691 = vdwg.mxu0
        %v3692 = vadd.f32 %v3669, %v3672
        %v3693 = vrot.slane %v3692, 4
        %v3694 = vadd.f32 %v3692, %v3693
        %v3695 = vrot.slane %v3694, 2
        %v3696 = vadd.f32 %v3694, %v3695
        %v3697 = vrot.slane %v3696, 1
        %v3698 = vadd.f32 %v3696, %v3697
        %v3699 = vadd.f32 %v3675, %v3678
        %v3700 = vrot.slane %v3699, 4
        %v3701 = vadd.f32 %v3699, %v3700
        %v3702 = vrot.slane %v3701, 2
        %v3703 = vadd.f32 %v3701, %v3702
        %v3704 = vrot.slane %v3703, 1
        %v3705 = vadd.f32 %v3703, %v3704
        %v3706 = vadd.f32 %v3681, %v3684
        %v3707 = vrot.slane %v3706, 4
        %v3708 = vadd.f32 %v3706, %v3707
        %v3709 = vrot.slane %v3708, 2
        %v3710 = vadd.f32 %v3708, %v3709
        %v3711 = vrot.slane %v3710, 1
        %v3712 = vadd.f32 %v3710, %v3711
        %v3713 = vadd.f32 %v3687, %v3690
        %v3714 = vrot.slane %v3713, 4
        %v3715 = vadd.f32 %v3713, %v3714
        %v3716 = vrot.slane %v3715, 2
        %v3717 = vadd.f32 %v3715, %v3716
        %v3718 = vrot.slane %v3717, 1
        %v3719 = vadd.f32 %v3717, %v3718
        %s3720 = smul.f32 %s380, 16.0
        %v3721 = vstv %s3720
        %v3722 = vadd.f32 %v3698, %v3721
        %v3723 = vadd.f32 %v3705, %v3721
        %v3724 = vadd.f32 %v3712, %v3721
        %v3725 = vadd.f32 %v3719, %v3721
        %v3726 = vstv %s381
        %v3727 = vmul.f32 %v3726, %v3722
        %v3728 = vmul.f32 %v3726, %v3723
        %v3729 = vmul.f32 %v3726, %v3724
        %v3730 = vmul.f32 %v3726, %v3725
        %v3731 = vstv %s382
        %v3732 = vadd.f32 %v3727, %v3731
        %v3733 = vadd.f32 %v3728, %v3731
        %v3734 = vadd.f32 %v3729, %v3731
        %v3735 = vadd.f32 %v3730, %v3731
        %vm3740 = vcmask 1041409
        %v3741 = vsel %vm3740, %v3733, %v3732
        %vm3742 = vcmask 1042434
        %v3743 = vsel %vm3742, %v3734, %v3741
        %vm3744 = vcmask 1043459
        %v3745 = vsel %vm3744, %v3735, %v3743
        %3747 = vst [vmem:[%s282] sm:$0xf] %v3745
        %p3748 = scmp.lt.s32.totalorder %s17, 1
        %s3749 = scalar_select %p3748, %s17, 1
        %s3750 = smul.addr %s3749, 4
        %s3751 = scalar_lea.vmem %s5, %s3750
        // Predicated region
        $region45: #{torchmd_net_forward.1} parent=39 // pred_check
          %p3752 = pneg %p155
        $region46: #{torchmd_net_forward.1} parent=39 // pred_check_branch
          %3754 = sbr.rel (%p3752) target = $region48
        $region47: #{torchmd_net_forward.1} parent=39 // pred_region
          _
        $region48: #{torchmd_net_forward.1} parent=39 // pred_fallthru
          _
      $region40: #{torchmd_net_forward.1} parent=5 // pred_fallthru
        _
      %p3755 = scmp.le.s32.totalorder 2, %s12
      // Predicated region
      $region49: #{torchmd_net_forward.1} parent=5 // pred_check
        %p3756 = pneg %p3755
      $region50: #{torchmd_net_forward.1} parent=5 // pred_check_branch
        %3758 = sbr.rel (%p3756) target = $region52
      $region51: #{torchmd_net_forward.1} parent=5 // pred_region
        %s3759 = ssub.s32 %s12, 2
        // Predicated region
        $region53: #{torchmd_net_forward.1} parent=51 // pred_check
          %p3760 = pneg %p161
        $region54: #{torchmd_net_forward.1} parent=51 // pred_check_branch
          %3762 = sbr.rel (%p3760) target = $region56
        $region55: #{torchmd_net_forward.1} parent=51 // pred_region
          %p3763 = scmp.lt.s32.totalorder %s18, 1
          %s3764 = scalar_select %p3763, %s18, 1
          %s3765 = smul.addr %s3764, 4
          %s3766 = scalar_lea.vmem %s5, %s3765
        $region56: #{torchmd_net_forward.1} parent=51 // pred_fallthru
          _
      $region52: #{torchmd_net_forward.1} parent=5 // pred_fallthru
        _
    $region6: #{torchmd_net_forward.1} parent=1 // loop_footer
      %s16 = sadd.s32 1, %s12
    $region7: #{torchmd_net_forward.1} parent=1 // loop_footer_branch
      %11 = sbr.rel target = $region3
    $region8: #{torchmd_net_forward.1} parent=1 // loop_exit
      _
    %3767 = vsyncpa [#allocation3], 1
    %s3768 = scalar_lea.sflag [#allocation3], 1
    %3769 = vsyncpa %s3768, 1

</llo_original>
